<compile_context>
chip_gen: v7x
topology: tpu7x:2x2x1
jax: 0.10.0
libtpu: 0.0.40
codegen_flags: <defaults>
</compile_context>

<pallas_src>
import functools
import math

import jax
import jax.numpy as jnp
from jax.experimental import pallas as pl
from jax.experimental.pallas import tpu as pltpu

# ---- "bert-base-chinese"-shaped config, scaled down for the demo ------------
VOCAB = 100          # real: 21128
HIDDEN = 32          # 768
NUM_HEADS = 4        # 12
NUM_LAYERS = 2       # 12
INTERMEDIATE = 64    # 3072
MAX_POS = 16         # 512
TYPE_VOCAB = 2       # 2
LN_EPS = 1e-12
HEAD_DIM = HIDDEN // NUM_HEADS


# ------------------------------ helpers --------------------------------------

def _choose_tile(dim, preferred, align):
    """Largest multiple of `align` <= preferred that divides dim; else the full dim."""
    if dim <= preferred:
        return dim
    t = (preferred // align) * align
    while t >= align:
        if dim % t == 0:
            return t
        t -= align
    return dim


_VMEM_CAP = None


def _vmem_cap():
    """Usable scoped-VMEM cap: physical capacity minus headroom (never the full chip)."""
    global _VMEM_CAP
    if _VMEM_CAP is None:
        try:
            cap = int(pltpu.get_tpu_info().vmem_capacity_bytes)
        except Exception:  # pragma: no cover - conservative fallback
            cap = 64 << 20
        # Leave room for compiler-internal scratch / semaphores; on v7x (64 MiB
        # physical) this yields ~48 MiB, on v5e/v6e (128 MiB) ~112 MiB.
        _VMEM_CAP = max(cap - (16 << 20), 32 << 20)
    return _VMEM_CAP


def _vmem_limit(*block_bytes):
    # 2x for double-buffered pipelined blocks plus slack, clamped to the usable cap.
    total = 2 * sum(int(b) for b in block_bytes) + (4 << 20)
    return int(min(max(total, 8 << 20), _vmem_cap()))


# =============================== Pallas kernels ==============================

def _dense_kernel(x_ref, w_ref, b_ref, o_ref, *, activation):
    """out = act(x @ w + b); full-K block, f32 math, bias/activation epilogue."""
    y = jnp.dot(x_ref[...], w_ref[...],
                preferred_element_type=jnp.float32) + b_ref[...]
    if activation == "gelu":          # exact (erf) GELU, as in HF BERT
        y = 0.5 * y * (1.0 + jax.lax.erf(y * (1.0 / math.sqrt(2.0))))
    elif activation == "tanh":        # pooler activation
        y = jnp.tanh(y)
    o_ref[...] = y.astype(o_ref.dtype)


def dense(x, w, b, activation="none", out_dtype=jnp.bfloat16,
          tm_pref=256, tn_pref=512):
    """act(x @ w + b); x:(M,K), w:(K,N) bf16 on the MXU, b:(N,) f32 -> (M,N).

    K is un-tiled (full-K panels fit VMEM at BERT-base sizes), so there is no
    accumulator scratch.  Grid is (N-tiles, M-tiles): the weight block index is
    constant across the inner M axis, so each (K, tn) weight panel is DMA'd once
    and stays VMEM-resident while all M tiles stream past it.
    """
    M, K = x.shape
    N = w.shape[1]
    tm = _choose_tile(M, tm_pref, 16)      # 16-row alignment for bf16 sublane packing
    tn = _choose_tile(N, tn_pref, 128)
    grid = (N // tn, M // tm)
    kernel = functools.partial(_dense_kernel, activation=activation)
    vmem = _vmem_limit(tm * K * 2, K * tn * 2, tn * 4,
                       tm * tn * jnp.dtype(out_dtype).itemsize,
                       tm * tn * 4)
    return pl.pallas_call(
        kernel,
        out_shape=jax.ShapeDtypeStruct((M, N), out_dtype),
        grid=grid,
        in_specs=[pl.BlockSpec((tm, K), lambda j, i: (i, 0)),
                  pl.BlockSpec((K, tn), lambda j, i: (0, j)),
                  pl.BlockSpec((1, tn), lambda j, i: (0, j))],
        out_specs=pl.BlockSpec((tm, tn), lambda j, i: (i, j)),
        compiler_params=pltpu.CompilerParams(
            dimension_semantics=("parallel", "parallel"),
            vmem_limit_bytes=vmem),
    )(x.astype(jnp.bfloat16), w.astype(jnp.bfloat16),
      b.reshape(1, N).astype(jnp.float32))


def _dense_res_ln_kernel(x_ref, w_ref, b_ref, r_ref, g_ref, bt_ref, o_ref, *, eps):
    """Fused: LayerNorm((x @ w + b) + residual) * gamma + beta (full-K block)."""
    y = (jnp.dot(x_ref[...], w_ref[...], preferred_element_type=jnp.float32)
         + b_ref[...] + r_ref[...].astype(jnp.float32))
    mean = jnp.mean(y, axis=-1, keepdims=True)
    yc = y - mean
    var = jnp.mean(yc * yc, axis=-1, keepdims=True)
    o_ref[...] = (yc * jax.lax.rsqrt(var + eps) * g_ref[...]
                  + bt_ref[...]).astype(o_ref.dtype)


def dense_residual_layernorm(x, w, b, residual, gamma, beta, eps=LN_EPS,
                             out_dtype=jnp.bfloat16, tm_pref=256):
    """Projection + residual + post-LN fused in one kernel.

    LN normalizes over the full N axis, so N stays a single lane-dense panel;
    K is un-tiled as well (no accumulator), only M is tiled.  The (K, N) weight
    has a constant block index so it is fetched once and stays resident.
    """
    M, K = x.shape
    N = w.shape[1]
    tm = _choose_tile(M, tm_pref, 16)
    grid = (M // tm,)
    kernel = functools.partial(_dense_res_ln_kernel, eps=eps)
    vmem = _vmem_limit(tm * K * 2, K * N * 2, 3 * N * 4,
                       tm * N * residual.dtype.itemsize,
                       tm * N * jnp.dtype(out_dtype).itemsize,
                       2 * tm * N * 4)
    return pl.pallas_call(
        kernel,
        out_shape=jax.ShapeDtypeStruct((M, N), out_dtype),
        grid=grid,
        in_specs=[pl.BlockSpec((tm, K), lambda i: (i, 0)),
                  pl.BlockSpec((K, N), lambda i: (0, 0)),
                  pl.BlockSpec((1, N), lambda i: (0, 0)),
                  pl.BlockSpec((tm, N), lambda i: (i, 0)),
                  pl.BlockSpec((1, N), lambda i: (0, 0)),
                  pl.BlockSpec((1, N), lambda i: (0, 0))],
        out_specs=pl.BlockSpec((tm, N), lambda i: (i, 0)),
        compiler_params=pltpu.CompilerParams(
            dimension_semantics=("parallel",),
            vmem_limit_bytes=vmem),
    )(x.astype(jnp.bfloat16), w.astype(jnp.bfloat16),
      b.reshape(1, N).astype(jnp.float32),
      residual, gamma.reshape(1, N).astype(jnp.float32),
      beta.reshape(1, N).astype(jnp.float32))


def _layernorm_kernel(x_ref, g_ref, b_ref, o_ref, *, eps):
    x = x_ref[...].astype(jnp.float32)
    mean = jnp.mean(x, axis=-1, keepdims=True)
    xc = x - mean
    var = jnp.mean(xc * xc, axis=-1, keepdims=True)
    o_ref[...] = (xc * jax.lax.rsqrt(var + eps) * g_ref[...]
                  + b_ref[...]).astype(o_ref.dtype)


def layernorm(x, gamma, beta, eps=LN_EPS, out_dtype=jnp.bfloat16, tm_pref=512):
    """Plain LayerNorm over the last dim (embedding LN; no zero-residual read)."""
    M, H = x.shape
    tm = _choose_tile(M, tm_pref, 8)
    grid = (M // tm,)
    kernel = functools.partial(_layernorm_kernel, eps=eps)
    vmem = _vmem_limit(tm * H * x.dtype.itemsize, 2 * H * 4,
                       tm * H * jnp.dtype(out_dtype).itemsize,
                       tm * H * 4)
    return pl.pallas_call(
        kernel,
        out_shape=jax.ShapeDtypeStruct((M, H), out_dtype),
        grid=grid,
        in_specs=[pl.BlockSpec((tm, H), lambda i: (i, 0)),
                  pl.BlockSpec((1, H), lambda i: (0, 0)),
                  pl.BlockSpec((1, H), lambda i: (0, 0))],
        out_specs=pl.BlockSpec((tm, H), lambda i: (i, 0)),
        compiler_params=pltpu.CompilerParams(
            dimension_semantics=("parallel",),
            vmem_limit_bytes=vmem),
    )(x, gamma.reshape(1, H).astype(jnp.float32),
      beta.reshape(1, H).astype(jnp.float32))


def _attention_kernel(x_ref, wq_ref, wk_ref, wv_ref, bq_ref, bk_ref, bv_ref,
                      m_ref, o_ref, *, num_heads, head_dim):
    """One batch element: fused per-head Q/K/V projection + softmax(QK^T + mask) V.

    * Q/K/V are computed in-kernel from VMEM-resident per-head weight panels, so the
      (S, 3H) QKV activation never exists in HBM and no wide-slab lane slicing occurs.
    * QK^T contracts on head_dim of both operands via dot_general (no K transpose).
    * Each head's context is stored directly into its lane slice of the (S, H) output
      slab, so no concatenate / simultaneous live per-head contexts.
    * 1/sqrt(head_dim) is pre-folded into wq/bq at init, so no per-score scaling here.
    """
    x = x_ref[0]                                  # (S, H)  bf16
    bias = m_ref[0]                               # (1, S)  f32 additive mask
    for h in range(num_heads):                    # static unroll over heads
        q = (jnp.dot(x, wq_ref[h], preferred_element_type=jnp.float32)
             + bq_ref[h]).astype(x.dtype)         # (S, hd) bf16, scale folded
        k = (jnp.dot(x, wk_ref[h], preferred_element_type=jnp.float32)
             + bk_ref[h]).astype(x.dtype)
        v = (jnp.dot(x, wv_ref[h], preferred_element_type=jnp.float32)
             + bv_ref[h]).astype(x.dtype)
        s = jax.lax.dot_general(q, k, (((1,), (1,)), ((), ())),
                                preferred_element_type=jnp.float32) + bias
        s = s - jnp.max(s, axis=-1, keepdims=True)
        p = jnp.exp(s)
        p = p * pl.reciprocal(jnp.sum(p, axis=-1, keepdims=True), approx=True)
        ctx = jnp.dot(p.astype(x.dtype), v, preferred_element_type=jnp.float32)
        lo = h * head_dim
        o_ref[0, :, lo:lo + head_dim] = ctx.astype(o_ref.dtype)


def attention(x, p, mask_bias, batch, seq):
    """x: (B*S, H) bf16, mask_bias: (B, 1, S) f32 -> context (B*S, H) bf16."""
    # TODO(synk): for long sequences switch to flash-style online-softmax KV tiling;
    #             full per-head (S, S) scores fit comfortably in VMEM at these sizes.
    x3 = x.reshape(batch, seq, HIDDEN)
    kernel = functools.partial(_attention_kernel, num_heads=NUM_HEADS,
                               head_dim=HEAD_DIM)
    # Include in-kernel f32 temporaries: scores/probs (S,S) and per-head q/k/v/ctx.
    temp_bytes = seq * seq * (4 + 2) + 8 * seq * HEAD_DIM * 4
    vmem = _vmem_limit(seq * HIDDEN * 2,                  # x slab
                       3 * NUM_HEADS * HIDDEN * HEAD_DIM * 2,   # resident weights
                       3 * NUM_HEADS * HEAD_DIM * 4,      # biases
                       seq * 4,                           # mask
                       seq * HIDDEN * 2,                  # output slab
                       temp_bytes)
    w_spec = pl.BlockSpec((NUM_HEADS, HIDDEN, HEAD_DIM), lambda b: (0, 0, 0))
    b_spec = pl.BlockSpec((NUM_HEADS, 1, HEAD_DIM), lambda b: (0, 0, 0))
    out = pl.pallas_call(
        kernel,
        out_shape=jax.ShapeDtypeStruct((batch, seq, HIDDEN), jnp.bfloat16),
        grid=(batch,),
        in_specs=[pl.BlockSpec((1, seq, HIDDEN), lambda b: (b, 0, 0)),
                  w_spec, w_spec, w_spec,
                  b_spec, b_spec, b_spec,
                  pl.BlockSpec((1, 1, seq), lambda b: (b, 0, 0))],
        out_specs=pl.BlockSpec((1, seq, HIDDEN), lambda b: (b, 0, 0)),
        compiler_params=pltpu.CompilerParams(
            dimension_semantics=("parallel",),
            vmem_limit_bytes=vmem),
    )(x3, p["wq"], p["wk"], p["wv"], p["bq"], p["bk"], p["bv"], mask_bias)
    return out.reshape(batch * seq, HIDDEN)


# =============================== model (glue) ================================

def init_params(key):
    keys = iter(jax.random.split(key, 6 * NUM_LAYERS + 8))

    def w(shape, scale=0.02):
        return (scale * jax.random.normal(next(keys), shape)).astype(jnp.float32)

    params = {
        "word_emb": w((VOCAB, HIDDEN)),
        "pos_emb": w((MAX_POS, HIDDEN)),
        "type_emb": w((TYPE_VOCAB, HIDDEN)),
        "emb_ln_g": jnp.ones((HIDDEN,), jnp.float32),
        "emb_ln_b": jnp.zeros((HIDDEN,), jnp.float32),
        "pooler_w": w((HIDDEN, HIDDEN)).astype(jnp.bfloat16),
        "pooler_b": jnp.zeros((HIDDEN,), jnp.float32),
        "layers": [],
    }

    scale = 1.0 / math.sqrt(HEAD_DIM)

    def per_head_w(mat):   # (H, H) -> (num_heads, H, head_dim): head h = cols [h*hd, (h+1)*hd)
        return mat.reshape(HIDDEN, NUM_HEADS, HEAD_DIM).transpose(1, 0, 2)

    def per_head_b(vec):   # (H,) -> (num_heads, 1, head_dim)
        return vec.reshape(NUM_HEADS, 1, HEAD_DIM).astype(jnp.float32)

    for _ in range(NUM_LAYERS):
        qw, kw, vw = w((HIDDEN, HIDDEN)), w((HIDDEN, HIDDEN)), w((HIDDEN, HIDDEN))
        qb = jnp.zeros((HIDDEN,), jnp.float32)
        kb = jnp.zeros((HIDDEN,), jnp.float32)
        vb = jnp.zeros((HIDDEN,), jnp.float32)
        params["layers"].append({
            # Per-head Q/K/V panels; 1/sqrt(head_dim) folded into Q weight & bias.
            "wq": per_head_w(qw * scale).astype(jnp.bfloat16),
            "wk": per_head_w(kw).astype(jnp.bfloat16),
            "wv": per_head_w(vw).astype(jnp.bfloat16),
            "bq": per_head_b(qb * scale),
            "bk": per_head_b(kb),
            "bv": per_head_b(vb),
            "o_w": w((HIDDEN, HIDDEN)).astype(jnp.bfloat16),
            "o_b": jnp.zeros((HIDDEN,), jnp.float32),
            "ln1_g": jnp.ones((HIDDEN,), jnp.float32),
            "ln1_b": jnp.zeros((HIDDEN,), jnp.float32),
            "i_w": w((HIDDEN, INTERMEDIATE)).astype(jnp.bfloat16),
            "i_b": jnp.zeros((INTERMEDIATE,), jnp.float32),
            "out_w": w((INTERMEDIATE, HIDDEN)).astype(jnp.bfloat16),
            "out_b": jnp.zeros((HIDDEN,), jnp.float32),
            "ln2_g": jnp.ones((HIDDEN,), jnp.float32),
            "ln2_b": jnp.zeros((HIDDEN,), jnp.float32),
        })
    return params


def encoder_layer(x, p, mask_bias, B, S):
    """x: (B*S, H) bf16 -> (B*S, H) bf16."""
    ctx = attention(x, p, mask_bias, B, S)                         # fused QKV + MHA
    # attention-output projection + residual + post-LN, fused in one kernel
    x = dense_residual_layernorm(ctx, p["o_w"], p["o_b"], x,
                                 p["ln1_g"], p["ln1_b"])
    inter = dense(x, p["i_w"], p["i_b"], activation="gelu")        # (B*S, I)
    # FFN-output projection + residual + post-LN, fused in one kernel
    x = dense_residual_layernorm(inter, p["out_w"], p["out_b"], x,
                                 p["ln2_g"], p["ln2_b"])
    return x


def bert_forward(params, input_ids, token_type_ids=None, attention_mask=None):
    B, S = input_ids.shape
    if token_type_ids is None:
        token_type_ids = jnp.zeros((B, S), jnp.int32)
    if attention_mask is None:
        attention_mask = jnp.ones((B, S), jnp.int32)

    # Embedding gathers are glue JAX; the embedding LayerNorm runs in Pallas.
    emb = (params["word_emb"][input_ids]
           + params["pos_emb"][jnp.arange(S)][None, :, :]
           + params["type_emb"][token_type_ids])                   # (B, S, H) f32
    x = layernorm(emb.reshape(B * S, HIDDEN),
                  params["emb_ln_g"], params["emb_ln_b"])          # bf16

    # Additive attention-mask bias, HF-style: (1 - mask) * -10000.
    mask_bias = ((1.0 - attention_mask.astype(jnp.float32)) * -10000.0
                 ).reshape(B, 1, S)

    for layer in params["layers"]:
        x = encoder_layer(x, layer, mask_bias, B, S)

    last_hidden_state = x.astype(jnp.float32).reshape(B, S, HIDDEN)
    cls = x.reshape(B, S, HIDDEN)[:, 0, :]                         # (B, H) bf16
    pooler_output = dense(cls, params["pooler_w"], params["pooler_b"],
                          activation="tanh", out_dtype=jnp.float32)
    return {"last_hidden_state": last_hidden_state,
            "pooler_output": pooler_output}


if __name__ == "__main__":
    key = jax.random.PRNGKey(0)
    pkey, ikey = jax.random.split(key)
    params = init_params(pkey)

    B, S = 2, 8
    input_ids = jax.random.randint(ikey, (B, S), 0, VOCAB, dtype=jnp.int32)
    token_type_ids = jnp.concatenate(
        [jnp.zeros((B, S // 2), jnp.int32), jnp.ones((B, S // 2), jnp.int32)],
        axis=1)
    attention_mask = jnp.array([[1, 1, 1, 1, 1, 1, 1, 1],
                                [1, 1, 1, 1, 1, 1, 0, 0]], jnp.int32)

    fwd = jax.jit(bert_forward)
    out = fwd(params, input_ids, token_type_ids, attention_mask)
    jax.block_until_ready(out)
    assert out["last_hidden_state"].shape == (B, S, HIDDEN)
    assert out["pooler_output"].shape == (B, HIDDEN)
    assert bool(jnp.all(jnp.isfinite(out["last_hidden_state"])))
    assert bool(jnp.all(jnp.isfinite(out["pooler_output"])))
    print("KERNEL_OK")
</pallas_src>

<mosaic_0001>
module attributes {stable_mosaic.version = 11 : i64} {
  func.func @_layernorm_kernel(%arg0: i32, %arg1: memref<16x32xf32, #tpu.memory_space<vmem>>, %arg2: memref<1x32xf32, #tpu.memory_space<vmem>>, %arg3: memref<1x32xf32, #tpu.memory_space<vmem>>, %arg4: memref<16x32xbf16, #tpu.memory_space<vmem>>) attributes {dimension_semantics = [#tpu.dimension_semantics<parallel>], iteration_bounds = array<i64: 1>, scalar_prefetch = 0 : i64, scratch_operands = 0 : i64, tpu.core_type = #tpu.core_type<tc>, window_params = [{transform_indices = @transform_0, window_bounds = array<i64: 16, 32>}, {pipeline_mode = #tpu.pipeline_mode<synchronous>, transform_indices = @transform_1, window_bounds = array<i64: 1, 32>}, {pipeline_mode = #tpu.pipeline_mode<synchronous>, transform_indices = @transform_2, window_bounds = array<i64: 1, 32>}, {transform_indices = @transform_3, window_bounds = array<i64: 16, 32>}]} {
    %c0 = arith.constant 0 : index
    %c0_0 = arith.constant 0 : index
    %0 = vector.load %arg1[%c0, %c0_0] : memref<16x32xf32, #tpu.memory_space<vmem>>, vector<16x32xf32>
    %cst = arith.constant dense<0.000000e+00> : vector<16xf32>
    %1 = vector.multi_reduction <add>, %0, %cst [1] : vector<16x32xf32> to vector<16xf32>
    %2 = vector.shape_cast %1 : vector<16xf32> to vector<16x1xf32>
    %cst_1 = arith.constant 3.200000e+01 : f32
    %3 = vector.broadcast %cst_1 : f32 to vector<16x1xf32>
    %4 = arith.divf %2, %3 : vector<16x1xf32>
    %5 = vector.broadcast %4 : vector<16x1xf32> to vector<16x32xf32>
    %6 = arith.subf %0, %5 : vector<16x32xf32>
    %7 = arith.mulf %6, %6 : vector<16x32xf32>
    %cst_2 = arith.constant dense<0.000000e+00> : vector<16xf32>
    %8 = vector.multi_reduction <add>, %7, %cst_2 [1] : vector<16x32xf32> to vector<16xf32>
    %9 = vector.shape_cast %8 : vector<16xf32> to vector<16x1xf32>
    %cst_3 = arith.constant 3.200000e+01 : f32
    %10 = vector.broadcast %cst_3 : f32 to vector<16x1xf32>
    %11 = arith.divf %9, %10 : vector<16x1xf32>
    %cst_4 = arith.constant 9.99999996E-13 : f32
    %12 = vector.broadcast %cst_4 : f32 to vector<16x1xf32>
    %13 = arith.addf %11, %12 : vector<16x1xf32>
    %14 = math.rsqrt %13 : vector<16x1xf32>
    %15 = vector.broadcast %14 : vector<16x1xf32> to vector<16x32xf32>
    %16 = arith.mulf %6, %15 : vector<16x32xf32>
    %c0_5 = arith.constant 0 : index
    %c0_6 = arith.constant 0 : index
    %17 = vector.load %arg2[%c0_5, %c0_6] : memref<1x32xf32, #tpu.memory_space<vmem>>, vector<1x32xf32>
    %18 = vector.broadcast %17 : vector<1x32xf32> to vector<16x32xf32>
    %19 = arith.mulf %16, %18 : vector<16x32xf32>
    %c0_7 = arith.constant 0 : index
    %c0_8 = arith.constant 0 : index
    %20 = vector.load %arg3[%c0_7, %c0_8] : memref<1x32xf32, #tpu.memory_space<vmem>>, vector<1x32xf32>
    %21 = vector.broadcast %20 : vector<1x32xf32> to vector<16x32xf32>
    %22 = arith.addf %19, %21 : vector<16x32xf32>
    %23 = arith.truncf %22 : vector<16x32xf32> to vector<16x32xbf16>
    %c0_9 = arith.constant 0 : index
    %c0_10 = arith.constant 0 : index
    %24 = vector.load %arg4[%c0_9, %c0_10] : memref<16x32xbf16, #tpu.memory_space<vmem>>, vector<16x32xbf16>
    tpu.vector_store %arg4[%c0_9, %c0_10], %23 {strides = array<i32>} : memref<16x32xbf16, #tpu.memory_space<vmem>>, vector<16x32xbf16>,
    return
  }
  func.func @transform_0(%arg0: i32) -> (i32, i32) {
    %c0_i32 = arith.constant 0 : i32
    %c0_i32_0 = arith.constant 0 : i32
    return %arg0, %c0_i32 : i32, i32
  }
  func.func @transform_1(%arg0: i32) -> (i32, i32) {
    %c0_i32 = arith.constant 0 : i32
    %c0_i32_0 = arith.constant 0 : i32
    %c0_i32_1 = arith.constant 0 : i32
    return %c0_i32, %c0_i32_0 : i32, i32
  }
  func.func @transform_2(%arg0: i32) -> (i32, i32) {
    %c0_i32 = arith.constant 0 : i32
    %c0_i32_0 = arith.constant 0 : i32
    %c0_i32_1 = arith.constant 0 : i32
    return %c0_i32, %c0_i32_0 : i32, i32
  }
  func.func @transform_3(%arg0: i32) -> (i32, i32) {
    %c0_i32 = arith.constant 0 : i32
    %c0_i32_0 = arith.constant 0 : i32
    return %arg0, %c0_i32 : i32, i32
  }
}

module attributes {stable_mosaic.version = 11 : i64} {
  func.func @_attention_kernel(%arg0: i32, %arg1: memref<1x8x32xbf16, #tpu.memory_space<vmem>>, %arg2: memref<4x32x8xbf16, #tpu.memory_space<vmem>>, %arg3: memref<4x32x8xbf16, #tpu.memory_space<vmem>>, %arg4: memref<4x32x8xbf16, #tpu.memory_space<vmem>>, %arg5: memref<4x1x8xf32, #tpu.memory_space<vmem>>, %arg6: memref<4x1x8xf32, #tpu.memory_space<vmem>>, %arg7: memref<4x1x8xf32, #tpu.memory_space<vmem>>, %arg8: memref<1x1x8xf32, #tpu.memory_space<vmem>>, %arg9: memref<1x8x32xbf16, #tpu.memory_space<vmem>>) attributes {dimension_semantics = [#tpu.dimension_semantics<parallel>], iteration_bounds = array<i64: 2>, scalar_prefetch = 0 : i64, scratch_operands = 0 : i64, tpu.core_type = #tpu.core_type<tc>, window_params = [{transform_indices = @transform_0, window_bounds = array<i64: 1, 8, 32>}, {pipeline_mode = #tpu.pipeline_mode<synchronous>, transform_indices = @transform_1, window_bounds = array<i64: 4, 32, 8>}, {pipeline_mode = #tpu.pipeline_mode<synchronous>, transform_indices = @transform_2, window_bounds = array<i64: 4, 32, 8>}, {pipeline_mode = #tpu.pipeline_mode<synchronous>, transform_indices = @transform_3, window_bounds = array<i64: 4, 32, 8>}, {pipeline_mode = #tpu.pipeline_mode<synchronous>, transform_indices = @transform_4, window_bounds = array<i64: 4, 1, 8>}, {pipeline_mode = #tpu.pipeline_mode<synchronous>, transform_indices = @transform_5, window_bounds = array<i64: 4, 1, 8>}, {pipeline_mode = #tpu.pipeline_mode<synchronous>, transform_indices = @transform_6, window_bounds = array<i64: 4, 1, 8>}, {transform_indices = @transform_7, window_bounds = array<i64: 1, 1, 8>}, {transform_indices = @transform_8, window_bounds = array<i64: 1, 8, 32>}]} {
    %c0 = arith.constant 0 : index
    %c0_0 = arith.constant 0 : index
    %c0_1 = arith.constant 0 : index
    %0 = vector.load %arg1[%c0, %c0_0, %c0_1] : memref<1x8x32xbf16, #tpu.memory_space<vmem>>, vector<1x8x32xbf16>
    %1 = vector.shape_cast %0 : vector<1x8x32xbf16> to vector<8x32xbf16>
    %c0_2 = arith.constant 0 : index
    %c0_3 = arith.constant 0 : index
    %c0_4 = arith.constant 0 : index
    %2 = vector.load %arg8[%c0_2, %c0_3, %c0_4] : memref<1x1x8xf32, #tpu.memory_space<vmem>>, vector<1x1x8xf32>
    %3 = vector.shape_cast %2 : vector<1x1x8xf32> to vector<1x8xf32>
    %c0_5 = arith.constant 0 : index
    %c0_6 = arith.constant 0 : index
    %c0_7 = arith.constant 0 : index
    %4 = vector.load %arg2[%c0_5, %c0_6, %c0_7] : memref<4x32x8xbf16, #tpu.memory_space<vmem>>, vector<1x32x8xbf16>
    %5 = vector.shape_cast %4 : vector<1x32x8xbf16> to vector<32x8xbf16>
    %cst = arith.constant dense<0.000000e+00> : vector<8x8xf32>
    %6 = tpu.matmul %1, %5, %cst {dimension_numbers = #tpu.dot_dimension_numbers<[1], [0], [0], [1], [0, 0, 1, 1], [], []>} : vector<8x32xbf16>, vector<32x8xbf16>, vector<8x8xf32> -> vector<8x8xf32>
    %c0_8 = arith.constant 0 : index
    %c0_9 = arith.constant 0 : index
    %c0_10 = arith.constant 0 : index
    %7 = vector.load %arg5[%c0_8, %c0_9, %c0_10] : memref<4x1x8xf32, #tpu.memory_space<vmem>>, vector<1x1x8xf32>
    %8 = vector.shape_cast %7 : vector<1x1x8xf32> to vector<1x8xf32>
    %9 = vector.broadcast %8 : vector<1x8xf32> to vector<8x8xf32>
    %10 = arith.addf %6, %9 : vector<8x8xf32>
    %11 = arith.truncf %10 : vector<8x8xf32> to vector<8x8xbf16>
    %c0_11 = arith.constant 0 : index
    %c0_12 = arith.constant 0 : index
    %c0_13 = arith.constant 0 : index
    %12 = vector.load %arg3[%c0_11, %c0_12, %c0_13] : memref<4x32x8xbf16, #tpu.memory_space<vmem>>, vector<1x32x8xbf16>
    %13 = vector.shape_cast %12 : vector<1x32x8xbf16> to vector<32x8xbf16>
    %cst_14 = arith.constant dense<0.000000e+00> : vector<8x8xf32>
    %14 = tpu.matmul %1, %13, %cst_14 {dimension_numbers = #tpu.dot_dimension_numbers<[1], [0], [0], [1], [0, 0, 1, 1], [], []>} : vector<8x32xbf16>, vector<32x8xbf16>, vector<8x8xf32> -> vector<8x8xf32>
    %c0_15 = arith.constant 0 : index
    %c0_16 = arith.constant 0 : index
    %c0_17 = arith.constant 0 : index
    %15 = vector.load %arg6[%c0_15, %c0_16, %c0_17] : memref<4x1x8xf32, #tpu.memory_space<vmem>>, vector<1x1x8xf32>
    %16 = vector.shape_cast %15 : vector<1x1x8xf32> to vector<1x8xf32>
    %17 = vector.broadcast %16 : vector<1x8xf32> to vector<8x8xf32>
    %18 = arith.addf %14, %17 : vector<8x8xf32>
    %19 = arith.truncf %18 : vector<8x8xf32> to vector<8x8xbf16>
    %c0_18 = arith.constant 0 : index
    %c0_19 = arith.constant 0 : index
    %c0_20 = arith.constant 0 : index
    %20 = vector.load %arg4[%c0_18, %c0_19, %c0_20] : memref<4x32x8xbf16, #tpu.memory_space<vmem>>, vector<1x32x8xbf16>
    %21 = vector.shape_cast %20 : vector<1x32x8xbf16> to vector<32x8xbf16>
    %cst_21 = arith.constant dense<0.000000e+00> : vector<8x8xf32>
    %22 = tpu.matmul %1, %21, %cst_21 {dimension_numbers = #tpu.dot_dimension_numbers<[1], [0], [0], [1], [0, 0, 1, 1], [], []>} : vector<8x32xbf16>, vector<32x8xbf16>, vector<8x8xf32> -> vector<8x8xf32>
    %c0_22 = arith.constant 0 : index
    %c0_23 = arith.constant 0 : index
    %c0_24 = arith.constant 0 : index
    %23 = vector.load %arg7[%c0_22, %c0_23, %c0_24] : memref<4x1x8xf32, #tpu.memory_space<vmem>>, vector<1x1x8xf32>
    %24 = vector.shape_cast %23 : vector<1x1x8xf32> to vector<1x8xf32>
    %25 = vector.broadcast %24 : vector<1x8xf32> to vector<8x8xf32>
    %26 = arith.addf %22, %25 : vector<8x8xf32>
    %27 = arith.truncf %26 : vector<8x8xf32> to vector<8x8xbf16>
    %cst_25 = arith.constant dense<0.000000e+00> : vector<8x8xf32>
    %28 = tpu.matmul %11, %19, %cst_25 {dimension_numbers = #tpu.dot_dimension_numbers<[1], [1], [0], [0], [0, 0, 1, 0], [], []>} : vector<8x8xbf16>, vector<8x8xbf16>, vector<8x8xf32> -> vector<8x8xf32>
    %29 = vector.broadcast %3 : vector<1x8xf32> to vector<8x8xf32>
    %30 = arith.addf %28, %29 : vector<8x8xf32>
    %cst_26 = arith.constant dense<0xFF800000> : vector<8xf32>
    %31 = vector.multi_reduction <maximumf>, %30, %cst_26 [1] : vector<8x8xf32> to vector<8xf32>
    %32 = vector.shape_cast %31 : vector<8xf32> to vector<8x1xf32>
    %33 = vector.broadcast %32 : vector<8x1xf32> to vector<8x8xf32>
    %34 = arith.subf %30, %33 : vector<8x8xf32>
    %35 = math.exp %34 : vector<8x8xf32>
    %cst_27 = arith.constant dense<0.000000e+00> : vector<8xf32>
    %36 = vector.multi_reduction <add>, %35, %cst_27 [1] : vector<8x8xf32> to vector<8xf32>
    %37 = vector.shape_cast %36 : vector<8xf32> to vector<8x1xf32>
    %38 = tpu.reciprocal %37 {approx = true} : vector<8x1xf32> -> vector<8x1xf32>
    %39 = vector.broadcast %38 : vector<8x1xf32> to vector<8x8xf32>
    %40 = arith.mulf %35, %39 : vector<8x8xf32>
    %41 = arith.truncf %40 : vector<8x8xf32> to vector<8x8xbf16>
    %cst_28 = arith.constant dense<0.000000e+00> : vector<8x8xf32>
    %42 = tpu.matmul %41, %27, %cst_28 {dimension_numbers = #tpu.dot_dimension_numbers<[1], [0], [0], [1], [0, 0, 1, 1], [], []>} : vector<8x8xbf16>, vector<8x8xbf16>, vector<8x8xf32> -> vector<8x8xf32>
    %43 = arith.truncf %42 : vector<8x8xf32> to vector<8x8xbf16>
    %c0_29 = arith.constant 0 : index
    %c0_30 = arith.constant 0 : index
    %c0_31 = arith.constant 0 : index
    %44 = vector.load %arg9[%c0_29, %c0_30, %c0_31] : memref<1x8x32xbf16, #tpu.memory_space<vmem>>, vector<1x8x8xbf16>
    %45 = vector.shape_cast %44 : vector<1x8x8xbf16> to vector<8x8xbf16>
    %46 = vector.shape_cast %43 : vector<8x8xbf16> to vector<1x8x8xbf16>
    tpu.vector_store %arg9[%c0_29, %c0_30, %c0_31], %46 {strides = array<i32>} : memref<1x8x32xbf16, #tpu.memory_space<vmem>>, vector<1x8x8xbf16>,
    %c1 = arith.constant 1 : index
    %c0_32 = arith.constant 0 : index
    %c0_33 = arith.constant 0 : index
    %47 = vector.load %arg2[%c1, %c0_32, %c0_33] : memref<4x32x8xbf16, #tpu.memory_space<vmem>>, vector<1x32x8xbf16>
    %48 = vector.shape_cast %47 : vector<1x32x8xbf16> to vector<32x8xbf16>
    %cst_34 = arith.constant dense<0.000000e+00> : vector<8x8xf32>
    %49 = tpu.matmul %1, %48, %cst_34 {dimension_numbers = #tpu.dot_dimension_numbers<[1], [0], [0], [1], [0, 0, 1, 1], [], []>} : vector<8x32xbf16>, vector<32x8xbf16>, vector<8x8xf32> -> vector<8x8xf32>
    %c1_35 = arith.constant 1 : index
    %c0_36 = arith.constant 0 : index
    %c0_37 = arith.constant 0 : index
    %50 = vector.load %arg5[%c1_35, %c0_36, %c0_37] : memref<4x1x8xf32, #tpu.memory_space<vmem>>, vector<1x1x8xf32>
    %51 = vector.shape_cast %50 : vector<1x1x8xf32> to vector<1x8xf32>
    %52 = vector.broadcast %51 : vector<1x8xf32> to vector<8x8xf32>
    %53 = arith.addf %49, %52 : vector<8x8xf32>
    %54 = arith.truncf %53 : vector<8x8xf32> to vector<8x8xbf16>
    %c1_38 = arith.constant 1 : index
    %c0_39 = arith.constant 0 : index
    %c0_40 = arith.constant 0 : index
    %55 = vector.load %arg3[%c1_38, %c0_39, %c0_40] : memref<4x32x8xbf16, #tpu.memory_space<vmem>>, vector<1x32x8xbf16>
    %56 = vector.shape_cast %55 : vector<1x32x8xbf16> to vector<32x8xbf16>
    %cst_41 = arith.constant dense<0.000000e+00> : vector<8x8xf32>
    %57 = tpu.matmul %1, %56, %cst_41 {dimension_numbers = #tpu.dot_dimension_numbers<[1], [0], [0], [1], [0, 0, 1, 1], [], []>} : vector<8x32xbf16>, vector<32x8xbf16>, vector<8x8xf32> -> vector<8x8xf32>
    %c1_42 = arith.constant 1 : index
    %c0_43 = arith.constant 0 : index
    %c0_44 = arith.constant 0 : index
    %58 = vector.load %arg6[%c1_42, %c0_43, %c0_44] : memref<4x1x8xf32, #tpu.memory_space<vmem>>, vector<1x1x8xf32>
    %59 = vector.shape_cast %58 : vector<1x1x8xf32> to vector<1x8xf32>
    %60 = vector.broadcast %59 : vector<1x8xf32> to vector<8x8xf32>
    %61 = arith.addf %57, %60 : vector<8x8xf32>
    %62 = arith.truncf %61 : vector<8x8xf32> to vector<8x8xbf16>
    %c1_45 = arith.constant 1 : index
    %c0_46 = arith.constant 0 : index
    %c0_47 = arith.constant 0 : index
    %63 = vector.load %arg4[%c1_45, %c0_46, %c0_47] : memref<4x32x8xbf16, #tpu.memory_space<vmem>>, vector<1x32x8xbf16>
    %64 = vector.shape_cast %63 : vector<1x32x8xbf16> to vector<32x8xbf16>
    %cst_48 = arith.constant dense<0.000000e+00> : vector<8x8xf32>
    %65 = tpu.matmul %1, %64, %cst_48 {dimension_numbers = #tpu.dot_dimension_numbers<[1], [0], [0], [1], [0, 0, 1, 1], [], []>} : vector<8x32xbf16>, vector<32x8xbf16>, vector<8x8xf32> -> vector<8x8xf32>
    %c1_49 = arith.constant 1 : index
    %c0_50 = arith.constant 0 : index
    %c0_51 = arith.constant 0 : index
    %66 = vector.load %arg7[%c1_49, %c0_50, %c0_51] : memref<4x1x8xf32, #tpu.memory_space<vmem>>, vector<1x1x8xf32>
    %67 = vector.shape_cast %66 : vector<1x1x8xf32> to vector<1x8xf32>
    %68 = vector.broadcast %67 : vector<1x8xf32> to vector<8x8xf32>
    %69 = arith.addf %65, %68 : vector<8x8xf32>
    %70 = arith.truncf %69 : vector<8x8xf32> to vector<8x8xbf16>
    %cst_52 = arith.constant dense<0.000000e+00> : vector<8x8xf32>
    %71 = tpu.matmul %54, %62, %cst_52 {dimension_numbers = #tpu.dot_dimension_numbers<[1], [1], [0], [0], [0, 0, 1, 0], [], []>} : vector<8x8xbf16>, vector<8x8xbf16>, vector<8x8xf32> -> vector<8x8xf32>
    %72 = vector.broadcast %3 : vector<1x8xf32> to vector<8x8xf32>
    %73 = arith.addf %71, %72 : vector<8x8xf32>
    %cst_53 = arith.constant dense<0xFF800000> : vector<8xf32>
    %74 = vector.multi_reduction <maximumf>, %73, %cst_53 [1] : vector<8x8xf32> to vector<8xf32>
    %75 = vector.shape_cast %74 : vector<8xf32> to vector<8x1xf32>
    %76 = vector.broadcast %75 : vector<8x1xf32> to vector<8x8xf32>
    %77 = arith.subf %73, %76 : vector<8x8xf32>
    %78 = math.exp %77 : vector<8x8xf32>
    %cst_54 = arith.constant dense<0.000000e+00> : vector<8xf32>
    %79 = vector.multi_reduction <add>, %78, %cst_54 [1] : vector<8x8xf32> to vector<8xf32>
    %80 = vector.shape_cast %79 : vector<8xf32> to vector<8x1xf32>
    %81 = tpu.reciprocal %80 {approx = true} : vector<8x1xf32> -> vector<8x1xf32>
    %82 = vector.broadcast %81 : vector<8x1xf32> to vector<8x8xf32>
    %83 = arith.mulf %78, %82 : vector<8x8xf32>
    %84 = arith.truncf %83 : vector<8x8xf32> to vector<8x8xbf16>
    %cst_55 = arith.constant dense<0.000000e+00> : vector<8x8xf32>
    %85 = tpu.matmul %84, %70, %cst_55 {dimension_numbers = #tpu.dot_dimension_numbers<[1], [0], [0], [1], [0, 0, 1, 1], [], []>} : vector<8x8xbf16>, vector<8x8xbf16>, vector<8x8xf32> -> vector<8x8xf32>
    %86 = arith.truncf %85 : vector<8x8xf32> to vector<8x8xbf16>
    %c0_56 = arith.constant 0 : index
    %c0_57 = arith.constant 0 : index
    %c8 = arith.constant 8 : index
    %87 = vector.load %arg9[%c0_56, %c0_57, %c8] : memref<1x8x32xbf16, #tpu.memory_space<vmem>>, vector<1x8x8xbf16>
    %88 = vector.shape_cast %87 : vector<1x8x8xbf16> to vector<8x8xbf16>
    %89 = vector.shape_cast %86 : vector<8x8xbf16> to vector<1x8x8xbf16>
    tpu.vector_store %arg9[%c0_56, %c0_57, %c8], %89 {strides = array<i32>} : memref<1x8x32xbf16, #tpu.memory_space<vmem>>, vector<1x8x8xbf16>,
    %c2 = arith.constant 2 : index
    %c0_58 = arith.constant 0 : index
    %c0_59 = arith.constant 0 : index
    %90 = vector.load %arg2[%c2, %c0_58, %c0_59] : memref<4x32x8xbf16, #tpu.memory_space<vmem>>, vector<1x32x8xbf16>
    %91 = vector.shape_cast %90 : vector<1x32x8xbf16> to vector<32x8xbf16>
    %cst_60 = arith.constant dense<0.000000e+00> : vector<8x8xf32>
    %92 = tpu.matmul %1, %91, %cst_60 {dimension_numbers = #tpu.dot_dimension_numbers<[1], [0], [0], [1], [0, 0, 1, 1], [], []>} : vector<8x32xbf16>, vector<32x8xbf16>, vector<8x8xf32> -> vector<8x8xf32>
    %c2_61 = arith.constant 2 : index
    %c0_62 = arith.constant 0 : index
    %c0_63 = arith.constant 0 : index
    %93 = vector.load %arg5[%c2_61, %c0_62, %c0_63] : memref<4x1x8xf32, #tpu.memory_space<vmem>>, vector<1x1x8xf32>
    %94 = vector.shape_cast %93 : vector<1x1x8xf32> to vector<1x8xf32>
    %95 = vector.broadcast %94 : vector<1x8xf32> to vector<8x8xf32>
    %96 = arith.addf %92, %95 : vector<8x8xf32>
    %97 = arith.truncf %96 : vector<8x8xf32> to vector<8x8xbf16>
    %c2_64 = arith.constant 2 : index
    %c0_65 = arith.constant 0 : index
    %c0_66 = arith.constant 0 : index
    %98 = vector.load %arg3[%c2_64, %c0_65, %c0_66] : memref<4x32x8xbf16, #tpu.memory_space<vmem>>, vector<1x32x8xbf16>
    %99 = vector.shape_cast %98 : vector<1x32x8xbf16> to vector<32x8xbf16>
    %cst_67 = arith.constant dense<0.000000e+00> : vector<8x8xf32>
    %100 = tpu.matmul %1, %99, %cst_67 {dimension_numbers = #tpu.dot_dimension_numbers<[1], [0], [0], [1], [0, 0, 1, 1], [], []>} : vector<8x32xbf16>, vector<32x8xbf16>, vector<8x8xf32> -> vector<8x8xf32>
    %c2_68 = arith.constant 2 : index
    %c0_69 = arith.constant 0 : index
    %c0_70 = arith.constant 0 : index
    %101 = vector.load %arg6[%c2_68, %c0_69, %c0_70] : memref<4x1x8xf32, #tpu.memory_space<vmem>>, vector<1x1x8xf32>
    %102 = vector.shape_cast %101 : vector<1x1x8xf32> to vector<1x8xf32>
    %103 = vector.broadcast %102 : vector<1x8xf32> to vector<8x8xf32>
    %104 = arith.addf %100, %103 : vector<8x8xf32>
    %105 = arith.truncf %104 : vector<8x8xf32> to vector<8x8xbf16>
    %c2_71 = arith.constant 2 : index
    %c0_72 = arith.constant 0 : index
    %c0_73 = arith.constant 0 : index
    %106 = vector.load %arg4[%c2_71, %c0_72, %c0_73] : memref<4x32x8xbf16, #tpu.memory_space<vmem>>, vector<1x32x8xbf16>
    %107 = vector.shape_cast %106 : vector<1x32x8xbf16> to vector<32x8xbf16>
    %cst_74 = arith.constant dense<0.000000e+00> : vector<8x8xf32>
    %108 = tpu.matmul %1, %107, %cst_74 {dimension_numbers = #tpu.dot_dimension_numbers<[1], [0], [0], [1], [0, 0, 1, 1], [], []>} : vector<8x32xbf16>, vector<32x8xbf16>, vector<8x8xf32> -> vector<8x8xf32>
    %c2_75 = arith.constant 2 : index
    %c0_76 = arith.constant 0 : index
    %c0_77 = arith.constant 0 : index
    %109 = vector.load %arg7[%c2_75, %c0_76, %c0_77] : memref<4x1x8xf32, #tpu.memory_space<vmem>>, vector<1x1x8xf32>
    %110 = vector.shape_cast %109 : vector<1x1x8xf32> to vector<1x8xf32>
    %111 = vector.broadcast %110 : vector<1x8xf32> to vector<8x8xf32>
    %112 = arith.addf %108, %111 : vector<8x8xf32>
    %113 = arith.truncf %112 : vector<8x8xf32> to vector<8x8xbf16>
    %cst_78 = arith.constant dense<0.000000e+00> : vector<8x8xf32>
    %114 = tpu.matmul %97, %105, %cst_78 {dimension_numbers = #tpu.dot_dimension_numbers<[1], [1], [0], [0], [0, 0, 1, 0], [], []>} : vector<8x8xbf16>, vector<8x8xbf16>, vector<8x8xf32> -> vector<8x8xf32>
    %115 = vector.broadcast %3 : vector<1x8xf32> to vector<8x8xf32>
    %116 = arith.addf %114, %115 : vector<8x8xf32>
    %cst_79 = arith.constant dense<0xFF800000> : vector<8xf32>
    %117 = vector.multi_reduction <maximumf>, %116, %cst_79 [1] : vector<8x8xf32> to vector<8xf32>
    %118 = vector.shape_cast %117 : vector<8xf32> to vector<8x1xf32>
    %119 = vector.broadcast %118 : vector<8x1xf32> to vector<8x8xf32>
    %120 = arith.subf %116, %119 : vector<8x8xf32>
    %121 = math.exp %120 : vector<8x8xf32>
    %cst_80 = arith.constant dense<0.000000e+00> : vector<8xf32>
    %122 = vector.multi_reduction <add>, %121, %cst_80 [1] : vector<8x8xf32> to vector<8xf32>
    %123 = vector.shape_cast %122 : vector<8xf32> to vector<8x1xf32>
    %124 = tpu.reciprocal %123 {approx = true} : vector<8x1xf32> -> vector<8x1xf32>
    %125 = vector.broadcast %124 : vector<8x1xf32> to vector<8x8xf32>
    %126 = arith.mulf %121, %125 : vector<8x8xf32>
    %127 = arith.truncf %126 : vector<8x8xf32> to vector<8x8xbf16>
    %cst_81 = arith.constant dense<0.000000e+00> : vector<8x8xf32>
    %128 = tpu.matmul %127, %113, %cst_81 {dimension_numbers = #tpu.dot_dimension_numbers<[1], [0], [0], [1], [0, 0, 1, 1], [], []>} : vector<8x8xbf16>, vector<8x8xbf16>, vector<8x8xf32> -> vector<8x8xf32>
    %129 = arith.truncf %128 : vector<8x8xf32> to vector<8x8xbf16>
    %c0_82 = arith.constant 0 : index
    %c0_83 = arith.constant 0 : index
    %c16 = arith.constant 16 : index
    %130 = vector.load %arg9[%c0_82, %c0_83, %c16] : memref<1x8x32xbf16, #tpu.memory_space<vmem>>, vector<1x8x8xbf16>
    %131 = vector.shape_cast %130 : vector<1x8x8xbf16> to vector<8x8xbf16>
    %132 = vector.shape_cast %129 : vector<8x8xbf16> to vector<1x8x8xbf16>
    tpu.vector_store %arg9[%c0_82, %c0_83, %c16], %132 {strides = array<i32>} : memref<1x8x32xbf16, #tpu.memory_space<vmem>>, vector<1x8x8xbf16>,
    %c3 = arith.constant 3 : index
    %c0_84 = arith.constant 0 : index
    %c0_85 = arith.constant 0 : index
    %133 = vector.load %arg2[%c3, %c0_84, %c0_85] : memref<4x32x8xbf16, #tpu.memory_space<vmem>>, vector<1x32x8xbf16>
    %134 = vector.shape_cast %133 : vector<1x32x8xbf16> to vector<32x8xbf16>
    %cst_86 = arith.constant dense<0.000000e+00> : vector<8x8xf32>
    %135 = tpu.matmul %1, %134, %cst_86 {dimension_numbers = #tpu.dot_dimension_numbers<[1], [0], [0], [1], [0, 0, 1, 1], [], []>} : vector<8x32xbf16>, vector<32x8xbf16>, vector<8x8xf32> -> vector<8x8xf32>
    %c3_87 = arith.constant 3 : index
    %c0_88 = arith.constant 0 : index
    %c0_89 = arith.constant 0 : index
    %136 = vector.load %arg5[%c3_87, %c0_88, %c0_89] : memref<4x1x8xf32, #tpu.memory_space<vmem>>, vector<1x1x8xf32>
    %137 = vector.shape_cast %136 : vector<1x1x8xf32> to vector<1x8xf32>
    %138 = vector.broadcast %137 : vector<1x8xf32> to vector<8x8xf32>
    %139 = arith.addf %135, %138 : vector<8x8xf32>
    %140 = arith.truncf %139 : vector<8x8xf32> to vector<8x8xbf16>
    %c3_90 = arith.constant 3 : index
    %c0_91 = arith.constant 0 : index
    %c0_92 = arith.constant 0 : index
    %141 = vector.load %arg3[%c3_90, %c0_91, %c0_92] : memref<4x32x8xbf16, #tpu.memory_space<vmem>>, vector<1x32x8xbf16>
    %142 = vector.shape_cast %141 : vector<1x32x8xbf16> to vector<32x8xbf16>
    %cst_93 = arith.constant dense<0.000000e+00> : vector<8x8xf32>
    %143 = tpu.matmul %1, %142, %cst_93 {dimension_numbers = #tpu.dot_dimension_numbers<[1], [0], [0], [1], [0, 0, 1, 1], [], []>} : vector<8x32xbf16>, vector<32x8xbf16>, vector<8x8xf32> -> vector<8x8xf32>
    %c3_94 = arith.constant 3 : index
    %c0_95 = arith.constant 0 : index
    %c0_96 = arith.constant 0 : index
    %144 = vector.load %arg6[%c3_94, %c0_95, %c0_96] : memref<4x1x8xf32, #tpu.memory_space<vmem>>, vector<1x1x8xf32>
    %145 = vector.shape_cast %144 : vector<1x1x8xf32> to vector<1x8xf32>
    %146 = vector.broadcast %145 : vector<1x8xf32> to vector<8x8xf32>
    %147 = arith.addf %143, %146 : vector<8x8xf32>
    %148 = arith.truncf %147 : vector<8x8xf32> to vector<8x8xbf16>
    %c3_97 = arith.constant 3 : index
    %c0_98 = arith.constant 0 : index
    %c0_99 = arith.constant 0 : index
    %149 = vector.load %arg4[%c3_97, %c0_98, %c0_99] : memref<4x32x8xbf16, #tpu.memory_space<vmem>>, vector<1x32x8xbf16>
    %150 = vector.shape_cast %149 : vector<1x32x8xbf16> to vector<32x8xbf16>
    %cst_100 = arith.constant dense<0.000000e+00> : vector<8x8xf32>
    %151 = tpu.matmul %1, %150, %cst_100 {dimension_numbers = #tpu.dot_dimension_numbers<[1], [0], [0], [1], [0, 0, 1, 1], [], []>} : vector<8x32xbf16>, vector<32x8xbf16>, vector<8x8xf32> -> vector<8x8xf32>
    %c3_101 = arith.constant 3 : index
    %c0_102 = arith.constant 0 : index
    %c0_103 = arith.constant 0 : index
    %152 = vector.load %arg7[%c3_101, %c0_102, %c0_103] : memref<4x1x8xf32, #tpu.memory_space<vmem>>, vector<1x1x8xf32>
    %153 = vector.shape_cast %152 : vector<1x1x8xf32> to vector<1x8xf32>
    %154 = vector.broadcast %153 : vector<1x8xf32> to vector<8x8xf32>
    %155 = arith.addf %151, %154 : vector<8x8xf32>
    %156 = arith.truncf %155 : vector<8x8xf32> to vector<8x8xbf16>
    %cst_104 = arith.constant dense<0.000000e+00> : vector<8x8xf32>
    %157 = tpu.matmul %140, %148, %cst_104 {dimension_numbers = #tpu.dot_dimension_numbers<[1], [1], [0], [0], [0, 0, 1, 0], [], []>} : vector<8x8xbf16>, vector<8x8xbf16>, vector<8x8xf32> -> vector<8x8xf32>
    %158 = vector.broadcast %3 : vector<1x8xf32> to vector<8x8xf32>
    %159 = arith.addf %157, %158 : vector<8x8xf32>
    %cst_105 = arith.constant dense<0xFF800000> : vector<8xf32>
    %160 = vector.multi_reduction <maximumf>, %159, %cst_105 [1] : vector<8x8xf32> to vector<8xf32>
    %161 = vector.shape_cast %160 : vector<8xf32> to vector<8x1xf32>
    %162 = vector.broadcast %161 : vector<8x1xf32> to vector<8x8xf32>
    %163 = arith.subf %159, %162 : vector<8x8xf32>
    %164 = math.exp %163 : vector<8x8xf32>
    %cst_106 = arith.constant dense<0.000000e+00> : vector<8xf32>
    %165 = vector.multi_reduction <add>, %164, %cst_106 [1] : vector<8x8xf32> to vector<8xf32>
    %166 = vector.shape_cast %165 : vector<8xf32> to vector<8x1xf32>
    %167 = tpu.reciprocal %166 {approx = true} : vector<8x1xf32> -> vector<8x1xf32>
    %168 = vector.broadcast %167 : vector<8x1xf32> to vector<8x8xf32>
    %169 = arith.mulf %164, %168 : vector<8x8xf32>
    %170 = arith.truncf %169 : vector<8x8xf32> to vector<8x8xbf16>
    %cst_107 = arith.constant dense<0.000000e+00> : vector<8x8xf32>
    %171 = tpu.matmul %170, %156, %cst_107 {dimension_numbers = #tpu.dot_dimension_numbers<[1], [0], [0], [1], [0, 0, 1, 1], [], []>} : vector<8x8xbf16>, vector<8x8xbf16>, vector<8x8xf32> -> vector<8x8xf32>
    %172 = arith.truncf %171 : vector<8x8xf32> to vector<8x8xbf16>
    %c0_108 = arith.constant 0 : index
    %c0_109 = arith.constant 0 : index
    %c24 = arith.constant 24 : index
    %173 = vector.load %arg9[%c0_108, %c0_109, %c24] : memref<1x8x32xbf16, #tpu.memory_space<vmem>>, vector<1x8x8xbf16>
    %174 = vector.shape_cast %173 : vector<1x8x8xbf16> to vector<8x8xbf16>
    %175 = vector.shape_cast %172 : vector<8x8xbf16> to vector<1x8x8xbf16>
    tpu.vector_store %arg9[%c0_108, %c0_109, %c24], %175 {strides = array<i32>} : memref<1x8x32xbf16, #tpu.memory_space<vmem>>, vector<1x8x8xbf16>,
    return
  }
  func.func @transform_0(%arg0: i32) -> (i32, i32, i32) {
    %c0_i32 = arith.constant 0 : i32
    %c0_i32_0 = arith.constant 0 : i32
    %c0_i32_1 = arith.constant 0 : i32
    return %arg0, %c0_i32, %c0_i32_0 : i32, i32, i32
  }
  func.func @transform_1(%arg0: i32) -> (i32, i32, i32) {
    %c0_i32 = arith.constant 0 : i32
    %c0_i32_0 = arith.constant 0 : i32
    %c0_i32_1 = arith.constant 0 : i32
    %c0_i32_2 = arith.constant 0 : i32
    return %c0_i32, %c0_i32_0, %c0_i32_1 : i32, i32, i32
  }
  func.func @transform_2(%arg0: i32) -> (i32, i32, i32) {
    %c0_i32 = arith.constant 0 : i32
    %c0_i32_0 = arith.constant 0 : i32
    %c0_i32_1 = arith.constant 0 : i32
    %c0_i32_2 = arith.constant 0 : i32
    return %c0_i32, %c0_i32_0, %c0_i32_1 : i32, i32, i32
  }
  func.func @transform_3(%arg0: i32) -> (i32, i32, i32) {
    %c0_i32 = arith.constant 0 : i32
    %c0_i32_0 = arith.constant 0 : i32
    %c0_i32_1 = arith.constant 0 : i32
    %c0_i32_2 = arith.constant 0 : i32
    return %c0_i32, %c0_i32_0, %c0_i32_1 : i32, i32, i32
  }
  func.func @transform_4(%arg0: i32) -> (i32, i32, i32) {
    %c0_i32 = arith.constant 0 : i32
    %c0_i32_0 = arith.constant 0 : i32
    %c0_i32_1 = arith.constant 0 : i32
    %c0_i32_2 = arith.constant 0 : i32
    return %c0_i32, %c0_i32_0, %c0_i32_1 : i32, i32, i32
  }
  func.func @transform_5(%arg0: i32) -> (i32, i32, i32) {
    %c0_i32 = arith.constant 0 : i32
    %c0_i32_0 = arith.constant 0 : i32
    %c0_i32_1 = arith.constant 0 : i32
    %c0_i32_2 = arith.constant 0 : i32
    return %c0_i32, %c0_i32_0, %c0_i32_1 : i32, i32, i32
  }
  func.func @transform_6(%arg0: i32) -> (i32, i32, i32) {
    %c0_i32 = arith.constant 0 : i32
    %c0_i32_0 = arith.constant 0 : i32
    %c0_i32_1 = arith.constant 0 : i32
    %c0_i32_2 = arith.constant 0 : i32
    return %c0_i32, %c0_i32_0, %c0_i32_1 : i32, i32, i32
  }
  func.func @transform_7(%arg0: i32) -> (i32, i32, i32) {
    %c0_i32 = arith.constant 0 : i32
    %c0_i32_0 = arith.constant 0 : i32
    %c0_i32_1 = arith.constant 0 : i32
    return %arg0, %c0_i32, %c0_i32_0 : i32, i32, i32
  }
  func.func @transform_8(%arg0: i32) -> (i32, i32, i32) {
    %c0_i32 = arith.constant 0 : i32
    %c0_i32_0 = arith.constant 0 : i32
    %c0_i32_1 = arith.constant 0 : i32
    return %arg0, %c0_i32, %c0_i32_0 : i32, i32, i32
  }
}

module attributes {stable_mosaic.version = 11 : i64} {
  func.func @_dense_res_ln_kernel(%arg0: i32, %arg1: memref<16x32xbf16, #tpu.memory_space<vmem>>, %arg2: memref<32x32xbf16, #tpu.memory_space<vmem>>, %arg3: memref<1x32xf32, #tpu.memory_space<vmem>>, %arg4: memref<16x32xbf16, #tpu.memory_space<vmem>>, %arg5: memref<1x32xf32, #tpu.memory_space<vmem>>, %arg6: memref<1x32xf32, #tpu.memory_space<vmem>>, %arg7: memref<16x32xbf16, #tpu.memory_space<vmem>>) attributes {dimension_semantics = [#tpu.dimension_semantics<parallel>], iteration_bounds = array<i64: 1>, scalar_prefetch = 0 : i64, scratch_operands = 0 : i64, tpu.core_type = #tpu.core_type<tc>, window_params = [{transform_indices = @transform_0, window_bounds = array<i64: 16, 32>}, {pipeline_mode = #tpu.pipeline_mode<synchronous>, transform_indices = @transform_1, window_bounds = array<i64: 32, 32>}, {pipeline_mode = #tpu.pipeline_mode<synchronous>, transform_indices = @transform_2, window_bounds = array<i64: 1, 32>}, {transform_indices = @transform_3, window_bounds = array<i64: 16, 32>}, {pipeline_mode = #tpu.pipeline_mode<synchronous>, transform_indices = @transform_4, window_bounds = array<i64: 1, 32>}, {pipeline_mode = #tpu.pipeline_mode<synchronous>, transform_indices = @transform_5, window_bounds = array<i64: 1, 32>}, {transform_indices = @transform_6, window_bounds = array<i64: 16, 32>}]} {
    %c0 = arith.constant 0 : index
    %c0_0 = arith.constant 0 : index
    %0 = vector.load %arg1[%c0, %c0_0] : memref<16x32xbf16, #tpu.memory_space<vmem>>, vector<16x32xbf16>
    %c0_1 = arith.constant 0 : index
    %c0_2 = arith.constant 0 : index
    %1 = vector.load %arg2[%c0_1, %c0_2] : memref<32x32xbf16, #tpu.memory_space<vmem>>, vector<32x32xbf16>
    %cst = arith.constant dense<0.000000e+00> : vector<16x32xf32>
    %2 = tpu.matmul %0, %1, %cst {dimension_numbers = #tpu.dot_dimension_numbers<[1], [0], [0], [1], [0, 0, 1, 1], [], []>} : vector<16x32xbf16>, vector<32x32xbf16>, vector<16x32xf32> -> vector<16x32xf32>
    %c0_3 = arith.constant 0 : index
    %c0_4 = arith.constant 0 : index
    %3 = vector.load %arg3[%c0_3, %c0_4] : memref<1x32xf32, #tpu.memory_space<vmem>>, vector<1x32xf32>
    %4 = vector.broadcast %3 : vector<1x32xf32> to vector<16x32xf32>
    %5 = arith.addf %2, %4 : vector<16x32xf32>
    %c0_5 = arith.constant 0 : index
    %c0_6 = arith.constant 0 : index
    %6 = vector.load %arg4[%c0_5, %c0_6] : memref<16x32xbf16, #tpu.memory_space<vmem>>, vector<16x32xbf16>
    %7 = arith.extf %6 : vector<16x32xbf16> to vector<16x32xf32>
    %8 = arith.addf %5, %7 : vector<16x32xf32>
    %cst_7 = arith.constant dense<0.000000e+00> : vector<16xf32>
    %9 = vector.multi_reduction <add>, %8, %cst_7 [1] : vector<16x32xf32> to vector<16xf32>
    %10 = vector.shape_cast %9 : vector<16xf32> to vector<16x1xf32>
    %cst_8 = arith.constant 3.200000e+01 : f32
    %11 = vector.broadcast %cst_8 : f32 to vector<16x1xf32>
    %12 = arith.divf %10, %11 : vector<16x1xf32>
    %13 = vector.broadcast %12 : vector<16x1xf32> to vector<16x32xf32>
    %14 = arith.subf %8, %13 : vector<16x32xf32>
    %15 = arith.mulf %14, %14 : vector<16x32xf32>
    %cst_9 = arith.constant dense<0.000000e+00> : vector<16xf32>
    %16 = vector.multi_reduction <add>, %15, %cst_9 [1] : vector<16x32xf32> to vector<16xf32>
    %17 = vector.shape_cast %16 : vector<16xf32> to vector<16x1xf32>
    %cst_10 = arith.constant 3.200000e+01 : f32
    %18 = vector.broadcast %cst_10 : f32 to vector<16x1xf32>
    %19 = arith.divf %17, %18 : vector<16x1xf32>
    %cst_11 = arith.constant 9.99999996E-13 : f32
    %20 = vector.broadcast %cst_11 : f32 to vector<16x1xf32>
    %21 = arith.addf %19, %20 : vector<16x1xf32>
    %22 = math.rsqrt %21 : vector<16x1xf32>
    %23 = vector.broadcast %22 : vector<16x1xf32> to vector<16x32xf32>
    %24 = arith.mulf %14, %23 : vector<16x32xf32>
    %c0_12 = arith.constant 0 : index
    %c0_13 = arith.constant 0 : index
    %25 = vector.load %arg5[%c0_12, %c0_13] : memref<1x32xf32, #tpu.memory_space<vmem>>, vector<1x32xf32>
    %26 = vector.broadcast %25 : vector<1x32xf32> to vector<16x32xf32>
    %27 = arith.mulf %24, %26 : vector<16x32xf32>
    %c0_14 = arith.constant 0 : index
    %c0_15 = arith.constant 0 : index
    %28 = vector.load %arg6[%c0_14, %c0_15] : memref<1x32xf32, #tpu.memory_space<vmem>>, vector<1x32xf32>
    %29 = vector.broadcast %28 : vector<1x32xf32> to vector<16x32xf32>
    %30 = arith.addf %27, %29 : vector<16x32xf32>
    %31 = arith.truncf %30 : vector<16x32xf32> to vector<16x32xbf16>
    %c0_16 = arith.constant 0 : index
    %c0_17 = arith.constant 0 : index
    %32 = vector.load %arg7[%c0_16, %c0_17] : memref<16x32xbf16, #tpu.memory_space<vmem>>, vector<16x32xbf16>
    tpu.vector_store %arg7[%c0_16, %c0_17], %31 {strides = array<i32>} : memref<16x32xbf16, #tpu.memory_space<vmem>>, vector<16x32xbf16>,
    return
  }
  func.func @transform_0(%arg0: i32) -> (i32, i32) {
    %c0_i32 = arith.constant 0 : i32
    %c0_i32_0 = arith.constant 0 : i32
    return %arg0, %c0_i32 : i32, i32
  }
  func.func @transform_1(%arg0: i32) -> (i32, i32) {
    %c0_i32 = arith.constant 0 : i32
    %c0_i32_0 = arith.constant 0 : i32
    %c0_i32_1 = arith.constant 0 : i32
    return %c0_i32, %c0_i32_0 : i32, i32
  }
  func.func @transform_2(%arg0: i32) -> (i32, i32) {
    %c0_i32 = arith.constant 0 : i32
    %c0_i32_0 = arith.constant 0 : i32
    %c0_i32_1 = arith.constant 0 : i32
    return %c0_i32, %c0_i32_0 : i32, i32
  }
  func.func @transform_3(%arg0: i32) -> (i32, i32) {
    %c0_i32 = arith.constant 0 : i32
    %c0_i32_0 = arith.constant 0 : i32
    return %arg0, %c0_i32 : i32, i32
  }
  func.func @transform_4(%arg0: i32) -> (i32, i32) {
    %c0_i32 = arith.constant 0 : i32
    %c0_i32_0 = arith.constant 0 : i32
    %c0_i32_1 = arith.constant 0 : i32
    return %c0_i32, %c0_i32_0 : i32, i32
  }
  func.func @transform_5(%arg0: i32) -> (i32, i32) {
    %c0_i32 = arith.constant 0 : i32
    %c0_i32_0 = arith.constant 0 : i32
    %c0_i32_1 = arith.constant 0 : i32
    return %c0_i32, %c0_i32_0 : i32, i32
  }
  func.func @transform_6(%arg0: i32) -> (i32, i32) {
    %c0_i32 = arith.constant 0 : i32
    %c0_i32_0 = arith.constant 0 : i32
    return %arg0, %c0_i32 : i32, i32
  }
}

module attributes {stable_mosaic.version = 11 : i64} {
  func.func @_dense_kernel(%arg0: i32, %arg1: i32, %arg2: memref<16x32xbf16, #tpu.memory_space<vmem>>, %arg3: memref<32x64xbf16, #tpu.memory_space<vmem>>, %arg4: memref<1x64xf32, #tpu.memory_space<vmem>>, %arg5: memref<16x64xbf16, #tpu.memory_space<vmem>>) attributes {dimension_semantics = [#tpu.dimension_semantics<parallel>, #tpu.dimension_semantics<parallel>], iteration_bounds = array<i64: 1, 1>, scalar_prefetch = 0 : i64, scratch_operands = 0 : i64, tpu.core_type = #tpu.core_type<tc>, window_params = [{transform_indices = @transform_0, window_bounds = array<i64: 16, 32>}, {transform_indices = @transform_1, window_bounds = array<i64: 32, 64>}, {transform_indices = @transform_2, window_bounds = array<i64: 1, 64>}, {transform_indices = @transform_3, window_bounds = array<i64: 16, 64>}]} {
    %c0 = arith.constant 0 : index
    %c0_0 = arith.constant 0 : index
    %0 = vector.load %arg2[%c0, %c0_0] : memref<16x32xbf16, #tpu.memory_space<vmem>>, vector<16x32xbf16>
    %c0_1 = arith.constant 0 : index
    %c0_2 = arith.constant 0 : index
    %1 = vector.load %arg3[%c0_1, %c0_2] : memref<32x64xbf16, #tpu.memory_space<vmem>>, vector<32x64xbf16>
    %cst = arith.constant dense<0.000000e+00> : vector<16x64xf32>
    %2 = tpu.matmul %0, %1, %cst {dimension_numbers = #tpu.dot_dimension_numbers<[1], [0], [0], [1], [0, 0, 1, 1], [], []>} : vector<16x32xbf16>, vector<32x64xbf16>, vector<16x64xf32> -> vector<16x64xf32>
    %c0_3 = arith.constant 0 : index
    %c0_4 = arith.constant 0 : index
    %3 = vector.load %arg4[%c0_3, %c0_4] : memref<1x64xf32, #tpu.memory_space<vmem>>, vector<1x64xf32>
    %4 = vector.broadcast %3 : vector<1x64xf32> to vector<16x64xf32>
    %5 = arith.addf %2, %4 : vector<16x64xf32>
    %cst_5 = arith.constant 5.000000e-01 : f32
    %6 = vector.broadcast %cst_5 : f32 to vector<16x64xf32>
    %7 = arith.mulf %6, %5 : vector<16x64xf32>
    %cst_6 = arith.constant 0.707106769 : f32
    %8 = vector.broadcast %cst_6 : f32 to vector<16x64xf32>
    %9 = arith.mulf %5, %8 : vector<16x64xf32>
    %10 = math.erf %9 : vector<16x64xf32>
    %cst_7 = arith.constant 1.000000e+00 : f32
    %11 = vector.broadcast %cst_7 : f32 to vector<16x64xf32>
    %12 = arith.addf %11, %10 : vector<16x64xf32>
    %13 = arith.mulf %7, %12 : vector<16x64xf32>
    %14 = arith.truncf %13 : vector<16x64xf32> to vector<16x64xbf16>
    %c0_8 = arith.constant 0 : index
    %c0_9 = arith.constant 0 : index
    %15 = vector.load %arg5[%c0_8, %c0_9] : memref<16x64xbf16, #tpu.memory_space<vmem>>, vector<16x64xbf16>
    tpu.vector_store %arg5[%c0_8, %c0_9], %14 {strides = array<i32>} : memref<16x64xbf16, #tpu.memory_space<vmem>>, vector<16x64xbf16>,
    return
  }
  func.func @transform_0(%arg0: i32, %arg1: i32) -> (i32, i32) {
    %c0_i32 = arith.constant 0 : i32
    %c0_i32_0 = arith.constant 0 : i32
    return %arg1, %c0_i32 : i32, i32
  }
  func.func @transform_1(%arg0: i32, %arg1: i32) -> (i32, i32) {
    %c0_i32 = arith.constant 0 : i32
    %c0_i32_0 = arith.constant 0 : i32
    return %c0_i32, %arg0 : i32, i32
  }
  func.func @transform_2(%arg0: i32, %arg1: i32) -> (i32, i32) {
    %c0_i32 = arith.constant 0 : i32
    %c0_i32_0 = arith.constant 0 : i32
    return %c0_i32, %arg0 : i32, i32
  }
  func.func @transform_3(%arg0: i32, %arg1: i32) -> (i32, i32) {
    %c0_i32 = arith.constant 0 : i32
    return %arg1, %arg0 : i32, i32
  }
}

module attributes {stable_mosaic.version = 11 : i64} {
  func.func @_dense_kernel(%arg0: i32, %arg1: i32, %arg2: memref<2x32xbf16, #tpu.memory_space<vmem>>, %arg3: memref<32x32xbf16, #tpu.memory_space<vmem>>, %arg4: memref<1x32xf32, #tpu.memory_space<vmem>>, %arg5: memref<2x32xf32, #tpu.memory_space<vmem>>) attributes {dimension_semantics = [#tpu.dimension_semantics<parallel>, #tpu.dimension_semantics<parallel>], iteration_bounds = array<i64: 1, 1>, scalar_prefetch = 0 : i64, scratch_operands = 0 : i64, tpu.core_type = #tpu.core_type<tc>, window_params = [{transform_indices = @transform_0, window_bounds = array<i64: 2, 32>}, {transform_indices = @transform_1, window_bounds = array<i64: 32, 32>}, {transform_indices = @transform_2, window_bounds = array<i64: 1, 32>}, {transform_indices = @transform_3, window_bounds = array<i64: 2, 32>}]} {
    %c0 = arith.constant 0 : index
    %c0_0 = arith.constant 0 : index
    %0 = vector.load %arg2[%c0, %c0_0] : memref<2x32xbf16, #tpu.memory_space<vmem>>, vector<2x32xbf16>
    %c0_1 = arith.constant 0 : index
    %c0_2 = arith.constant 0 : index
    %1 = vector.load %arg3[%c0_1, %c0_2] : memref<32x32xbf16, #tpu.memory_space<vmem>>, vector<32x32xbf16>
    %cst = arith.constant dense<0.000000e+00> : vector<2x32xf32>
    %2 = tpu.matmul %0, %1, %cst {dimension_numbers = #tpu.dot_dimension_numbers<[1], [0], [0], [1], [0, 0, 1, 1], [], []>} : vector<2x32xbf16>, vector<32x32xbf16>, vector<2x32xf32> -> vector<2x32xf32>
    %c0_3 = arith.constant 0 : index
    %c0_4 = arith.constant 0 : index
    %3 = vector.load %arg4[%c0_3, %c0_4] : memref<1x32xf32, #tpu.memory_space<vmem>>, vector<1x32xf32>
    %4 = vector.broadcast %3 : vector<1x32xf32> to vector<2x32xf32>
    %5 = arith.addf %2, %4 : vector<2x32xf32>
    %6 = math.tanh %5 : vector<2x32xf32>
    %c0_5 = arith.constant 0 : index
    %c0_6 = arith.constant 0 : index
    %7 = vector.load %arg5[%c0_5, %c0_6] : memref<2x32xf32, #tpu.memory_space<vmem>>, vector<2x32xf32>
    tpu.vector_store %arg5[%c0_5, %c0_6], %6 {strides = array<i32>} : memref<2x32xf32, #tpu.memory_space<vmem>>, vector<2x32xf32>,
    return
  }
  func.func @transform_0(%arg0: i32, %arg1: i32) -> (i32, i32) {
    %c0_i32 = arith.constant 0 : i32
    %c0_i32_0 = arith.constant 0 : i32
    return %arg1, %c0_i32 : i32, i32
  }
  func.func @transform_1(%arg0: i32, %arg1: i32) -> (i32, i32) {
    %c0_i32 = arith.constant 0 : i32
    %c0_i32_0 = arith.constant 0 : i32
    return %c0_i32, %arg0 : i32, i32
  }
  func.func @transform_2(%arg0: i32, %arg1: i32) -> (i32, i32) {
    %c0_i32 = arith.constant 0 : i32
    %c0_i32_0 = arith.constant 0 : i32
    return %c0_i32, %arg0 : i32, i32
  }
  func.func @transform_3(%arg0: i32, %arg1: i32) -> (i32, i32) {
    %c0_i32 = arith.constant 0 : i32
    return %arg1, %arg0 : i32, i32
  }
}

module attributes {stable_mosaic.version = 11 : i64} {
  func.func @_dense_res_ln_kernel(%arg0: i32, %arg1: memref<16x64xbf16, #tpu.memory_space<vmem>>, %arg2: memref<64x32xbf16, #tpu.memory_space<vmem>>, %arg3: memref<1x32xf32, #tpu.memory_space<vmem>>, %arg4: memref<16x32xbf16, #tpu.memory_space<vmem>>, %arg5: memref<1x32xf32, #tpu.memory_space<vmem>>, %arg6: memref<1x32xf32, #tpu.memory_space<vmem>>, %arg7: memref<16x32xbf16, #tpu.memory_space<vmem>>) attributes {dimension_semantics = [#tpu.dimension_semantics<parallel>], iteration_bounds = array<i64: 1>, scalar_prefetch = 0 : i64, scratch_operands = 0 : i64, tpu.core_type = #tpu.core_type<tc>, window_params = [{transform_indices = @transform_0, window_bounds = array<i64: 16, 64>}, {pipeline_mode = #tpu.pipeline_mode<synchronous>, transform_indices = @transform_1, window_bounds = array<i64: 64, 32>}, {pipeline_mode = #tpu.pipeline_mode<synchronous>, transform_indices = @transform_2, window_bounds = array<i64: 1, 32>}, {transform_indices = @transform_3, window_bounds = array<i64: 16, 32>}, {pipeline_mode = #tpu.pipeline_mode<synchronous>, transform_indices = @transform_4, window_bounds = array<i64: 1, 32>}, {pipeline_mode = #tpu.pipeline_mode<synchronous>, transform_indices = @transform_5, window_bounds = array<i64: 1, 32>}, {transform_indices = @transform_6, window_bounds = array<i64: 16, 32>}]} {
    %c0 = arith.constant 0 : index
    %c0_0 = arith.constant 0 : index
    %0 = vector.load %arg1[%c0, %c0_0] : memref<16x64xbf16, #tpu.memory_space<vmem>>, vector<16x64xbf16>
    %c0_1 = arith.constant 0 : index
    %c0_2 = arith.constant 0 : index
    %1 = vector.load %arg2[%c0_1, %c0_2] : memref<64x32xbf16, #tpu.memory_space<vmem>>, vector<64x32xbf16>
    %cst = arith.constant dense<0.000000e+00> : vector<16x32xf32>
    %2 = tpu.matmul %0, %1, %cst {dimension_numbers = #tpu.dot_dimension_numbers<[1], [0], [0], [1], [0, 0, 1, 1], [], []>} : vector<16x64xbf16>, vector<64x32xbf16>, vector<16x32xf32> -> vector<16x32xf32>
    %c0_3 = arith.constant 0 : index
    %c0_4 = arith.constant 0 : index
    %3 = vector.load %arg3[%c0_3, %c0_4] : memref<1x32xf32, #tpu.memory_space<vmem>>, vector<1x32xf32>
    %4 = vector.broadcast %3 : vector<1x32xf32> to vector<16x32xf32>
    %5 = arith.addf %2, %4 : vector<16x32xf32>
    %c0_5 = arith.constant 0 : index
    %c0_6 = arith.constant 0 : index
    %6 = vector.load %arg4[%c0_5, %c0_6] : memref<16x32xbf16, #tpu.memory_space<vmem>>, vector<16x32xbf16>
    %7 = arith.extf %6 : vector<16x32xbf16> to vector<16x32xf32>
    %8 = arith.addf %5, %7 : vector<16x32xf32>
    %cst_7 = arith.constant dense<0.000000e+00> : vector<16xf32>
    %9 = vector.multi_reduction <add>, %8, %cst_7 [1] : vector<16x32xf32> to vector<16xf32>
    %10 = vector.shape_cast %9 : vector<16xf32> to vector<16x1xf32>
    %cst_8 = arith.constant 3.200000e+01 : f32
    %11 = vector.broadcast %cst_8 : f32 to vector<16x1xf32>
    %12 = arith.divf %10, %11 : vector<16x1xf32>
    %13 = vector.broadcast %12 : vector<16x1xf32> to vector<16x32xf32>
    %14 = arith.subf %8, %13 : vector<16x32xf32>
    %15 = arith.mulf %14, %14 : vector<16x32xf32>
    %cst_9 = arith.constant dense<0.000000e+00> : vector<16xf32>
    %16 = vector.multi_reduction <add>, %15, %cst_9 [1] : vector<16x32xf32> to vector<16xf32>
    %17 = vector.shape_cast %16 : vector<16xf32> to vector<16x1xf32>
    %cst_10 = arith.constant 3.200000e+01 : f32
    %18 = vector.broadcast %cst_10 : f32 to vector<16x1xf32>
    %19 = arith.divf %17, %18 : vector<16x1xf32>
    %cst_11 = arith.constant 9.99999996E-13 : f32
    %20 = vector.broadcast %cst_11 : f32 to vector<16x1xf32>
    %21 = arith.addf %19, %20 : vector<16x1xf32>
    %22 = math.rsqrt %21 : vector<16x1xf32>
    %23 = vector.broadcast %22 : vector<16x1xf32> to vector<16x32xf32>
    %24 = arith.mulf %14, %23 : vector<16x32xf32>
    %c0_12 = arith.constant 0 : index
    %c0_13 = arith.constant 0 : index
    %25 = vector.load %arg5[%c0_12, %c0_13] : memref<1x32xf32, #tpu.memory_space<vmem>>, vector<1x32xf32>
    %26 = vector.broadcast %25 : vector<1x32xf32> to vector<16x32xf32>
    %27 = arith.mulf %24, %26 : vector<16x32xf32>
    %c0_14 = arith.constant 0 : index
    %c0_15 = arith.constant 0 : index
    %28 = vector.load %arg6[%c0_14, %c0_15] : memref<1x32xf32, #tpu.memory_space<vmem>>, vector<1x32xf32>
    %29 = vector.broadcast %28 : vector<1x32xf32> to vector<16x32xf32>
    %30 = arith.addf %27, %29 : vector<16x32xf32>
    %31 = arith.truncf %30 : vector<16x32xf32> to vector<16x32xbf16>
    %c0_16 = arith.constant 0 : index
    %c0_17 = arith.constant 0 : index
    %32 = vector.load %arg7[%c0_16, %c0_17] : memref<16x32xbf16, #tpu.memory_space<vmem>>, vector<16x32xbf16>
    tpu.vector_store %arg7[%c0_16, %c0_17], %31 {strides = array<i32>} : memref<16x32xbf16, #tpu.memory_space<vmem>>, vector<16x32xbf16>,
    return
  }
  func.func @transform_0(%arg0: i32) -> (i32, i32) {
    %c0_i32 = arith.constant 0 : i32
    %c0_i32_0 = arith.constant 0 : i32
    return %arg0, %c0_i32 : i32, i32
  }
  func.func @transform_1(%arg0: i32) -> (i32, i32) {
    %c0_i32 = arith.constant 0 : i32
    %c0_i32_0 = arith.constant 0 : i32
    %c0_i32_1 = arith.constant 0 : i32
    return %c0_i32, %c0_i32_0 : i32, i32
  }
  func.func @transform_2(%arg0: i32) -> (i32, i32) {
    %c0_i32 = arith.constant 0 : i32
    %c0_i32_0 = arith.constant 0 : i32
    %c0_i32_1 = arith.constant 0 : i32
    return %c0_i32, %c0_i32_0 : i32, i32
  }
  func.func @transform_3(%arg0: i32) -> (i32, i32) {
    %c0_i32 = arith.constant 0 : i32
    %c0_i32_0 = arith.constant 0 : i32
    return %arg0, %c0_i32 : i32, i32
  }
  func.func @transform_4(%arg0: i32) -> (i32, i32) {
    %c0_i32 = arith.constant 0 : i32
    %c0_i32_0 = arith.constant 0 : i32
    %c0_i32_1 = arith.constant 0 : i32
    return %c0_i32, %c0_i32_0 : i32, i32
  }
  func.func @transform_5(%arg0: i32) -> (i32, i32) {
    %c0_i32 = arith.constant 0 : i32
    %c0_i32_0 = arith.constant 0 : i32
    %c0_i32_1 = arith.constant 0 : i32
    return %c0_i32, %c0_i32_0 : i32, i32
  }
  func.func @transform_6(%arg0: i32) -> (i32, i32) {
    %c0_i32 = arith.constant 0 : i32
    %c0_i32_0 = arith.constant 0 : i32
    return %arg0, %c0_i32 : i32, i32
  }
}

</mosaic_0001>

<llo_original>
// kernel: bert_forward.10
$region0: #{bert_forward.10}
  #allocation0 [shape = 'u32[]', space=smem, size = 0x4, offset = 0x4, fixed_abs, tag = 'smem constant byte address 0x4 - core index']
  #allocation1 [shape = 'u32[144,128]{1,0:T(1,128)}', space=vmem, size = 0x12000, scoped, tag = 'internal scratch']
  %s0 = inlined_call_operand.vmem [shape: f32[16,32], index: 0, kind: input, shape index: {}]
  %s1 = inlined_call_operand.vmem [shape: f32[1,32], index: 1, kind: input, shape index: {}]
  %s2 = inlined_call_operand.vmem [shape: f32[1,32], index: 2, kind: input, shape index: {}]
  %s3 = inlined_call_operand.vmem [shape: bf16[16,32], index: 3, kind: output, shape index: {}]
  %s4 = sld [smem:[#allocation0]]
  $region22: #{bert_forward.10} parent=0
    _
  %s6 = ssub.s32 1, %s4
  %s7 = scalar_select 0, %s6, %s4
  // Predicated region
  $region2: #{bert_forward.10} parent=0 // pred_check
    _
  $region3: #{bert_forward.10} parent=0 // pred_check_branch
    %9 = sbr.rel (0) target = $region5
  $region4: #{bert_forward.10} parent=0 // pred_region
    _
  $region5: #{bert_forward.10} parent=0 // pred_fallthru
    _
  // Predicated region
  $region6: #{bert_forward.10} parent=0 // pred_check
    _
  $region7: #{bert_forward.10} parent=0 // pred_check_branch
    %11 = sbr.rel (0) target = $region9
  $region8: #{bert_forward.10} parent=0 // pred_region
    _
  $region9: #{bert_forward.10} parent=0 // pred_fallthru
    _
  // Predicated region
  $region10: #{bert_forward.10} parent=0 // pred_check
    _
  $region11: #{bert_forward.10} parent=0 // pred_check_branch
    %13 = sbr.rel (0) target = $region13
  $region12: #{bert_forward.10} parent=0 // pred_region
    _
  $region13: #{bert_forward.10} parent=0 // pred_fallthru
    _
  %v14 = vld [vmem:[%s0] sm:$0xff]
  %v15 = vld [vmem:[%s0 + $0x8] sm:$0xff]
  %vm16 = vcmask 261120
  %v17 = vsel %vm16, %v14, 0.0
  %18 = vadd.xlane.f32.xlu0 %v17
  %v19 = vpop.xlane.xlu0 %18
  %v20 = vsel %vm16, %v15, 0.0
  %21 = vadd.xlane.f32.xlu0 %v20
  %v22 = vpop.xlane.xlu0 %21
  %v23 = vrcp.pop 32.0
  %v24 = vmul.f32 %v19, %v23
  %v25 = vmul.f32 %v22, %v23
  %v26 = vsub.f32 %v14, %v24
  %v27 = vsub.f32 %v15, %v25
  %v28 = vmul.f32 %v26, %v26
  %v29 = vmul.f32 %v27, %v27
  %v30 = vsel %vm16, %v28, 0.0
  %31 = vadd.xlane.f32.xlu0 %v30
  %v32 = vpop.xlane.xlu0 %31
  %v33 = vsel %vm16, %v29, 0.0
  %34 = vadd.xlane.f32.xlu0 %v33
  %v35 = vpop.xlane.xlu0 %34
  %v36 = vmul.f32 %v32, %v23
  %v37 = vmul.f32 %v35, %v23
  %v38 = vadd.f32 %v36, 1e-12
  %v39 = vadd.f32 %v37, 1e-12
  %v40 = vrsqrt.pop %v38
  %v41 = vrsqrt.pop %v39
  %v42 = vmul.f32 %v26, %v40
  %v43 = vmul.f32 %v27, %v41
  %v44 = vld [vmem:[%s1] sm:$0x1]
  %v46 = vlaneseq
  %v47 = vshrl.u32 %v46, 7
  %v48 = vsub.s32 0, %v47
  %v49 = vrot.slane %v44, %v48
  %v51 = vmul.f32 %v42, %v49
  %v52 = vmul.f32 %v43, %v49
  %v53 = vld [vmem:[%s2] sm:$0x1]
  %v55 = vlaneseq
  %v56 = vshrl.u32 %v55, 7
  %v57 = vsub.s32 0, %v56
  %v58 = vrot.slane %v53, %v57
  %v60 = vadd.f32 %v51, %v58
  %v61 = vadd.f32 %v52, %v58
  %v62 = vpack.c.bf16 %v61, %v60
  %v64 = vunpack.c.l.b16 %v62
  %v65 = vunpack.c.h.b16 %v62
  %v66 = vpack.c.b16 %v64, %v64
  %v67 = vpack.c.b16 %v65, %v65
  %vm70 = vcmask 257024
  %71 = vst.msk [vmem:[%s3] sm:$0xf] %vm70, %v66
  %72 = vst.msk [vmem:[%s3 + $0x4] sm:$0xf] %vm70, %v67
  // Predicated region
  $region14: #{bert_forward.10} parent=0 // pred_check
    _
  $region15: #{bert_forward.10} parent=0 // pred_check_branch
    %74 = sbr.rel (0) target = $region17
  $region16: #{bert_forward.10} parent=0 // pred_region
    _
  $region17: #{bert_forward.10} parent=0 // pred_fallthru
    _
  // Predicated region
  $region18: #{bert_forward.10} parent=0 // pred_check
    _
  $region19: #{bert_forward.10} parent=0 // pred_check_branch
    %76 = sbr.rel (0) target = $region21
  $region20: #{bert_forward.10} parent=0 // pred_region
    _
  $region21: #{bert_forward.10} parent=0 // pred_fallthru
    _

// kernel: bert_forward.13
$region0: #{bert_forward.13}
  #allocation0 [shape = 'u32[]', space=smem, size = 0x4, offset = 0x4, fixed_abs, tag = 'smem constant byte address 0x4 - core index']
  #allocation1 [shape = 'u32[144,128]{1,0:T(1,128)}', space=vmem, size = 0x12000, scoped, tag = 'internal scratch']
  %s0 = inlined_call_operand.vmem [shape: bf16[16,32], index: 0, kind: input, shape index: {}]
  %s1 = inlined_call_operand.vmem [shape: bf16[32,64], index: 1, kind: input, shape index: {}]
  %s2 = inlined_call_operand.vmem [shape: f32[1,64], index: 2, kind: input, shape index: {}]
  %s3 = inlined_call_operand.vmem [shape: bf16[16,64], index: 3, kind: output, shape index: {}]
  %s4 = sld [smem:[#allocation0]]
  $region22: #{bert_forward.13} parent=0
    _
  %s6 = ssub.s32 1, %s4
  %s7 = scalar_select 0, %s6, %s4
  // Predicated region
  $region2: #{bert_forward.13} parent=0 // pred_check
    _
  $region3: #{bert_forward.13} parent=0 // pred_check_branch
    %9 = sbr.rel (0) target = $region5
  $region4: #{bert_forward.13} parent=0 // pred_region
    _
  $region5: #{bert_forward.13} parent=0 // pred_fallthru
    _
  // Predicated region
  $region6: #{bert_forward.13} parent=0 // pred_check
    _
  $region7: #{bert_forward.13} parent=0 // pred_check_branch
    %11 = sbr.rel (0) target = $region9
  $region8: #{bert_forward.13} parent=0 // pred_region
    _
  $region9: #{bert_forward.13} parent=0 // pred_fallthru
    _
  // Predicated region
  $region10: #{bert_forward.13} parent=0 // pred_check
    _
  $region11: #{bert_forward.13} parent=0 // pred_check_branch
    %13 = sbr.rel (0) target = $region13
  $region12: #{bert_forward.13} parent=0 // pred_region
    _
  $region13: #{bert_forward.13} parent=0 // pred_fallthru
    _
  %v15 = vld [vmem:[%s0] sm:$0xf]
  %v16 = vld [vmem:[%s0 + $0x4] sm:$0xf]
  %v17 = vld [vmem:[%s1] sm:$0xf]
  %v18 = vld [vmem:[%s1 + $0x4] sm:$0xf]
  %v19 = vld [vmem:[%s1 + $0x8] sm:$0xf]
  %v20 = vld [vmem:[%s1 + $0xc] sm:$0xf]
  %v21 = vld [vmem:[%s2] sm:$0x1]
  %v23 = vlaneseq
  %v24 = vshrl.u32 %v23, 7
  %v25 = vsub.s32 0, %v24
  %v26 = vrot.slane %v21, %v25
  %v30 = vunpack.c.l.b16 %v15
  %v31 = vunpack.c.l.b16 %v16
  %v32 = vpack.c.b16 %v31, %v30
  %v37 = vunpack.c.l.b16 %v17
  %v38 = vunpack.c.l.b16 %v18
  %v39 = vunpack.c.l.b16 %v19
  %v40 = vunpack.c.l.b16 %v20
  %v41 = vpack.c.b16 %v38, %v37
  %v42 = vpack.c.b16 %v40, %v39
  %vm45 = vcmask 261120
  %v47 = vsel %vm45, %v32, 0
  %49 = vmatprep.subr.bf16.mxu0 0
  %50 = vmatpush1.bf16.msra.mxu0 %v41
  %51 = vmatprep.subr.bf16.mxu0 0
  %52 = vmatpush1.bf16.msra.mxu0 %v42
  %53 = vmatprep.subr.bf16.mxu0 0
  %54 = vmatpush1.bf16.msra.mxu0 0
  %55 = vmatprep.subr.bf16.mxu0 0
  %56 = vmatpush1.bf16.msra.mxu0 0
  %57 = vmatprep.subr.bf16.mxu0 0
  %58 = vmatpush1.bf16.msra.mxu0 0
  %59 = vmatprep.subr.bf16.mxu0 0
  %60 = vmatpush1.bf16.msra.mxu0 0
  %61 = vmatprep.subr.bf16.mxu0 0
  %62 = vmatpush1.bf16.msra.mxu0 0
  %63 = vmatprep.subr.bf16.mxu0 0
  %64 = vmatpush1.bf16.msra.mxu0 0
  %65 = vmatprep.subr.bf16.mxu0 0
  %66 = vmatpush1.bf16.msra.mxu0 0
  %67 = vmatprep.subr.bf16.mxu0 0
  %68 = vmatpush1.bf16.msra.mxu0 0
  %69 = vmatprep.subr.bf16.mxu0 0
  %70 = vmatpush1.bf16.msra.mxu0 0
  %71 = vmatprep.subr.bf16.mxu0 0
  %72 = vmatpush1.bf16.msra.mxu0 0
  %73 = vmatprep.subr.bf16.mxu0 0
  %74 = vmatpush1.bf16.msra.mxu0 0
  %75 = vmatprep.subr.bf16.mxu0 0
  %76 = vmatpush1.bf16.msra.mxu0 0
  %77 = vmatprep.subr.bf16.mxu0 0
  %78 = vmatpush1.bf16.msra.mxu0 0
  %79 = vmatprep.subr.bf16.mxu0 0
  %80 = vmatpush1.bf16.msra.mxu0 0
  %81 = vmatprep.mubr.bf16.mxu0 0
  %82 = vmatmul.mubr.bf16.gmra.mrb[0].mxu0 %v47
  %v83 = vpop.f32.mrb[0].mxu0
  %v84 = vadd.f32 %v26, %v83
  %v85 = vpop.f32.mrb[0].mxu0
  %v86 = vpop.f32.mrb[0].mxu0
  %v87 = vadd.f32 %v26, %v86
  %v88 = vpop.f32.mrb[0].mxu0
  %89 = vdwg.mxu0
  %v90 = vmul.f32 %v84, 0.5
  %v91 = vmul.f32 %v87, 0.5
  %v92 = vmul.f32 %v84, 0.70710677
  %v93 = vmul.f32 %v87, 0.70710677
  %v94 = verf.f32.pop %v92
  %v95 = verf.f32.pop %v93
  %v96 = vadd.f32 %v94, 1.0
  %v97 = vadd.f32 %v95, 1.0
  %v98 = vmul.f32 %v90, %v96
  %v99 = vmul.f32 %v91, %v97
  %v100 = vpack.c.bf16 %v99, %v98
  %v102 = vunpack.c.l.b16 %v100
  %v103 = vunpack.c.h.b16 %v100
  %v104 = vpack.c.b16 %v102, %v102
  %v105 = vpack.c.b16 %v103, %v103
  %vm108 = vcmask 519168
  %109 = vst.msk [vmem:[%s3] sm:$0xf] %vm108, %v104
  %110 = vst.msk [vmem:[%s3 + $0x4] sm:$0xf] %vm108, %v105
  // Predicated region
  $region14: #{bert_forward.13} parent=0 // pred_check
    _
  $region15: #{bert_forward.13} parent=0 // pred_check_branch
    %112 = sbr.rel (0) target = $region17
  $region16: #{bert_forward.13} parent=0 // pred_region
    _
  $region17: #{bert_forward.13} parent=0 // pred_fallthru
    _
  // Predicated region
  $region18: #{bert_forward.13} parent=0 // pred_check
    _
  $region19: #{bert_forward.13} parent=0 // pred_check_branch
    %114 = sbr.rel (0) target = $region21
  $region20: #{bert_forward.13} parent=0 // pred_region
    _
  $region21: #{bert_forward.13} parent=0 // pred_fallthru
    _

// kernel: bert_forward.12
$region0: #{bert_forward.12}
  #allocation0 [shape = 'u32[]', space=smem, size = 0x4, offset = 0x4, fixed_abs, tag = 'smem constant byte address 0x4 - core index']
  #allocation1 [shape = 'u32[144,128]{1,0:T(1,128)}', space=vmem, size = 0x12000, scoped, tag = 'internal scratch']
  %s0 = inlined_call_operand.vmem [shape: bf16[16,32], index: 0, kind: input, shape index: {}]
  %s1 = inlined_call_operand.vmem [shape: bf16[32,32], index: 1, kind: input, shape index: {}]
  %s2 = inlined_call_operand.vmem [shape: f32[1,32], index: 2, kind: input, shape index: {}]
  %s3 = inlined_call_operand.vmem [shape: bf16[16,32], index: 3, kind: input, shape index: {}]
  %s4 = inlined_call_operand.vmem [shape: f32[1,32], index: 4, kind: input, shape index: {}]
  %s5 = inlined_call_operand.vmem [shape: f32[1,32], index: 5, kind: input, shape index: {}]
  %s6 = inlined_call_operand.vmem [shape: bf16[16,32], index: 6, kind: output, shape index: {}]
  %s7 = sld [smem:[#allocation0]]
  $region34: #{bert_forward.12} parent=0
    _
  %s9 = ssub.s32 1, %s7
  %s10 = scalar_select 0, %s9, %s7
  // Predicated region
  $region2: #{bert_forward.12} parent=0 // pred_check
    _
  $region3: #{bert_forward.12} parent=0 // pred_check_branch
    %12 = sbr.rel (0) target = $region5
  $region4: #{bert_forward.12} parent=0 // pred_region
    _
  $region5: #{bert_forward.12} parent=0 // pred_fallthru
    _
  // Predicated region
  $region6: #{bert_forward.12} parent=0 // pred_check
    _
  $region7: #{bert_forward.12} parent=0 // pred_check_branch
    %14 = sbr.rel (0) target = $region9
  $region8: #{bert_forward.12} parent=0 // pred_region
    _
  $region9: #{bert_forward.12} parent=0 // pred_fallthru
    _
  // Predicated region
  $region10: #{bert_forward.12} parent=0 // pred_check
    _
  $region11: #{bert_forward.12} parent=0 // pred_check_branch
    %16 = sbr.rel (0) target = $region13
  $region12: #{bert_forward.12} parent=0 // pred_region
    _
  $region13: #{bert_forward.12} parent=0 // pred_fallthru
    _
  // Predicated region
  $region14: #{bert_forward.12} parent=0 // pred_check
    _
  $region15: #{bert_forward.12} parent=0 // pred_check_branch
    %18 = sbr.rel (0) target = $region17
  $region16: #{bert_forward.12} parent=0 // pred_region
    _
  $region17: #{bert_forward.12} parent=0 // pred_fallthru
    _
  // Predicated region
  $region18: #{bert_forward.12} parent=0 // pred_check
    _
  $region19: #{bert_forward.12} parent=0 // pred_check_branch
    %20 = sbr.rel (0) target = $region21
  $region20: #{bert_forward.12} parent=0 // pred_region
    _
  $region21: #{bert_forward.12} parent=0 // pred_fallthru
    _
  // Predicated region
  $region22: #{bert_forward.12} parent=0 // pred_check
    _
  $region23: #{bert_forward.12} parent=0 // pred_check_branch
    %22 = sbr.rel (0) target = $region25
  $region24: #{bert_forward.12} parent=0 // pred_region
    _
  $region25: #{bert_forward.12} parent=0 // pred_fallthru
    _
  %v24 = vld [vmem:[%s0] sm:$0xf]
  %v25 = vld [vmem:[%s0 + $0x4] sm:$0xf]
  %v26 = vld [vmem:[%s1] sm:$0xf]
  %v27 = vld [vmem:[%s1 + $0x4] sm:$0xf]
  %v28 = vld [vmem:[%s1 + $0x8] sm:$0xf]
  %v29 = vld [vmem:[%s1 + $0xc] sm:$0xf]
  %v30 = vld [vmem:[%s2] sm:$0x1]
  %v32 = vlaneseq
  %v33 = vshrl.u32 %v32, 7
  %v34 = vsub.s32 0, %v33
  %v35 = vrot.slane %v30, %v34
  %v39 = vunpack.c.l.b16 %v24
  %v40 = vunpack.c.l.b16 %v25
  %v41 = vpack.c.b16 %v40, %v39
  %v46 = vunpack.c.l.b16 %v26
  %v47 = vunpack.c.l.b16 %v27
  %v48 = vunpack.c.l.b16 %v28
  %v49 = vunpack.c.l.b16 %v29
  %v50 = vpack.c.b16 %v47, %v46
  %v51 = vpack.c.b16 %v49, %v48
  %vm54 = vcmask 261120
  %v56 = vsel %vm54, %v41, 0
  %58 = vmatprep.subr.bf16.mxu0 0
  %59 = vmatpush1.bf16.msra.mxu0 %v50
  %60 = vmatprep.subr.bf16.mxu0 0
  %61 = vmatpush1.bf16.msra.mxu0 %v51
  %62 = vmatprep.subr.bf16.mxu0 0
  %63 = vmatpush1.bf16.msra.mxu0 0
  %64 = vmatprep.subr.bf16.mxu0 0
  %65 = vmatpush1.bf16.msra.mxu0 0
  %66 = vmatprep.subr.bf16.mxu0 0
  %67 = vmatpush1.bf16.msra.mxu0 0
  %68 = vmatprep.subr.bf16.mxu0 0
  %69 = vmatpush1.bf16.msra.mxu0 0
  %70 = vmatprep.subr.bf16.mxu0 0
  %71 = vmatpush1.bf16.msra.mxu0 0
  %72 = vmatprep.subr.bf16.mxu0 0
  %73 = vmatpush1.bf16.msra.mxu0 0
  %74 = vmatprep.subr.bf16.mxu0 0
  %75 = vmatpush1.bf16.msra.mxu0 0
  %76 = vmatprep.subr.bf16.mxu0 0
  %77 = vmatpush1.bf16.msra.mxu0 0
  %78 = vmatprep.subr.bf16.mxu0 0
  %79 = vmatpush1.bf16.msra.mxu0 0
  %80 = vmatprep.subr.bf16.mxu0 0
  %81 = vmatpush1.bf16.msra.mxu0 0
  %82 = vmatprep.subr.bf16.mxu0 0
  %83 = vmatpush1.bf16.msra.mxu0 0
  %84 = vmatprep.subr.bf16.mxu0 0
  %85 = vmatpush1.bf16.msra.mxu0 0
  %86 = vmatprep.subr.bf16.mxu0 0
  %87 = vmatpush1.bf16.msra.mxu0 0
  %88 = vmatprep.subr.bf16.mxu0 0
  %89 = vmatpush1.bf16.msra.mxu0 0
  %90 = vmatprep.mubr.bf16.mxu0 0
  %91 = vmatmul.mubr.bf16.gmra.mrb[0].mxu0 %v56
  %v92 = vpop.f32.mrb[0].mxu0
  %v93 = vadd.f32 %v35, %v92
  %v94 = vpop.f32.mrb[0].mxu0
  %v95 = vpop.f32.mrb[0].mxu0
  %v96 = vadd.f32 %v35, %v95
  %v97 = vpop.f32.mrb[0].mxu0
  %98 = vdwg.mxu0
  %v99 = vld [vmem:[%s3] sm:$0xf]
  %v100 = vld [vmem:[%s3 + $0x4] sm:$0xf]
  %v101 = vunpack.c.l.bf16 %v99
  %v102 = vunpack.c.l.bf16 %v100
  %v103 = vadd.f32 %v93, %v101
  %v104 = vadd.f32 %v96, %v102
  %v105 = vsel %vm54, %v103, 0.0
  %106 = vadd.xlane.f32.xlu0 %v105
  %v107 = vpop.xlane.xlu0 %106
  %v108 = vsel %vm54, %v104, 0.0
  %109 = vadd.xlane.f32.xlu0 %v108
  %v110 = vpop.xlane.xlu0 %109
  %v111 = vrcp.pop 32.0
  %v112 = vmul.f32 %v107, %v111
  %v113 = vmul.f32 %v110, %v111
  %v114 = vsub.f32 %v103, %v112
  %v115 = vsub.f32 %v104, %v113
  %v116 = vmul.f32 %v114, %v114
  %v117 = vmul.f32 %v115, %v115
  %v118 = vsel %vm54, %v116, 0.0
  %119 = vadd.xlane.f32.xlu0 %v118
  %v120 = vpop.xlane.xlu0 %119
  %v121 = vsel %vm54, %v117, 0.0
  %122 = vadd.xlane.f32.xlu0 %v121
  %v123 = vpop.xlane.xlu0 %122
  %v124 = vmul.f32 %v120, %v111
  %v125 = vmul.f32 %v123, %v111
  %v126 = vadd.f32 %v124, 1e-12
  %v127 = vadd.f32 %v125, 1e-12
  %v128 = vrsqrt.pop %v126
  %v129 = vrsqrt.pop %v127
  %v130 = vmul.f32 %v114, %v128
  %v131 = vmul.f32 %v115, %v129
  %v132 = vld [vmem:[%s4] sm:$0x1]
  %v134 = vlaneseq
  %v135 = vshrl.u32 %v134, 7
  %v136 = vsub.s32 0, %v135
  %v137 = vrot.slane %v132, %v136
  %v139 = vmul.f32 %v130, %v137
  %v140 = vmul.f32 %v131, %v137
  %v141 = vld [vmem:[%s5] sm:$0x1]
  %v143 = vlaneseq
  %v144 = vshrl.u32 %v143, 7
  %v145 = vsub.s32 0, %v144
  %v146 = vrot.slane %v141, %v145
  %v148 = vadd.f32 %v139, %v146
  %v149 = vadd.f32 %v140, %v146
  %v150 = vpack.c.bf16 %v149, %v148
  %v152 = vunpack.c.l.b16 %v150
  %v153 = vunpack.c.h.b16 %v150
  %v154 = vpack.c.b16 %v152, %v152
  %v155 = vpack.c.b16 %v153, %v153
  %vm158 = vcmask 257024
  %159 = vst.msk [vmem:[%s6] sm:$0xf] %vm158, %v154
  %160 = vst.msk [vmem:[%s6 + $0x4] sm:$0xf] %vm158, %v155
  // Predicated region
  $region26: #{bert_forward.12} parent=0 // pred_check
    _
  $region27: #{bert_forward.12} parent=0 // pred_check_branch
    %162 = sbr.rel (0) target = $region29
  $region28: #{bert_forward.12} parent=0 // pred_region
    _
  $region29: #{bert_forward.12} parent=0 // pred_fallthru
    _
  // Predicated region
  $region30: #{bert_forward.12} parent=0 // pred_check
    _
  $region31: #{bert_forward.12} parent=0 // pred_check_branch
    %164 = sbr.rel (0) target = $region33
  $region32: #{bert_forward.12} parent=0 // pred_region
    _
  $region33: #{bert_forward.12} parent=0 // pred_fallthru
    _

// kernel: bert_forward.11
$region0: #{bert_forward.11}
  #allocation0 [shape = 'u32[]', space=smem, size = 0x4, offset = 0x4, fixed_abs, tag = 'smem constant byte address 0x4 - core index']
  #allocation1 [shape = 'u32[144,128]{1,0:T(1,128)}', space=vmem, size = 0x12000, scoped, tag = 'internal scratch']
  %s0 = inlined_call_operand.vmem [shape: bf16[2,8,32], index: 0, kind: input, shape index: {}]
  %s1 = inlined_call_operand.vmem [shape: bf16[4,32,8], index: 1, kind: input, shape index: {}]
  %s2 = inlined_call_operand.vmem [shape: bf16[4,32,8], index: 2, kind: input, shape index: {}]
  %s3 = inlined_call_operand.vmem [shape: bf16[4,32,8], index: 3, kind: input, shape index: {}]
  %s4 = inlined_call_operand.vmem [shape: f32[4,1,8], index: 4, kind: input, shape index: {}]
  %s5 = inlined_call_operand.vmem [shape: f32[4,1,8], index: 5, kind: input, shape index: {}]
  %s6 = inlined_call_operand.vmem [shape: f32[4,1,8], index: 6, kind: input, shape index: {}]
  %s7 = inlined_call_operand.vmem [shape: f32[2,1,8], index: 7, kind: input, shape index: {}]
  %s8 = inlined_call_operand.vmem [shape: bf16[2,8,32], index: 8, kind: output, shape index: {}]
  %s9 = sld [smem:[#allocation0]]
  $region65: #{bert_forward.11} parent=0
    _
  %s11 = ssub.s32 1, %s9
  %s12 = scalar_select 0, %s11, %s9
  loop: start=0, step=1, limit=4
  $region2: #{bert_forward.11} parent=0 // loop_pre_header
    _
  $region3: #{bert_forward.11} parent=0 // loop_header
    %s14 = sphi 0, %s18
    %p15 = scmp.ge.s32.totalorder %s14, 4
    %s24 = sphi 0, %s26
    %s27 = sphi 0, %s24
    %s28 = sphi 0, %s27
    %s44 = sphi 0, %s28
    %s48 = sphi 0, %s48
    %s50 = sphi 0, %s48
    %s51 = sphi 0, %s50
    %s65 = sphi 0, %s51
    %s69 = sphi 0, %s69
    %s71 = sphi 0, %s69
    %s72 = sphi 0, %s71
    %s86 = sphi 0, %s72
    %s90 = sphi 0, %s90
    %s92 = sphi 0, %s90
    %s93 = sphi 0, %s92
    %s107 = sphi 0, %s93
    %s111 = sphi 0, %s111
    %s113 = sphi 0, %s111
    %s114 = sphi 0, %s113
    %s128 = sphi 0, %s114
    %s132 = sphi 0, %s132
    %s134 = sphi 0, %s132
    %s135 = sphi 0, %s134
    %s149 = sphi 0, %s135
    %s153 = sphi 0, %s153
    %s155 = sphi 0, %s153
    %s156 = sphi 0, %s155
    %s170 = sphi 0, %s156
    %s176 = sphi 0, %s178
    %s179 = sphi 0, %s176
    %s180 = sphi 0, %s179
    %s196 = sphi 0, %s180
    %s202 = sphi 0, %s204
    %s205 = sphi 0, %s202
    %s206 = sphi 0, %s205
    %s222 = sphi 0, %s206
  $region4: #{bert_forward.11} parent=0 // loop_header_branch
    %17 = sbr.rel (%p15) target = $region8
  $region5: #{bert_forward.11} parent=0 // loop_body
    %s19 = ssub.s32 %s14, 1
    %s20 = ssub.s32 %s14, 2
    %s21 = sadd.s32 %s14, 1
    %s22 = ssub.s32 %s14, %s21
    %p23 = scmp.eq.s32.totalorder %s22, 0
    %s25 = sadd.s32 %s24, 1
    %s26 = scalar_select %p23, %s24, %s25
    %p29 = pneg %p23
    %p30 = scmp.eq.s32.totalorder %s14, 1
    %p31 = por %p29, %p30
    %p32 = scmp.ne.s32.totalorder %s24, %s27
    %p33 = scmp.eq.s32.totalorder %s14, 0
    %p34 = por %p32, %p33
    %p35 = scmp.ne.s32.totalorder %s24, %s27
    %p36 = scmp.eq.s32.totalorder %s19, 1
    %p37 = por %p35, %p36
    %p38 = scmp.ne.s32.totalorder %s27, %s28
    %p39 = scmp.eq.s32.totalorder %s19, 0
    %p40 = por %p38, %p39
    %p41 = scmp.ne.s32.totalorder %s27, %s28
    %p42 = scmp.eq.s32.totalorder %s20, 1
    %p43 = por %p41, %p42
    %p45 = scmp.ne.s32.totalorder %s28, %s44
    %p46 = scmp.eq.s32.totalorder %s20, 0
    %p47 = por %p45, %p46
    %s49 = sadd.s32 %s48, 1
    %p52 = scmp.eq.s32.totalorder %s14, 1
    %p53 = scmp.ne.s32.totalorder %s48, %s50
    %p54 = scmp.eq.s32.totalorder %s14, 0
    %p55 = por %p53, %p54
    %p56 = scmp.ne.s32.totalorder %s48, %s50
    %p57 = scmp.eq.s32.totalorder %s19, 1
    %p58 = por %p56, %p57
    %p59 = scmp.ne.s32.totalorder %s50, %s51
    %p60 = scmp.eq.s32.totalorder %s19, 0
    %p61 = por %p59, %p60
    %p62 = scmp.ne.s32.totalorder %s50, %s51
    %p63 = scmp.eq.s32.totalorder %s20, 1
    %p64 = por %p62, %p63
    %p66 = scmp.ne.s32.totalorder %s51, %s65
    %p67 = scmp.eq.s32.totalorder %s20, 0
    %p68 = por %p66, %p67
    %s70 = sadd.s32 %s69, 1
    %p73 = scmp.eq.s32.totalorder %s14, 1
    %p74 = scmp.ne.s32.totalorder %s69, %s71
    %p75 = scmp.eq.s32.totalorder %s14, 0
    %p76 = por %p74, %p75
    %p77 = scmp.ne.s32.totalorder %s69, %s71
    %p78 = scmp.eq.s32.totalorder %s19, 1
    %p79 = por %p77, %p78
    %p80 = scmp.ne.s32.totalorder %s71, %s72
    %p81 = scmp.eq.s32.totalorder %s19, 0
    %p82 = por %p80, %p81
    %p83 = scmp.ne.s32.totalorder %s71, %s72
    %p84 = scmp.eq.s32.totalorder %s20, 1
    %p85 = por %p83, %p84
    %p87 = scmp.ne.s32.totalorder %s72, %s86
    %p88 = scmp.eq.s32.totalorder %s20, 0
    %p89 = por %p87, %p88
    %s91 = sadd.s32 %s90, 1
    %p94 = scmp.eq.s32.totalorder %s14, 1
    %p95 = scmp.ne.s32.totalorder %s90, %s92
    %p96 = scmp.eq.s32.totalorder %s14, 0
    %p97 = por %p95, %p96
    %p98 = scmp.ne.s32.totalorder %s90, %s92
    %p99 = scmp.eq.s32.totalorder %s19, 1
    %p100 = por %p98, %p99
    %p101 = scmp.ne.s32.totalorder %s92, %s93
    %p102 = scmp.eq.s32.totalorder %s19, 0
    %p103 = por %p101, %p102
    %p104 = scmp.ne.s32.totalorder %s92, %s93
    %p105 = scmp.eq.s32.totalorder %s20, 1
    %p106 = por %p104, %p105
    %p108 = scmp.ne.s32.totalorder %s93, %s107
    %p109 = scmp.eq.s32.totalorder %s20, 0
    %p110 = por %p108, %p109
    %s112 = sadd.s32 %s111, 1
    %p115 = scmp.eq.s32.totalorder %s14, 1
    %p116 = scmp.ne.s32.totalorder %s111, %s113
    %p117 = scmp.eq.s32.totalorder %s14, 0
    %p118 = por %p116, %p117
    %p119 = scmp.ne.s32.totalorder %s111, %s113
    %p120 = scmp.eq.s32.totalorder %s19, 1
    %p121 = por %p119, %p120
    %p122 = scmp.ne.s32.totalorder %s113, %s114
    %p123 = scmp.eq.s32.totalorder %s19, 0
    %p124 = por %p122, %p123
    %p125 = scmp.ne.s32.totalorder %s113, %s114
    %p126 = scmp.eq.s32.totalorder %s20, 1
    %p127 = por %p125, %p126
    %p129 = scmp.ne.s32.totalorder %s114, %s128
    %p130 = scmp.eq.s32.totalorder %s20, 0
    %p131 = por %p129, %p130
    %s133 = sadd.s32 %s132, 1
    %p136 = scmp.eq.s32.totalorder %s14, 1
    %p137 = scmp.ne.s32.totalorder %s132, %s134
    %p138 = scmp.eq.s32.totalorder %s14, 0
    %p139 = por %p137, %p138
    %p140 = scmp.ne.s32.totalorder %s132, %s134
    %p141 = scmp.eq.s32.totalorder %s19, 1
    %p142 = por %p140, %p141
    %p143 = scmp.ne.s32.totalorder %s134, %s135
    %p144 = scmp.eq.s32.totalorder %s19, 0
    %p145 = por %p143, %p144
    %p146 = scmp.ne.s32.totalorder %s134, %s135
    %p147 = scmp.eq.s32.totalorder %s20, 1
    %p148 = por %p146, %p147
    %p150 = scmp.ne.s32.totalorder %s135, %s149
    %p151 = scmp.eq.s32.totalorder %s20, 0
    %p152 = por %p150, %p151
    %s154 = sadd.s32 %s153, 1
    %p157 = scmp.eq.s32.totalorder %s14, 1
    %p158 = scmp.ne.s32.totalorder %s153, %s155
    %p159 = scmp.eq.s32.totalorder %s14, 0
    %p160 = por %p158, %p159
    %p161 = scmp.ne.s32.totalorder %s153, %s155
    %p162 = scmp.eq.s32.totalorder %s19, 1
    %p163 = por %p161, %p162
    %p164 = scmp.ne.s32.totalorder %s155, %s156
    %p165 = scmp.eq.s32.totalorder %s19, 0
    %p166 = por %p164, %p165
    %p167 = scmp.ne.s32.totalorder %s155, %s156
    %p168 = scmp.eq.s32.totalorder %s20, 1
    %p169 = por %p167, %p168
    %p171 = scmp.ne.s32.totalorder %s156, %s170
    %p172 = scmp.eq.s32.totalorder %s20, 0
    %p173 = por %p171, %p172
    %s174 = ssub.s32 %s14, %s21
    %p175 = scmp.eq.s32.totalorder %s174, 0
    %s177 = sadd.s32 %s176, 1
    %s178 = scalar_select %p175, %s176, %s177
    %p181 = pneg %p175
    %p182 = scmp.eq.s32.totalorder %s14, 1
    %p183 = por %p181, %p182
    %p184 = scmp.ne.s32.totalorder %s176, %s179
    %p185 = scmp.eq.s32.totalorder %s14, 0
    %p186 = por %p184, %p185
    %p187 = scmp.ne.s32.totalorder %s176, %s179
    %p188 = scmp.eq.s32.totalorder %s19, 1
    %p189 = por %p187, %p188
    %p190 = scmp.ne.s32.totalorder %s179, %s180
    %p191 = scmp.eq.s32.totalorder %s19, 0
    %p192 = por %p190, %p191
    %p193 = scmp.ne.s32.totalorder %s179, %s180
    %p194 = scmp.eq.s32.totalorder %s20, 1
    %p195 = por %p193, %p194
    %p197 = scmp.ne.s32.totalorder %s180, %s196
    %p198 = scmp.eq.s32.totalorder %s20, 0
    %p199 = por %p197, %p198
    %s200 = ssub.s32 %s14, %s21
    %p201 = scmp.eq.s32.totalorder %s200, 0
    %s203 = sadd.s32 %s202, 1
    %s204 = scalar_select %p201, %s202, %s203
    %p207 = pneg %p201
    %p208 = scmp.eq.s32.totalorder %s14, 1
    %p209 = por %p207, %p208
    %p210 = scmp.ne.s32.totalorder %s202, %s205
    %p211 = scmp.eq.s32.totalorder %s14, 0
    %p212 = por %p210, %p211
    %p213 = scmp.ne.s32.totalorder %s202, %s205
    %p214 = scmp.eq.s32.totalorder %s19, 1
    %p215 = por %p213, %p214
    %p216 = scmp.ne.s32.totalorder %s205, %s206
    %p217 = scmp.eq.s32.totalorder %s19, 0
    %p218 = por %p216, %p217
    %p219 = scmp.ne.s32.totalorder %s205, %s206
    %p220 = scmp.eq.s32.totalorder %s20, 1
    %p221 = por %p219, %p220
    %p223 = scmp.ne.s32.totalorder %s206, %s222
    %p224 = scmp.eq.s32.totalorder %s20, 0
    %p225 = por %p223, %p224
    %p226 = scmp.le.s32.totalorder 1, %s14
    %p227 = scmp.lt.s32.totalorder %s14, 3
    %p228 = pnand %p226, %p227
    %p229 = pneg %p228
    // Predicated region
    $region9: #{bert_forward.11} parent=5 // pred_check
      _
    $region10: #{bert_forward.11} parent=5 // pred_check_branch
      %231 = sbr.rel (%p228) target = $region12
    $region11: #{bert_forward.11} parent=5 // pred_region
      %s232 = ssub.s32 %s14, 1
      // Predicated region
      $region13: #{bert_forward.11} parent=11 // pred_check
        %p233 = pneg %p61
      $region14: #{bert_forward.11} parent=11 // pred_check_branch
        %235 = sbr.rel (%p233) target = $region16
      $region15: #{bert_forward.11} parent=11 // pred_region
        _
      $region16: #{bert_forward.11} parent=11 // pred_fallthru
        _
      // Predicated region
      $region17: #{bert_forward.11} parent=11 // pred_check
        %p236 = pneg %p82
      $region18: #{bert_forward.11} parent=11 // pred_check_branch
        %238 = sbr.rel (%p236) target = $region20
      $region19: #{bert_forward.11} parent=11 // pred_region
        _
      $region20: #{bert_forward.11} parent=11 // pred_fallthru
        _
      // Predicated region
      $region21: #{bert_forward.11} parent=11 // pred_check
        %p239 = pneg %p103
      $region22: #{bert_forward.11} parent=11 // pred_check_branch
        %241 = sbr.rel (%p239) target = $region24
      $region23: #{bert_forward.11} parent=11 // pred_region
        _
      $region24: #{bert_forward.11} parent=11 // pred_fallthru
        _
      // Predicated region
      $region25: #{bert_forward.11} parent=11 // pred_check
        %p242 = pneg %p124
      $region26: #{bert_forward.11} parent=11 // pred_check_branch
        %244 = sbr.rel (%p242) target = $region28
      $region27: #{bert_forward.11} parent=11 // pred_region
        _
      $region28: #{bert_forward.11} parent=11 // pred_fallthru
        _
      // Predicated region
      $region29: #{bert_forward.11} parent=11 // pred_check
        %p245 = pneg %p145
      $region30: #{bert_forward.11} parent=11 // pred_check_branch
        %247 = sbr.rel (%p245) target = $region32
      $region31: #{bert_forward.11} parent=11 // pred_region
        _
      $region32: #{bert_forward.11} parent=11 // pred_fallthru
        _
      // Predicated region
      $region33: #{bert_forward.11} parent=11 // pred_check
        %p248 = pneg %p166
      $region34: #{bert_forward.11} parent=11 // pred_check_branch
        %250 = sbr.rel (%p248) target = $region36
      $region35: #{bert_forward.11} parent=11 // pred_region
        _
      $region36: #{bert_forward.11} parent=11 // pred_fallthru
        _
    $region12: #{bert_forward.11} parent=5 // pred_fallthru
      _
    %p251 = scmp.lt.s32.totalorder %s14, 2
    // Predicated region
    $region37: #{bert_forward.11} parent=5 // pred_check
      %p252 = pneg %p251
    $region38: #{bert_forward.11} parent=5 // pred_check_branch
      %254 = sbr.rel (%p252) target = $region40
    $region39: #{bert_forward.11} parent=5 // pred_region
      // Predicated region
      $region41: #{bert_forward.11} parent=39 // pred_check
        %p255 = pneg %p34
      $region42: #{bert_forward.11} parent=39 // pred_check_branch
        %257 = sbr.rel (%p255) target = $region44
      $region43: #{bert_forward.11} parent=39 // pred_region
        %p258 = scmp.lt.s32.totalorder %s14, 1
        %s259 = scalar_select %p258, %s14, 1
        %s260 = smul.addr %s259, 4
        %s261 = scalar_lea.vmem %s0, %s260
      $region44: #{bert_forward.11} parent=39 // pred_fallthru
        _
      // Predicated region
      $region45: #{bert_forward.11} parent=39 // pred_check
        %p262 = pneg %p186
      $region46: #{bert_forward.11} parent=39 // pred_check_branch
        %264 = sbr.rel (%p262) target = $region48
      $region47: #{bert_forward.11} parent=39 // pred_region
        %p265 = scmp.lt.s32.totalorder %s14, 1
        %s266 = scalar_select %p265, %s14, 1
        %s267 = scalar_lea.vmem %s7, %s266
      $region48: #{bert_forward.11} parent=39 // pred_fallthru
        _
    $region40: #{bert_forward.11} parent=5 // pred_fallthru
      _
    %p268 = scmp.le.s32.totalorder 1, %s14
    %p269 = scmp.lt.s32.totalorder %s14, 3
    %p270 = pnand %p268, %p269
    %p271 = pneg %p270
    // Predicated region
    $region49: #{bert_forward.11} parent=5 // pred_check
      _
    $region50: #{bert_forward.11} parent=5 // pred_check_branch
      %273 = sbr.rel (%p270) target = $region52
    $region51: #{bert_forward.11} parent=5 // pred_region
      %s274 = ssub.s32 %s14, 1
      %p275 = scmp.lt.s32.totalorder %s19, 1
      %s276 = scalar_select %p275, %s19, 1
      %s277 = smul.addr %s276, 4
      %s278 = scalar_lea.vmem %s0, %s277
      %p279 = pneg %p40
      %p280 = pneg %p37
      %p281 = pneg %p61
      %p282 = pneg %p58
      %p283 = pneg %p82
      %p284 = pneg %p79
      %p285 = pneg %p103
      %p286 = pneg %p100
      %p287 = pneg %p124
      %p288 = pneg %p121
      %p289 = pneg %p145
      %p290 = pneg %p142
      %p291 = pneg %p166
      %p292 = pneg %p163
      %p293 = scmp.lt.s32.totalorder %s19, 1
      %s294 = scalar_select %p293, %s19, 1
      %s295 = scalar_lea.vmem %s7, %s294
      %p296 = pneg %p192
      %p297 = pneg %p189
      %p298 = pneg %p218
      %p299 = pneg %p215
      %p300 = scmp.lt.s32.totalorder %s19, 1
      %s301 = scalar_select %p300, %s19, 1
      %s302 = smul.addr %s301, 4
      %s303 = scalar_lea.vmem %s8, %s302
      %p304 = scmp.lt.s32.totalorder %s19, 1
      %s305 = scalar_select %p304, %s19, 1
      %s306 = smul.addr %s305, 4
      %s307 = scalar_lea.vmem %s0, %s306
      %p308 = scmp.lt.s32.totalorder %s19, 1
      %s309 = scalar_select %p308, %s19, 1
      %s310 = scalar_lea.vmem %s7, %s309
      %p311 = scmp.lt.s32.totalorder %s19, 1
      %s312 = scalar_select %p311, %s19, 1
      %s313 = smul.addr %s312, 4
      %s314 = scalar_lea.vmem %s8, %s313
      %v316 = vld [vmem:[%s307] sm:$0xf]
      %v317 = vld [vmem:[%s310] sm:$0x1]
      %v318 = vld [vmem:[%s1] sm:$0xf]
      %v319 = vld [vmem:[%s1 + $0x4] sm:$0xf]
      %v320 = vld [vmem:[%s1 + $0x8] sm:$0xf]
      %v321 = vld [vmem:[%s1 + $0xc] sm:$0xf]
      %v322 = vld [vmem:[%s4] sm:$0x1]
      %v324 = vlaneseq
      %v325 = vshrl.u32 %v324, 7
      %v326 = vsub.s32 0, %v325
      %v327 = vrot.slane %v322, %v326
      %v333 = vunpack.c.l.b16 %v318
      %v334 = vunpack.c.l.b16 %v319
      %v335 = vunpack.c.l.b16 %v320
      %v336 = vunpack.c.l.b16 %v321
      %v337 = vpack.c.b16 %v334, %v333
      %v338 = vpack.c.b16 %v336, %v335
      %vm341 = vcmask 261120
      %v343 = vsel %vm341, %v316, 0
      %345 = vmatprep.subr.bf16.mxu0 0
      %346 = vmatpush1.bf16.msra.mxu0 %v337
      %347 = vmatprep.subr.bf16.mxu0 0
      %348 = vmatpush1.bf16.msra.mxu0 %v338
      %349 = vmatprep.subr.bf16.mxu0 0
      %350 = vmatpush1.bf16.msra.mxu0 0
      %351 = vmatprep.subr.bf16.mxu0 0
      %352 = vmatpush1.bf16.msra.mxu0 0
      %353 = vmatprep.subr.bf16.mxu0 0
      %354 = vmatpush1.bf16.msra.mxu0 0
      %355 = vmatprep.subr.bf16.mxu0 0
      %356 = vmatpush1.bf16.msra.mxu0 0
      %357 = vmatprep.subr.bf16.mxu0 0
      %358 = vmatpush1.bf16.msra.mxu0 0
      %359 = vmatprep.subr.bf16.mxu0 0
      %360 = vmatpush1.bf16.msra.mxu0 0
      %361 = vmatprep.subr.bf16.mxu0 0
      %362 = vmatpush1.bf16.msra.mxu0 0
      %363 = vmatprep.subr.bf16.mxu0 0
      %364 = vmatpush1.bf16.msra.mxu0 0
      %365 = vmatprep.subr.bf16.mxu0 0
      %366 = vmatpush1.bf16.msra.mxu0 0
      %367 = vmatprep.subr.bf16.mxu0 0
      %368 = vmatpush1.bf16.msra.mxu0 0
      %369 = vmatprep.subr.bf16.mxu0 0
      %370 = vmatpush1.bf16.msra.mxu0 0
      %371 = vmatprep.subr.bf16.mxu0 0
      %372 = vmatpush1.bf16.msra.mxu0 0
      %373 = vmatprep.subr.bf16.mxu0 0
      %374 = vmatpush1.bf16.msra.mxu0 0
      %375 = vmatprep.subr.bf16.mxu0 0
      %376 = vmatpush1.bf16.msra.mxu0 0
      %377 = vmatprep.mubr.bf16.mxu0 0
      %378 = vmatmul.mubr.bf16.gmra.mrb[0].mxu0 %v343
      %v379 = vpop.f32.mrb[0].mxu0
      %v380 = vadd.f32 %v327, %v379
      %v381 = vpop.f32.mrb[0].mxu0
      %v382 = vpop.f32.mrb[0].mxu0
      %v383 = vpop.f32.mrb[0].mxu0
      %384 = vdwg.mxu0
      %v385 = vpack.c.bf16 %v380, %v380
      %v386 = vld [vmem:[%s2] sm:$0xf]
      %v387 = vld [vmem:[%s2 + $0x4] sm:$0xf]
      %v388 = vld [vmem:[%s2 + $0x8] sm:$0xf]
      %v389 = vld [vmem:[%s2 + $0xc] sm:$0xf]
      %v390 = vld [vmem:[%s5] sm:$0x1]
      %v392 = vlaneseq
      %v393 = vshrl.u32 %v392, 7
      %v394 = vsub.s32 0, %v393
      %v395 = vrot.slane %v390, %v394
      %v401 = vunpack.c.l.b16 %v386
      %v402 = vunpack.c.l.b16 %v387
      %v403 = vunpack.c.l.b16 %v388
      %v404 = vunpack.c.l.b16 %v389
      %v405 = vpack.c.b16 %v402, %v401
      %v406 = vpack.c.b16 %v404, %v403
      %409 = vmatprep.subr.bf16.mxu0 0
      %410 = vmatpush1.bf16.msra.mxu0 %v405
      %411 = vmatprep.subr.bf16.mxu0 0
      %412 = vmatpush1.bf16.msra.mxu0 %v406
      %413 = vmatprep.subr.bf16.mxu0 0
      %414 = vmatpush1.bf16.msra.mxu0 0
      %415 = vmatprep.subr.bf16.mxu0 0
      %416 = vmatpush1.bf16.msra.mxu0 0
      %417 = vmatprep.subr.bf16.mxu0 0
      %418 = vmatpush1.bf16.msra.mxu0 0
      %419 = vmatprep.subr.bf16.mxu0 0
      %420 = vmatpush1.bf16.msra.mxu0 0
      %421 = vmatprep.subr.bf16.mxu0 0
      %422 = vmatpush1.bf16.msra.mxu0 0
      %423 = vmatprep.subr.bf16.mxu0 0
      %424 = vmatpush1.bf16.msra.mxu0 0
      %425 = vmatprep.subr.bf16.mxu0 0
      %426 = vmatpush1.bf16.msra.mxu0 0
      %427 = vmatprep.subr.bf16.mxu0 0
      %428 = vmatpush1.bf16.msra.mxu0 0
      %429 = vmatprep.subr.bf16.mxu0 0
      %430 = vmatpush1.bf16.msra.mxu0 0
      %431 = vmatprep.subr.bf16.mxu0 0
      %432 = vmatpush1.bf16.msra.mxu0 0
      %433 = vmatprep.subr.bf16.mxu0 0
      %434 = vmatpush1.bf16.msra.mxu0 0
      %435 = vmatprep.subr.bf16.mxu0 0
      %436 = vmatpush1.bf16.msra.mxu0 0
      %437 = vmatprep.subr.bf16.mxu0 0
      %438 = vmatpush1.bf16.msra.mxu0 0
      %439 = vmatprep.subr.bf16.mxu0 0
      %440 = vmatpush1.bf16.msra.mxu0 0
      %441 = vmatprep.mubr.bf16.mxu0 0
      %442 = vmatmul.mubr.bf16.gmra.mrb[0].mxu0 %v343
      %v443 = vpop.f32.mrb[0].mxu0
      %v444 = vadd.f32 %v395, %v443
      %v445 = vpop.f32.mrb[0].mxu0
      %v446 = vpop.f32.mrb[0].mxu0
      %v447 = vpop.f32.mrb[0].mxu0
      %448 = vdwg.mxu0
      %v449 = vpack.c.bf16 %v444, %v444
      %v450 = vld [vmem:[%s3] sm:$0xf]
      %v451 = vld [vmem:[%s3 + $0x4] sm:$0xf]
      %v452 = vld [vmem:[%s3 + $0x8] sm:$0xf]
      %v453 = vld [vmem:[%s3 + $0xc] sm:$0xf]
      %v454 = vld [vmem:[%s6] sm:$0x1]
      %v456 = vlaneseq
      %v457 = vshrl.u32 %v456, 7
      %v458 = vsub.s32 0, %v457
      %v459 = vrot.slane %v454, %v458
      %v465 = vunpack.c.l.b16 %v450
      %v466 = vunpack.c.l.b16 %v451
      %v467 = vunpack.c.l.b16 %v452
      %v468 = vunpack.c.l.b16 %v453
      %v469 = vpack.c.b16 %v466, %v465
      %v470 = vpack.c.b16 %v468, %v467
      %473 = vmatprep.subr.bf16.mxu0 0
      %474 = vmatpush1.bf16.msra.mxu0 %v469
      %475 = vmatprep.subr.bf16.mxu0 0
      %476 = vmatpush1.bf16.msra.mxu0 %v470
      %477 = vmatprep.subr.bf16.mxu0 0
      %478 = vmatpush1.bf16.msra.mxu0 0
      %479 = vmatprep.subr.bf16.mxu0 0
      %480 = vmatpush1.bf16.msra.mxu0 0
      %481 = vmatprep.subr.bf16.mxu0 0
      %482 = vmatpush1.bf16.msra.mxu0 0
      %483 = vmatprep.subr.bf16.mxu0 0
      %484 = vmatpush1.bf16.msra.mxu0 0
      %485 = vmatprep.subr.bf16.mxu0 0
      %486 = vmatpush1.bf16.msra.mxu0 0
      %487 = vmatprep.subr.bf16.mxu0 0
      %488 = vmatpush1.bf16.msra.mxu0 0
      %489 = vmatprep.subr.bf16.mxu0 0
      %490 = vmatpush1.bf16.msra.mxu0 0
      %491 = vmatprep.subr.bf16.mxu0 0
      %492 = vmatpush1.bf16.msra.mxu0 0
      %493 = vmatprep.subr.bf16.mxu0 0
      %494 = vmatpush1.bf16.msra.mxu0 0
      %495 = vmatprep.subr.bf16.mxu0 0
      %496 = vmatpush1.bf16.msra.mxu0 0
      %497 = vmatprep.subr.bf16.mxu0 0
      %498 = vmatpush1.bf16.msra.mxu0 0
      %499 = vmatprep.subr.bf16.mxu0 0
      %500 = vmatpush1.bf16.msra.mxu0 0
      %501 = vmatprep.subr.bf16.mxu0 0
      %502 = vmatpush1.bf16.msra.mxu0 0
      %503 = vmatprep.subr.bf16.mxu0 0
      %504 = vmatpush1.bf16.msra.mxu0 0
      %505 = vmatprep.mubr.bf16.mxu0 0
      %506 = vmatmul.mubr.bf16.gmra.mrb[0].mxu0 %v343
      %v507 = vpop.f32.mrb[0].mxu0
      %v508 = vadd.f32 %v459, %v507
      %v509 = vpop.f32.mrb[0].mxu0
      %v510 = vpop.f32.mrb[0].mxu0
      %v511 = vpop.f32.mrb[0].mxu0
      %512 = vdwg.mxu0
      %v513 = vpack.c.bf16 %v508, %v508
      %v515 = vlaneseq
      %v516 = vshrl.u32 %v515, 7
      %v517 = vsub.s32 0, %v516
      %v518 = vrot.slane %v317, %v517
      %vm520 = vcmask 64512
      %v522 = vsel %vm520, %v385, 0
      %v525 = vsel %vm520, %v449, 0
      %527 = vmatprep.subr.bf16.mxu0 0
      %528 = vmatpush1.bf16.xpose.msra.mxu0 %v525
      %529 = vmatprep.subr.bf16.mxu0 0
      %530 = vmatpush1.bf16.xpose.msra.mxu0 0
      %531 = vmatprep.subr.bf16.mxu0 0
      %532 = vmatpush1.bf16.xpose.msra.mxu0 0
      %533 = vmatprep.subr.bf16.mxu0 0
      %534 = vmatpush1.bf16.xpose.msra.mxu0 0
      %535 = vmatprep.subr.bf16.mxu0 0
      %536 = vmatpush1.bf16.xpose.msra.mxu0 0
      %537 = vmatprep.subr.bf16.mxu0 0
      %538 = vmatpush1.bf16.xpose.msra.mxu0 0
      %539 = vmatprep.subr.bf16.mxu0 0
      %540 = vmatpush1.bf16.xpose.msra.mxu0 0
      %541 = vmatprep.subr.bf16.mxu0 0
      %542 = vmatpush1.bf16.xpose.msra.mxu0 0
      %543 = vmatprep.subr.bf16.mxu0 0
      %544 = vmatpush1.bf16.xpose.msra.mxu0 0
      %545 = vmatprep.subr.bf16.mxu0 0
      %546 = vmatpush1.bf16.xpose.msra.mxu0 0
      %547 = vmatprep.subr.bf16.mxu0 0
      %548 = vmatpush1.bf16.xpose.msra.mxu0 0
      %549 = vmatprep.subr.bf16.mxu0 0
      %550 = vmatpush1.bf16.xpose.msra.mxu0 0
      %551 = vmatprep.subr.bf16.mxu0 0
      %552 = vmatpush1.bf16.xpose.msra.mxu0 0
      %553 = vmatprep.subr.bf16.mxu0 0
      %554 = vmatpush1.bf16.xpose.msra.mxu0 0
      %555 = vmatprep.subr.bf16.mxu0 0
      %556 = vmatpush1.bf16.xpose.msra.mxu0 0
      %557 = vmatprep.subr.bf16.mxu0 0
      %558 = vmatpush1.bf16.xpose.msra.mxu0 0
      %559 = vmatprep.mubr.bf16.mxu0 0
      %560 = vmatmul.mubr.bf16.gmra.mrb[0].mxu0 %v522
      %v561 = vpop.f32.mrb[0].mxu0
      %v562 = vadd.f32 %v518, %v561
      %v563 = vpop.f32.mrb[0].mxu0
      %v564 = vpop.f32.mrb[0].mxu0
      %v565 = vpop.f32.mrb[0].mxu0
      %566 = vdwg.mxu0
      %v567 = vsel %vm520, %v562, -inf
      %568 = vmax.xlane.f32.xlu0 %v567
      %v569 = vpop.xlane.xlu0 %568
      %v570 = vsub.f32 %v562, %v569
      %v571 = vmul.f32 %v570, 1.442695
      %v572 = vpow.pop %v571
      %v573 = vsel %vm520, %v572, 0.0
      %574 = vadd.xlane.f32.xlu0 %v573
      %v575 = vpop.xlane.xlu0 %574
      %v576 = vrcp.pop %v575
      %v577 = vmul.f32 %v572, %v576
      %v578 = vpack.c.bf16 %v577, %v577
      %v580 = vsel %vm520, %v578, 0
      %vm582 = vcmask 1043456
      %v584 = vsel %vm582, %v513, 0
      %586 = vmatprep.subr.bf16.mxu0 0
      %587 = vmatpush1.bf16.msra.mxu0 %v584
      %588 = vmatprep.subr.bf16.mxu0 0
      %589 = vmatpush1.bf16.msra.mxu0 0
      %590 = vmatprep.subr.bf16.mxu0 0
      %591 = vmatpush1.bf16.msra.mxu0 0
      %592 = vmatprep.subr.bf16.mxu0 0
      %593 = vmatpush1.bf16.msra.mxu0 0
      %594 = vmatprep.subr.bf16.mxu0 0
      %595 = vmatpush1.bf16.msra.mxu0 0
      %596 = vmatprep.subr.bf16.mxu0 0
      %597 = vmatpush1.bf16.msra.mxu0 0
      %598 = vmatprep.subr.bf16.mxu0 0
      %599 = vmatpush1.bf16.msra.mxu0 0
      %600 = vmatprep.subr.bf16.mxu0 0
      %601 = vmatpush1.bf16.msra.mxu0 0
      %602 = vmatprep.subr.bf16.mxu0 0
      %603 = vmatpush1.bf16.msra.mxu0 0
      %604 = vmatprep.subr.bf16.mxu0 0
      %605 = vmatpush1.bf16.msra.mxu0 0
      %606 = vmatprep.subr.bf16.mxu0 0
      %607 = vmatpush1.bf16.msra.mxu0 0
      %608 = vmatprep.subr.bf16.mxu0 0
      %609 = vmatpush1.bf16.msra.mxu0 0
      %610 = vmatprep.subr.bf16.mxu0 0
      %611 = vmatpush1.bf16.msra.mxu0 0
      %612 = vmatprep.subr.bf16.mxu0 0
      %613 = vmatpush1.bf16.msra.mxu0 0
      %614 = vmatprep.subr.bf16.mxu0 0
      %615 = vmatpush1.bf16.msra.mxu0 0
      %616 = vmatprep.subr.bf16.mxu0 0
      %617 = vmatpush1.bf16.msra.mxu0 0
      %618 = vmatprep.mubr.bf16.mxu0 0
      %619 = vmatmul.mubr.bf16.gmra.mrb[0].mxu0 %v580
      %v620 = vpop.f32.mrb[0].mxu0
      %v621 = vadd.f32 0.0, %v620
      %v622 = vpop.f32.mrb[0].mxu0
      %v623 = vpop.f32.mrb[0].mxu0
      %v624 = vpop.f32.mrb[0].mxu0
      %625 = vdwg.mxu0
      %v626 = vpack.c.bf16 %v621, %v621
      %vm627 = vcmask 60416
      %628 = vst.msk [vmem:[%s314] sm:$0xf] %vm627, %v626
      %s629 = scalar_lea.vmem %s1, 16
      %v630 = vld [vmem:[%s629] sm:$0xf]
      %v631 = vld [vmem:[%s629 + $0x4] sm:$0xf]
      %v632 = vld [vmem:[%s629 + $0x8] sm:$0xf]
      %v633 = vld [vmem:[%s629 + $0xc] sm:$0xf]
      %s634 = scalar_lea.vmem %s4, 1
      %v635 = vld [vmem:[%s634] sm:$0x1]
      %v637 = vlaneseq
      %v638 = vshrl.u32 %v637, 7
      %v639 = vsub.s32 0, %v638
      %v640 = vrot.slane %v635, %v639
      %v646 = vunpack.c.l.b16 %v630
      %v647 = vunpack.c.l.b16 %v631
      %v648 = vunpack.c.l.b16 %v632
      %v649 = vunpack.c.l.b16 %v633
      %v650 = vpack.c.b16 %v647, %v646
      %v651 = vpack.c.b16 %v649, %v648
      %654 = vmatprep.subr.bf16.mxu0 0
      %655 = vmatpush1.bf16.msra.mxu0 %v650
      %656 = vmatprep.subr.bf16.mxu0 0
      %657 = vmatpush1.bf16.msra.mxu0 %v651
      %658 = vmatprep.subr.bf16.mxu0 0
      %659 = vmatpush1.bf16.msra.mxu0 0
      %660 = vmatprep.subr.bf16.mxu0 0
      %661 = vmatpush1.bf16.msra.mxu0 0
      %662 = vmatprep.subr.bf16.mxu0 0
      %663 = vmatpush1.bf16.msra.mxu0 0
      %664 = vmatprep.subr.bf16.mxu0 0
      %665 = vmatpush1.bf16.msra.mxu0 0
      %666 = vmatprep.subr.bf16.mxu0 0
      %667 = vmatpush1.bf16.msra.mxu0 0
      %668 = vmatprep.subr.bf16.mxu0 0
      %669 = vmatpush1.bf16.msra.mxu0 0
      %670 = vmatprep.subr.bf16.mxu0 0
      %671 = vmatpush1.bf16.msra.mxu0 0
      %672 = vmatprep.subr.bf16.mxu0 0
      %673 = vmatpush1.bf16.msra.mxu0 0
      %674 = vmatprep.subr.bf16.mxu0 0
      %675 = vmatpush1.bf16.msra.mxu0 0
      %676 = vmatprep.subr.bf16.mxu0 0
      %677 = vmatpush1.bf16.msra.mxu0 0
      %678 = vmatprep.subr.bf16.mxu0 0
      %679 = vmatpush1.bf16.msra.mxu0 0
      %680 = vmatprep.subr.bf16.mxu0 0
      %681 = vmatpush1.bf16.msra.mxu0 0
      %682 = vmatprep.subr.bf16.mxu0 0
      %683 = vmatpush1.bf16.msra.mxu0 0
      %684 = vmatprep.subr.bf16.mxu0 0
      %685 = vmatpush1.bf16.msra.mxu0 0
      %686 = vmatprep.mubr.bf16.mxu0 0
      %687 = vmatmul.mubr.bf16.gmra.mrb[0].mxu0 %v343
      %v688 = vpop.f32.mrb[0].mxu0
      %v689 = vadd.f32 %v640, %v688
      %v690 = vpop.f32.mrb[0].mxu0
      %v691 = vpop.f32.mrb[0].mxu0
      %v692 = vpop.f32.mrb[0].mxu0
      %693 = vdwg.mxu0
      %v694 = vpack.c.bf16 %v689, %v689
      %s695 = scalar_lea.vmem %s2, 16
      %v696 = vld [vmem:[%s695] sm:$0xf]
      %v697 = vld [vmem:[%s695 + $0x4] sm:$0xf]
      %v698 = vld [vmem:[%s695 + $0x8] sm:$0xf]
      %v699 = vld [vmem:[%s695 + $0xc] sm:$0xf]
      %s700 = scalar_lea.vmem %s5, 1
      %v701 = vld [vmem:[%s700] sm:$0x1]
      %v703 = vlaneseq
      %v704 = vshrl.u32 %v703, 7
      %v705 = vsub.s32 0, %v704
      %v706 = vrot.slane %v701, %v705
      %v712 = vunpack.c.l.b16 %v696
      %v713 = vunpack.c.l.b16 %v697
      %v714 = vunpack.c.l.b16 %v698
      %v715 = vunpack.c.l.b16 %v699
      %v716 = vpack.c.b16 %v713, %v712
      %v717 = vpack.c.b16 %v715, %v714
      %720 = vmatprep.subr.bf16.mxu0 0
      %721 = vmatpush1.bf16.msra.mxu0 %v716
      %722 = vmatprep.subr.bf16.mxu0 0
      %723 = vmatpush1.bf16.msra.mxu0 %v717
      %724 = vmatprep.subr.bf16.mxu0 0
      %725 = vmatpush1.bf16.msra.mxu0 0
      %726 = vmatprep.subr.bf16.mxu0 0
      %727 = vmatpush1.bf16.msra.mxu0 0
      %728 = vmatprep.subr.bf16.mxu0 0
      %729 = vmatpush1.bf16.msra.mxu0 0
      %730 = vmatprep.subr.bf16.mxu0 0
      %731 = vmatpush1.bf16.msra.mxu0 0
      %732 = vmatprep.subr.bf16.mxu0 0
      %733 = vmatpush1.bf16.msra.mxu0 0
      %734 = vmatprep.subr.bf16.mxu0 0
      %735 = vmatpush1.bf16.msra.mxu0 0
      %736 = vmatprep.subr.bf16.mxu0 0
      %737 = vmatpush1.bf16.msra.mxu0 0
      %738 = vmatprep.subr.bf16.mxu0 0
      %739 = vmatpush1.bf16.msra.mxu0 0
      %740 = vmatprep.subr.bf16.mxu0 0
      %741 = vmatpush1.bf16.msra.mxu0 0
      %742 = vmatprep.subr.bf16.mxu0 0
      %743 = vmatpush1.bf16.msra.mxu0 0
      %744 = vmatprep.subr.bf16.mxu0 0
      %745 = vmatpush1.bf16.msra.mxu0 0
      %746 = vmatprep.subr.bf16.mxu0 0
      %747 = vmatpush1.bf16.msra.mxu0 0
      %748 = vmatprep.subr.bf16.mxu0 0
      %749 = vmatpush1.bf16.msra.mxu0 0
      %750 = vmatprep.subr.bf16.mxu0 0
      %751 = vmatpush1.bf16.msra.mxu0 0
      %752 = vmatprep.mubr.bf16.mxu0 0
      %753 = vmatmul.mubr.bf16.gmra.mrb[0].mxu0 %v343
      %v754 = vpop.f32.mrb[0].mxu0
      %v755 = vadd.f32 %v706, %v754
      %v756 = vpop.f32.mrb[0].mxu0
      %v757 = vpop.f32.mrb[0].mxu0
      %v758 = vpop.f32.mrb[0].mxu0
      %759 = vdwg.mxu0
      %v760 = vpack.c.bf16 %v755, %v755
      %s761 = scalar_lea.vmem %s3, 16
      %v762 = vld [vmem:[%s761] sm:$0xf]
      %v763 = vld [vmem:[%s761 + $0x4] sm:$0xf]
      %v764 = vld [vmem:[%s761 + $0x8] sm:$0xf]
      %v765 = vld [vmem:[%s761 + $0xc] sm:$0xf]
      %s766 = scalar_lea.vmem %s6, 1
      %v767 = vld [vmem:[%s766] sm:$0x1]
      %v769 = vlaneseq
      %v770 = vshrl.u32 %v769, 7
      %v771 = vsub.s32 0, %v770
      %v772 = vrot.slane %v767, %v771
      %v778 = vunpack.c.l.b16 %v762
      %v779 = vunpack.c.l.b16 %v763
      %v780 = vunpack.c.l.b16 %v764
      %v781 = vunpack.c.l.b16 %v765
      %v782 = vpack.c.b16 %v779, %v778
      %v783 = vpack.c.b16 %v781, %v780
      %786 = vmatprep.subr.bf16.mxu0 0
      %787 = vmatpush1.bf16.msra.mxu0 %v782
      %788 = vmatprep.subr.bf16.mxu0 0
      %789 = vmatpush1.bf16.msra.mxu0 %v783
      %790 = vmatprep.subr.bf16.mxu0 0
      %791 = vmatpush1.bf16.msra.mxu0 0
      %792 = vmatprep.subr.bf16.mxu0 0
      %793 = vmatpush1.bf16.msra.mxu0 0
      %794 = vmatprep.subr.bf16.mxu0 0
      %795 = vmatpush1.bf16.msra.mxu0 0
      %796 = vmatprep.subr.bf16.mxu0 0
      %797 = vmatpush1.bf16.msra.mxu0 0
      %798 = vmatprep.subr.bf16.mxu0 0
      %799 = vmatpush1.bf16.msra.mxu0 0
      %800 = vmatprep.subr.bf16.mxu0 0
      %801 = vmatpush1.bf16.msra.mxu0 0
      %802 = vmatprep.subr.bf16.mxu0 0
      %803 = vmatpush1.bf16.msra.mxu0 0
      %804 = vmatprep.subr.bf16.mxu0 0
      %805 = vmatpush1.bf16.msra.mxu0 0
      %806 = vmatprep.subr.bf16.mxu0 0
      %807 = vmatpush1.bf16.msra.mxu0 0
      %808 = vmatprep.subr.bf16.mxu0 0
      %809 = vmatpush1.bf16.msra.mxu0 0
      %810 = vmatprep.subr.bf16.mxu0 0
      %811 = vmatpush1.bf16.msra.mxu0 0
      %812 = vmatprep.subr.bf16.mxu0 0
      %813 = vmatpush1.bf16.msra.mxu0 0
      %814 = vmatprep.subr.bf16.mxu0 0
      %815 = vmatpush1.bf16.msra.mxu0 0
      %816 = vmatprep.subr.bf16.mxu0 0
      %817 = vmatpush1.bf16.msra.mxu0 0
      %818 = vmatprep.mubr.bf16.mxu0 0
      %819 = vmatmul.mubr.bf16.gmra.mrb[0].mxu0 %v343
      %v820 = vpop.f32.mrb[0].mxu0
      %v821 = vadd.f32 %v772, %v820
      %v822 = vpop.f32.mrb[0].mxu0
      %v823 = vpop.f32.mrb[0].mxu0
      %v824 = vpop.f32.mrb[0].mxu0
      %825 = vdwg.mxu0
      %v826 = vpack.c.bf16 %v821, %v821
      %v828 = vsel %vm520, %v694, 0
      %v831 = vsel %vm520, %v760, 0
      %833 = vmatprep.subr.bf16.mxu0 0
      %834 = vmatpush1.bf16.xpose.msra.mxu0 %v831
      %835 = vmatprep.subr.bf16.mxu0 0
      %836 = vmatpush1.bf16.xpose.msra.mxu0 0
      %837 = vmatprep.subr.bf16.mxu0 0
      %838 = vmatpush1.bf16.xpose.msra.mxu0 0
      %839 = vmatprep.subr.bf16.mxu0 0
      %840 = vmatpush1.bf16.xpose.msra.mxu0 0
      %841 = vmatprep.subr.bf16.mxu0 0
      %842 = vmatpush1.bf16.xpose.msra.mxu0 0
      %843 = vmatprep.subr.bf16.mxu0 0
      %844 = vmatpush1.bf16.xpose.msra.mxu0 0
      %845 = vmatprep.subr.bf16.mxu0 0
      %846 = vmatpush1.bf16.xpose.msra.mxu0 0
      %847 = vmatprep.subr.bf16.mxu0 0
      %848 = vmatpush1.bf16.xpose.msra.mxu0 0
      %849 = vmatprep.subr.bf16.mxu0 0
      %850 = vmatpush1.bf16.xpose.msra.mxu0 0
      %851 = vmatprep.subr.bf16.mxu0 0
      %852 = vmatpush1.bf16.xpose.msra.mxu0 0
      %853 = vmatprep.subr.bf16.mxu0 0
      %854 = vmatpush1.bf16.xpose.msra.mxu0 0
      %855 = vmatprep.subr.bf16.mxu0 0
      %856 = vmatpush1.bf16.xpose.msra.mxu0 0
      %857 = vmatprep.subr.bf16.mxu0 0
      %858 = vmatpush1.bf16.xpose.msra.mxu0 0
      %859 = vmatprep.subr.bf16.mxu0 0
      %860 = vmatpush1.bf16.xpose.msra.mxu0 0
      %861 = vmatprep.subr.bf16.mxu0 0
      %862 = vmatpush1.bf16.xpose.msra.mxu0 0
      %863 = vmatprep.subr.bf16.mxu0 0
      %864 = vmatpush1.bf16.xpose.msra.mxu0 0
      %865 = vmatprep.mubr.bf16.mxu0 0
      %866 = vmatmul.mubr.bf16.gmra.mrb[0].mxu0 %v828
      %v867 = vpop.f32.mrb[0].mxu0
      %v868 = vadd.f32 %v518, %v867
      %v869 = vpop.f32.mrb[0].mxu0
      %v870 = vpop.f32.mrb[0].mxu0
      %v871 = vpop.f32.mrb[0].mxu0
      %872 = vdwg.mxu0
      %v873 = vsel %vm520, %v868, -inf
      %874 = vmax.xlane.f32.xlu0 %v873
      %v875 = vpop.xlane.xlu0 %874
      %v876 = vsub.f32 %v868, %v875
      %v877 = vmul.f32 %v876, 1.442695
      %v878 = vpow.pop %v877
      %v879 = vsel %vm520, %v878, 0.0
      %880 = vadd.xlane.f32.xlu0 %v879
      %v881 = vpop.xlane.xlu0 %880
      %v882 = vrcp.pop %v881
      %v883 = vmul.f32 %v878, %v882
      %v884 = vpack.c.bf16 %v883, %v883
      %v886 = vsel %vm520, %v884, 0
      %v889 = vsel %vm582, %v826, 0
      %891 = vmatprep.subr.bf16.mxu0 0
      %892 = vmatpush1.bf16.msra.mxu0 %v889
      %893 = vmatprep.subr.bf16.mxu0 0
      %894 = vmatpush1.bf16.msra.mxu0 0
      %895 = vmatprep.subr.bf16.mxu0 0
      %896 = vmatpush1.bf16.msra.mxu0 0
      %897 = vmatprep.subr.bf16.mxu0 0
      %898 = vmatpush1.bf16.msra.mxu0 0
      %899 = vmatprep.subr.bf16.mxu0 0
      %900 = vmatpush1.bf16.msra.mxu0 0
      %901 = vmatprep.subr.bf16.mxu0 0
      %902 = vmatpush1.bf16.msra.mxu0 0
      %903 = vmatprep.subr.bf16.mxu0 0
      %904 = vmatpush1.bf16.msra.mxu0 0
      %905 = vmatprep.subr.bf16.mxu0 0
      %906 = vmatpush1.bf16.msra.mxu0 0
      %907 = vmatprep.subr.bf16.mxu0 0
      %908 = vmatpush1.bf16.msra.mxu0 0
      %909 = vmatprep.subr.bf16.mxu0 0
      %910 = vmatpush1.bf16.msra.mxu0 0
      %911 = vmatprep.subr.bf16.mxu0 0
      %912 = vmatpush1.bf16.msra.mxu0 0
      %913 = vmatprep.subr.bf16.mxu0 0
      %914 = vmatpush1.bf16.msra.mxu0 0
      %915 = vmatprep.subr.bf16.mxu0 0
      %916 = vmatpush1.bf16.msra.mxu0 0
      %917 = vmatprep.subr.bf16.mxu0 0
      %918 = vmatpush1.bf16.msra.mxu0 0
      %919 = vmatprep.subr.bf16.mxu0 0
      %920 = vmatpush1.bf16.msra.mxu0 0
      %921 = vmatprep.subr.bf16.mxu0 0
      %922 = vmatpush1.bf16.msra.mxu0 0
      %923 = vmatprep.mubr.bf16.mxu0 0
      %924 = vmatmul.mubr.bf16.gmra.mrb[0].mxu0 %v886
      %v925 = vpop.f32.mrb[0].mxu0
      %v926 = vadd.f32 0.0, %v925
      %v927 = vpop.f32.mrb[0].mxu0
      %v928 = vpop.f32.mrb[0].mxu0
      %v929 = vpop.f32.mrb[0].mxu0
      %930 = vdwg.mxu0
      %v931 = vpack.c.bf16 %v926, %v926
      %v933 = vunpack.c.l.b16 %v931
      %v934 = vpack.c.b16 %v933, %v933
      %935 = vrot.lane.b32.xlu0 %v934, 8
      %v936 = vpop.permute.xlu0 %935
      %vm938 = vcmask 126016
      %939 = vst.msk [vmem:[%s314] sm:$0xf] %vm938, %v936
      %s940 = scalar_lea.vmem %s1, 32
      %v941 = vld [vmem:[%s940] sm:$0xf]
      %v942 = vld [vmem:[%s940 + $0x4] sm:$0xf]
      %v943 = vld [vmem:[%s940 + $0x8] sm:$0xf]
      %v944 = vld [vmem:[%s940 + $0xc] sm:$0xf]
      %s945 = scalar_lea.vmem %s4, 2
      %v946 = vld [vmem:[%s945] sm:$0x1]
      %v948 = vlaneseq
      %v949 = vshrl.u32 %v948, 7
      %v950 = vsub.s32 0, %v949
      %v951 = vrot.slane %v946, %v950
      %v957 = vunpack.c.l.b16 %v941
      %v958 = vunpack.c.l.b16 %v942
      %v959 = vunpack.c.l.b16 %v943
      %v960 = vunpack.c.l.b16 %v944
      %v961 = vpack.c.b16 %v958, %v957
      %v962 = vpack.c.b16 %v960, %v959
      %965 = vmatprep.subr.bf16.mxu0 0
      %966 = vmatpush1.bf16.msra.mxu0 %v961
      %967 = vmatprep.subr.bf16.mxu0 0
      %968 = vmatpush1.bf16.msra.mxu0 %v962
      %969 = vmatprep.subr.bf16.mxu0 0
      %970 = vmatpush1.bf16.msra.mxu0 0
      %971 = vmatprep.subr.bf16.mxu0 0
      %972 = vmatpush1.bf16.msra.mxu0 0
      %973 = vmatprep.subr.bf16.mxu0 0
      %974 = vmatpush1.bf16.msra.mxu0 0
      %975 = vmatprep.subr.bf16.mxu0 0
      %976 = vmatpush1.bf16.msra.mxu0 0
      %977 = vmatprep.subr.bf16.mxu0 0
      %978 = vmatpush1.bf16.msra.mxu0 0
      %979 = vmatprep.subr.bf16.mxu0 0
      %980 = vmatpush1.bf16.msra.mxu0 0
      %981 = vmatprep.subr.bf16.mxu0 0
      %982 = vmatpush1.bf16.msra.mxu0 0
      %983 = vmatprep.subr.bf16.mxu0 0
      %984 = vmatpush1.bf16.msra.mxu0 0
      %985 = vmatprep.subr.bf16.mxu0 0
      %986 = vmatpush1.bf16.msra.mxu0 0
      %987 = vmatprep.subr.bf16.mxu0 0
      %988 = vmatpush1.bf16.msra.mxu0 0
      %989 = vmatprep.subr.bf16.mxu0 0
      %990 = vmatpush1.bf16.msra.mxu0 0
      %991 = vmatprep.subr.bf16.mxu0 0
      %992 = vmatpush1.bf16.msra.mxu0 0
      %993 = vmatprep.subr.bf16.mxu0 0
      %994 = vmatpush1.bf16.msra.mxu0 0
      %995 = vmatprep.subr.bf16.mxu0 0
      %996 = vmatpush1.bf16.msra.mxu0 0
      %997 = vmatprep.mubr.bf16.mxu0 0
      %998 = vmatmul.mubr.bf16.gmra.mrb[0].mxu0 %v343
      %v999 = vpop.f32.mrb[0].mxu0
      %v1000 = vadd.f32 %v951, %v999
      %v1001 = vpop.f32.mrb[0].mxu0
      %v1002 = vpop.f32.mrb[0].mxu0
      %v1003 = vpop.f32.mrb[0].mxu0
      %1004 = vdwg.mxu0
      %v1005 = vpack.c.bf16 %v1000, %v1000
      %s1006 = scalar_lea.vmem %s2, 32
      %v1007 = vld [vmem:[%s1006] sm:$0xf]
      %v1008 = vld [vmem:[%s1006 + $0x4] sm:$0xf]
      %v1009 = vld [vmem:[%s1006 + $0x8] sm:$0xf]
      %v1010 = vld [vmem:[%s1006 + $0xc] sm:$0xf]
      %s1011 = scalar_lea.vmem %s5, 2
      %v1012 = vld [vmem:[%s1011] sm:$0x1]
      %v1014 = vlaneseq
      %v1015 = vshrl.u32 %v1014, 7
      %v1016 = vsub.s32 0, %v1015
      %v1017 = vrot.slane %v1012, %v1016
      %v1023 = vunpack.c.l.b16 %v1007
      %v1024 = vunpack.c.l.b16 %v1008
      %v1025 = vunpack.c.l.b16 %v1009
      %v1026 = vunpack.c.l.b16 %v1010
      %v1027 = vpack.c.b16 %v1024, %v1023
      %v1028 = vpack.c.b16 %v1026, %v1025
      %1031 = vmatprep.subr.bf16.mxu0 0
      %1032 = vmatpush1.bf16.msra.mxu0 %v1027
      %1033 = vmatprep.subr.bf16.mxu0 0
      %1034 = vmatpush1.bf16.msra.mxu0 %v1028
      %1035 = vmatprep.subr.bf16.mxu0 0
      %1036 = vmatpush1.bf16.msra.mxu0 0
      %1037 = vmatprep.subr.bf16.mxu0 0
      %1038 = vmatpush1.bf16.msra.mxu0 0
      %1039 = vmatprep.subr.bf16.mxu0 0
      %1040 = vmatpush1.bf16.msra.mxu0 0
      %1041 = vmatprep.subr.bf16.mxu0 0
      %1042 = vmatpush1.bf16.msra.mxu0 0
      %1043 = vmatprep.subr.bf16.mxu0 0
      %1044 = vmatpush1.bf16.msra.mxu0 0
      %1045 = vmatprep.subr.bf16.mxu0 0
      %1046 = vmatpush1.bf16.msra.mxu0 0
      %1047 = vmatprep.subr.bf16.mxu0 0
      %1048 = vmatpush1.bf16.msra.mxu0 0
      %1049 = vmatprep.subr.bf16.mxu0 0
      %1050 = vmatpush1.bf16.msra.mxu0 0
      %1051 = vmatprep.subr.bf16.mxu0 0
      %1052 = vmatpush1.bf16.msra.mxu0 0
      %1053 = vmatprep.subr.bf16.mxu0 0
      %1054 = vmatpush1.bf16.msra.mxu0 0
      %1055 = vmatprep.subr.bf16.mxu0 0
      %1056 = vmatpush1.bf16.msra.mxu0 0
      %1057 = vmatprep.subr.bf16.mxu0 0
      %1058 = vmatpush1.bf16.msra.mxu0 0
      %1059 = vmatprep.subr.bf16.mxu0 0
      %1060 = vmatpush1.bf16.msra.mxu0 0
      %1061 = vmatprep.subr.bf16.mxu0 0
      %1062 = vmatpush1.bf16.msra.mxu0 0
      %1063 = vmatprep.mubr.bf16.mxu0 0
      %1064 = vmatmul.mubr.bf16.gmra.mrb[0].mxu0 %v343
      %v1065 = vpop.f32.mrb[0].mxu0
      %v1066 = vadd.f32 %v1017, %v1065
      %v1067 = vpop.f32.mrb[0].mxu0
      %v1068 = vpop.f32.mrb[0].mxu0
      %v1069 = vpop.f32.mrb[0].mxu0
      %1070 = vdwg.mxu0
      %v1071 = vpack.c.bf16 %v1066, %v1066
      %s1072 = scalar_lea.vmem %s3, 32
      %v1073 = vld [vmem:[%s1072] sm:$0xf]
      %v1074 = vld [vmem:[%s1072 + $0x4] sm:$0xf]
      %v1075 = vld [vmem:[%s1072 + $0x8] sm:$0xf]
      %v1076 = vld [vmem:[%s1072 + $0xc] sm:$0xf]
      %s1077 = scalar_lea.vmem %s6, 2
      %v1078 = vld [vmem:[%s1077] sm:$0x1]
      %v1080 = vlaneseq
      %v1081 = vshrl.u32 %v1080, 7
      %v1082 = vsub.s32 0, %v1081
      %v1083 = vrot.slane %v1078, %v1082
      %v1089 = vunpack.c.l.b16 %v1073
      %v1090 = vunpack.c.l.b16 %v1074
      %v1091 = vunpack.c.l.b16 %v1075
      %v1092 = vunpack.c.l.b16 %v1076
      %v1093 = vpack.c.b16 %v1090, %v1089
      %v1094 = vpack.c.b16 %v1092, %v1091
      %1097 = vmatprep.subr.bf16.mxu0 0
      %1098 = vmatpush1.bf16.msra.mxu0 %v1093
      %1099 = vmatprep.subr.bf16.mxu0 0
      %1100 = vmatpush1.bf16.msra.mxu0 %v1094
      %1101 = vmatprep.subr.bf16.mxu0 0
      %1102 = vmatpush1.bf16.msra.mxu0 0
      %1103 = vmatprep.subr.bf16.mxu0 0
      %1104 = vmatpush1.bf16.msra.mxu0 0
      %1105 = vmatprep.subr.bf16.mxu0 0
      %1106 = vmatpush1.bf16.msra.mxu0 0
      %1107 = vmatprep.subr.bf16.mxu0 0
      %1108 = vmatpush1.bf16.msra.mxu0 0
      %1109 = vmatprep.subr.bf16.mxu0 0
      %1110 = vmatpush1.bf16.msra.mxu0 0
      %1111 = vmatprep.subr.bf16.mxu0 0
      %1112 = vmatpush1.bf16.msra.mxu0 0
      %1113 = vmatprep.subr.bf16.mxu0 0
      %1114 = vmatpush1.bf16.msra.mxu0 0
      %1115 = vmatprep.subr.bf16.mxu0 0
      %1116 = vmatpush1.bf16.msra.mxu0 0
      %1117 = vmatprep.subr.bf16.mxu0 0
      %1118 = vmatpush1.bf16.msra.mxu0 0
      %1119 = vmatprep.subr.bf16.mxu0 0
      %1120 = vmatpush1.bf16.msra.mxu0 0
      %1121 = vmatprep.subr.bf16.mxu0 0
      %1122 = vmatpush1.bf16.msra.mxu0 0
      %1123 = vmatprep.subr.bf16.mxu0 0
      %1124 = vmatpush1.bf16.msra.mxu0 0
      %1125 = vmatprep.subr.bf16.mxu0 0
      %1126 = vmatpush1.bf16.msra.mxu0 0
      %1127 = vmatprep.subr.bf16.mxu0 0
      %1128 = vmatpush1.bf16.msra.mxu0 0
      %1129 = vmatprep.mubr.bf16.mxu0 0
      %1130 = vmatmul.mubr.bf16.gmra.mrb[0].mxu0 %v343
      %v1131 = vpop.f32.mrb[0].mxu0
      %v1132 = vadd.f32 %v1083, %v1131
      %v1133 = vpop.f32.mrb[0].mxu0
      %v1134 = vpop.f32.mrb[0].mxu0
      %v1135 = vpop.f32.mrb[0].mxu0
      %1136 = vdwg.mxu0
      %v1137 = vpack.c.bf16 %v1132, %v1132
      %v1139 = vsel %vm520, %v1005, 0
      %v1142 = vsel %vm520, %v1071, 0
      %1144 = vmatprep.subr.bf16.mxu0 0
      %1145 = vmatpush1.bf16.xpose.msra.mxu0 %v1142
      %1146 = vmatprep.subr.bf16.mxu0 0
      %1147 = vmatpush1.bf16.xpose.msra.mxu0 0
      %1148 = vmatprep.subr.bf16.mxu0 0
      %1149 = vmatpush1.bf16.xpose.msra.mxu0 0
      %1150 = vmatprep.subr.bf16.mxu0 0
      %1151 = vmatpush1.bf16.xpose.msra.mxu0 0
      %1152 = vmatprep.subr.bf16.mxu0 0
      %1153 = vmatpush1.bf16.xpose.msra.mxu0 0
      %1154 = vmatprep.subr.bf16.mxu0 0
      %1155 = vmatpush1.bf16.xpose.msra.mxu0 0
      %1156 = vmatprep.subr.bf16.mxu0 0
      %1157 = vmatpush1.bf16.xpose.msra.mxu0 0
      %1158 = vmatprep.subr.bf16.mxu0 0
      %1159 = vmatpush1.bf16.xpose.msra.mxu0 0
      %1160 = vmatprep.subr.bf16.mxu0 0
      %1161 = vmatpush1.bf16.xpose.msra.mxu0 0
      %1162 = vmatprep.subr.bf16.mxu0 0
      %1163 = vmatpush1.bf16.xpose.msra.mxu0 0
      %1164 = vmatprep.subr.bf16.mxu0 0
      %1165 = vmatpush1.bf16.xpose.msra.mxu0 0
      %1166 = vmatprep.subr.bf16.mxu0 0
      %1167 = vmatpush1.bf16.xpose.msra.mxu0 0
      %1168 = vmatprep.subr.bf16.mxu0 0
      %1169 = vmatpush1.bf16.xpose.msra.mxu0 0
      %1170 = vmatprep.subr.bf16.mxu0 0
      %1171 = vmatpush1.bf16.xpose.msra.mxu0 0
      %1172 = vmatprep.subr.bf16.mxu0 0
      %1173 = vmatpush1.bf16.xpose.msra.mxu0 0
      %1174 = vmatprep.subr.bf16.mxu0 0
      %1175 = vmatpush1.bf16.xpose.msra.mxu0 0
      %1176 = vmatprep.mubr.bf16.mxu0 0
      %1177 = vmatmul.mubr.bf16.gmra.mrb[0].mxu0 %v1139
      %v1178 = vpop.f32.mrb[0].mxu0
      %v1179 = vadd.f32 %v518, %v1178
      %v1180 = vpop.f32.mrb[0].mxu0
      %v1181 = vpop.f32.mrb[0].mxu0
      %v1182 = vpop.f32.mrb[0].mxu0
      %1183 = vdwg.mxu0
      %v1184 = vsel %vm520, %v1179, -inf
      %1185 = vmax.xlane.f32.xlu0 %v1184
      %v1186 = vpop.xlane.xlu0 %1185
      %v1187 = vsub.f32 %v1179, %v1186
      %v1188 = vmul.f32 %v1187, 1.442695
      %v1189 = vpow.pop %v1188
      %v1190 = vsel %vm520, %v1189, 0.0
      %1191 = vadd.xlane.f32.xlu0 %v1190
      %v1192 = vpop.xlane.xlu0 %1191
      %v1193 = vrcp.pop %v1192
      %v1194 = vmul.f32 %v1189, %v1193
      %v1195 = vpack.c.bf16 %v1194, %v1194
      %v1197 = vsel %vm520, %v1195, 0
      %v1200 = vsel %vm582, %v1137, 0
      %1202 = vmatprep.subr.bf16.mxu0 0
      %1203 = vmatpush1.bf16.msra.mxu0 %v1200
      %1204 = vmatprep.subr.bf16.mxu0 0
      %1205 = vmatpush1.bf16.msra.mxu0 0
      %1206 = vmatprep.subr.bf16.mxu0 0
      %1207 = vmatpush1.bf16.msra.mxu0 0
      %1208 = vmatprep.subr.bf16.mxu0 0
      %1209 = vmatpush1.bf16.msra.mxu0 0
      %1210 = vmatprep.subr.bf16.mxu0 0
      %1211 = vmatpush1.bf16.msra.mxu0 0
      %1212 = vmatprep.subr.bf16.mxu0 0
      %1213 = vmatpush1.bf16.msra.mxu0 0
      %1214 = vmatprep.subr.bf16.mxu0 0
      %1215 = vmatpush1.bf16.msra.mxu0 0
      %1216 = vmatprep.subr.bf16.mxu0 0
      %1217 = vmatpush1.bf16.msra.mxu0 0
      %1218 = vmatprep.subr.bf16.mxu0 0
      %1219 = vmatpush1.bf16.msra.mxu0 0
      %1220 = vmatprep.subr.bf16.mxu0 0
      %1221 = vmatpush1.bf16.msra.mxu0 0
      %1222 = vmatprep.subr.bf16.mxu0 0
      %1223 = vmatpush1.bf16.msra.mxu0 0
      %1224 = vmatprep.subr.bf16.mxu0 0
      %1225 = vmatpush1.bf16.msra.mxu0 0
      %1226 = vmatprep.subr.bf16.mxu0 0
      %1227 = vmatpush1.bf16.msra.mxu0 0
      %1228 = vmatprep.subr.bf16.mxu0 0
      %1229 = vmatpush1.bf16.msra.mxu0 0
      %1230 = vmatprep.subr.bf16.mxu0 0
      %1231 = vmatpush1.bf16.msra.mxu0 0
      %1232 = vmatprep.subr.bf16.mxu0 0
      %1233 = vmatpush1.bf16.msra.mxu0 0
      %1234 = vmatprep.mubr.bf16.mxu0 0
      %1235 = vmatmul.mubr.bf16.gmra.mrb[0].mxu0 %v1197
      %v1236 = vpop.f32.mrb[0].mxu0
      %v1237 = vadd.f32 0.0, %v1236
      %v1238 = vpop.f32.mrb[0].mxu0
      %v1239 = vpop.f32.mrb[0].mxu0
      %v1240 = vpop.f32.mrb[0].mxu0
      %1241 = vdwg.mxu0
      %v1242 = vpack.c.bf16 %v1237, %v1237
      %v1244 = vunpack.c.l.b16 %v1242
      %v1245 = vpack.c.b16 %v1244, %v1244
      %1246 = vrot.lane.b32.xlu0 %v1245, 16
      %v1247 = vpop.permute.xlu0 %1246
      %vm1249 = vcmask 191616
      %1250 = vst.msk [vmem:[%s314] sm:$0xf] %vm1249, %v1247
      %s1251 = scalar_lea.vmem %s1, 48
      %v1252 = vld [vmem:[%s1251] sm:$0xf]
      %v1253 = vld [vmem:[%s1251 + $0x4] sm:$0xf]
      %v1254 = vld [vmem:[%s1251 + $0x8] sm:$0xf]
      %v1255 = vld [vmem:[%s1251 + $0xc] sm:$0xf]
      %s1256 = scalar_lea.vmem %s4, 3
      %v1257 = vld [vmem:[%s1256] sm:$0x1]
      %v1259 = vlaneseq
      %v1260 = vshrl.u32 %v1259, 7
      %v1261 = vsub.s32 0, %v1260
      %v1262 = vrot.slane %v1257, %v1261
      %v1268 = vunpack.c.l.b16 %v1252
      %v1269 = vunpack.c.l.b16 %v1253
      %v1270 = vunpack.c.l.b16 %v1254
      %v1271 = vunpack.c.l.b16 %v1255
      %v1272 = vpack.c.b16 %v1269, %v1268
      %v1273 = vpack.c.b16 %v1271, %v1270
      %1276 = vmatprep.subr.bf16.mxu0 0
      %1277 = vmatpush1.bf16.msra.mxu0 %v1272
      %1278 = vmatprep.subr.bf16.mxu0 0
      %1279 = vmatpush1.bf16.msra.mxu0 %v1273
      %1280 = vmatprep.subr.bf16.mxu0 0
      %1281 = vmatpush1.bf16.msra.mxu0 0
      %1282 = vmatprep.subr.bf16.mxu0 0
      %1283 = vmatpush1.bf16.msra.mxu0 0
      %1284 = vmatprep.subr.bf16.mxu0 0
      %1285 = vmatpush1.bf16.msra.mxu0 0
      %1286 = vmatprep.subr.bf16.mxu0 0
      %1287 = vmatpush1.bf16.msra.mxu0 0
      %1288 = vmatprep.subr.bf16.mxu0 0
      %1289 = vmatpush1.bf16.msra.mxu0 0
      %1290 = vmatprep.subr.bf16.mxu0 0
      %1291 = vmatpush1.bf16.msra.mxu0 0
      %1292 = vmatprep.subr.bf16.mxu0 0
      %1293 = vmatpush1.bf16.msra.mxu0 0
      %1294 = vmatprep.subr.bf16.mxu0 0
      %1295 = vmatpush1.bf16.msra.mxu0 0
      %1296 = vmatprep.subr.bf16.mxu0 0
      %1297 = vmatpush1.bf16.msra.mxu0 0
      %1298 = vmatprep.subr.bf16.mxu0 0
      %1299 = vmatpush1.bf16.msra.mxu0 0
      %1300 = vmatprep.subr.bf16.mxu0 0
      %1301 = vmatpush1.bf16.msra.mxu0 0
      %1302 = vmatprep.subr.bf16.mxu0 0
      %1303 = vmatpush1.bf16.msra.mxu0 0
      %1304 = vmatprep.subr.bf16.mxu0 0
      %1305 = vmatpush1.bf16.msra.mxu0 0
      %1306 = vmatprep.subr.bf16.mxu0 0
      %1307 = vmatpush1.bf16.msra.mxu0 0
      %1308 = vmatprep.mubr.bf16.mxu0 0
      %1309 = vmatmul.mubr.bf16.gmra.mrb[0].mxu0 %v343
      %v1310 = vpop.f32.mrb[0].mxu0
      %v1311 = vadd.f32 %v1262, %v1310
      %v1312 = vpop.f32.mrb[0].mxu0
      %v1313 = vpop.f32.mrb[0].mxu0
      %v1314 = vpop.f32.mrb[0].mxu0
      %1315 = vdwg.mxu0
      %v1316 = vpack.c.bf16 %v1311, %v1311
      %s1317 = scalar_lea.vmem %s2, 48
      %v1318 = vld [vmem:[%s1317] sm:$0xf]
      %v1319 = vld [vmem:[%s1317 + $0x4] sm:$0xf]
      %v1320 = vld [vmem:[%s1317 + $0x8] sm:$0xf]
      %v1321 = vld [vmem:[%s1317 + $0xc] sm:$0xf]
      %s1322 = scalar_lea.vmem %s5, 3
      %v1323 = vld [vmem:[%s1322] sm:$0x1]
      %v1325 = vlaneseq
      %v1326 = vshrl.u32 %v1325, 7
      %v1327 = vsub.s32 0, %v1326
      %v1328 = vrot.slane %v1323, %v1327
      %v1334 = vunpack.c.l.b16 %v1318
      %v1335 = vunpack.c.l.b16 %v1319
      %v1336 = vunpack.c.l.b16 %v1320
      %v1337 = vunpack.c.l.b16 %v1321
      %v1338 = vpack.c.b16 %v1335, %v1334
      %v1339 = vpack.c.b16 %v1337, %v1336
      %1342 = vmatprep.subr.bf16.mxu0 0
      %1343 = vmatpush1.bf16.msra.mxu0 %v1338
      %1344 = vmatprep.subr.bf16.mxu0 0
      %1345 = vmatpush1.bf16.msra.mxu0 %v1339
      %1346 = vmatprep.subr.bf16.mxu0 0
      %1347 = vmatpush1.bf16.msra.mxu0 0
      %1348 = vmatprep.subr.bf16.mxu0 0
      %1349 = vmatpush1.bf16.msra.mxu0 0
      %1350 = vmatprep.subr.bf16.mxu0 0
      %1351 = vmatpush1.bf16.msra.mxu0 0
      %1352 = vmatprep.subr.bf16.mxu0 0
      %1353 = vmatpush1.bf16.msra.mxu0 0
      %1354 = vmatprep.subr.bf16.mxu0 0
      %1355 = vmatpush1.bf16.msra.mxu0 0
      %1356 = vmatprep.subr.bf16.mxu0 0
      %1357 = vmatpush1.bf16.msra.mxu0 0
      %1358 = vmatprep.subr.bf16.mxu0 0
      %1359 = vmatpush1.bf16.msra.mxu0 0
      %1360 = vmatprep.subr.bf16.mxu0 0
      %1361 = vmatpush1.bf16.msra.mxu0 0
      %1362 = vmatprep.subr.bf16.mxu0 0
      %1363 = vmatpush1.bf16.msra.mxu0 0
      %1364 = vmatprep.subr.bf16.mxu0 0
      %1365 = vmatpush1.bf16.msra.mxu0 0
      %1366 = vmatprep.subr.bf16.mxu0 0
      %1367 = vmatpush1.bf16.msra.mxu0 0
      %1368 = vmatprep.subr.bf16.mxu0 0
      %1369 = vmatpush1.bf16.msra.mxu0 0
      %1370 = vmatprep.subr.bf16.mxu0 0
      %1371 = vmatpush1.bf16.msra.mxu0 0
      %1372 = vmatprep.subr.bf16.mxu0 0
      %1373 = vmatpush1.bf16.msra.mxu0 0
      %1374 = vmatprep.mubr.bf16.mxu0 0
      %1375 = vmatmul.mubr.bf16.gmra.mrb[0].mxu0 %v343
      %v1376 = vpop.f32.mrb[0].mxu0
      %v1377 = vadd.f32 %v1328, %v1376
      %v1378 = vpop.f32.mrb[0].mxu0
      %v1379 = vpop.f32.mrb[0].mxu0
      %v1380 = vpop.f32.mrb[0].mxu0
      %1381 = vdwg.mxu0
      %v1382 = vpack.c.bf16 %v1377, %v1377
      %s1383 = scalar_lea.vmem %s3, 48
      %v1384 = vld [vmem:[%s1383] sm:$0xf]
      %v1385 = vld [vmem:[%s1383 + $0x4] sm:$0xf]
      %v1386 = vld [vmem:[%s1383 + $0x8] sm:$0xf]
      %v1387 = vld [vmem:[%s1383 + $0xc] sm:$0xf]
      %s1388 = scalar_lea.vmem %s6, 3
      %v1389 = vld [vmem:[%s1388] sm:$0x1]
      %v1391 = vlaneseq
      %v1392 = vshrl.u32 %v1391, 7
      %v1393 = vsub.s32 0, %v1392
      %v1394 = vrot.slane %v1389, %v1393
      %v1400 = vunpack.c.l.b16 %v1384
      %v1401 = vunpack.c.l.b16 %v1385
      %v1402 = vunpack.c.l.b16 %v1386
      %v1403 = vunpack.c.l.b16 %v1387
      %v1404 = vpack.c.b16 %v1401, %v1400
      %v1405 = vpack.c.b16 %v1403, %v1402
      %1408 = vmatprep.subr.bf16.mxu0 0
      %1409 = vmatpush1.bf16.msra.mxu0 %v1404
      %1410 = vmatprep.subr.bf16.mxu0 0
      %1411 = vmatpush1.bf16.msra.mxu0 %v1405
      %1412 = vmatprep.subr.bf16.mxu0 0
      %1413 = vmatpush1.bf16.msra.mxu0 0
      %1414 = vmatprep.subr.bf16.mxu0 0
      %1415 = vmatpush1.bf16.msra.mxu0 0
      %1416 = vmatprep.subr.bf16.mxu0 0
      %1417 = vmatpush1.bf16.msra.mxu0 0
      %1418 = vmatprep.subr.bf16.mxu0 0
      %1419 = vmatpush1.bf16.msra.mxu0 0
      %1420 = vmatprep.subr.bf16.mxu0 0
      %1421 = vmatpush1.bf16.msra.mxu0 0
      %1422 = vmatprep.subr.bf16.mxu0 0
      %1423 = vmatpush1.bf16.msra.mxu0 0
      %1424 = vmatprep.subr.bf16.mxu0 0
      %1425 = vmatpush1.bf16.msra.mxu0 0
      %1426 = vmatprep.subr.bf16.mxu0 0
      %1427 = vmatpush1.bf16.msra.mxu0 0
      %1428 = vmatprep.subr.bf16.mxu0 0
      %1429 = vmatpush1.bf16.msra.mxu0 0
      %1430 = vmatprep.subr.bf16.mxu0 0
      %1431 = vmatpush1.bf16.msra.mxu0 0
      %1432 = vmatprep.subr.bf16.mxu0 0
      %1433 = vmatpush1.bf16.msra.mxu0 0
      %1434 = vmatprep.subr.bf16.mxu0 0
      %1435 = vmatpush1.bf16.msra.mxu0 0
      %1436 = vmatprep.subr.bf16.mxu0 0
      %1437 = vmatpush1.bf16.msra.mxu0 0
      %1438 = vmatprep.subr.bf16.mxu0 0
      %1439 = vmatpush1.bf16.msra.mxu0 0
      %1440 = vmatprep.mubr.bf16.mxu0 0
      %1441 = vmatmul.mubr.bf16.gmra.mrb[0].mxu0 %v343
      %v1442 = vpop.f32.mrb[0].mxu0
      %v1443 = vadd.f32 %v1394, %v1442
      %v1444 = vpop.f32.mrb[0].mxu0
      %v1445 = vpop.f32.mrb[0].mxu0
      %v1446 = vpop.f32.mrb[0].mxu0
      %1447 = vdwg.mxu0
      %v1448 = vpack.c.bf16 %v1443, %v1443
      %v1450 = vsel %vm520, %v1316, 0
      %v1453 = vsel %vm520, %v1382, 0
      %1455 = vmatprep.subr.bf16.mxu0 0
      %1456 = vmatpush1.bf16.xpose.msra.mxu0 %v1453
      %1457 = vmatprep.subr.bf16.mxu0 0
      %1458 = vmatpush1.bf16.xpose.msra.mxu0 0
      %1459 = vmatprep.subr.bf16.mxu0 0
      %1460 = vmatpush1.bf16.xpose.msra.mxu0 0
      %1461 = vmatprep.subr.bf16.mxu0 0
      %1462 = vmatpush1.bf16.xpose.msra.mxu0 0
      %1463 = vmatprep.subr.bf16.mxu0 0
      %1464 = vmatpush1.bf16.xpose.msra.mxu0 0
      %1465 = vmatprep.subr.bf16.mxu0 0
      %1466 = vmatpush1.bf16.xpose.msra.mxu0 0
      %1467 = vmatprep.subr.bf16.mxu0 0
      %1468 = vmatpush1.bf16.xpose.msra.mxu0 0
      %1469 = vmatprep.subr.bf16.mxu0 0
      %1470 = vmatpush1.bf16.xpose.msra.mxu0 0
      %1471 = vmatprep.subr.bf16.mxu0 0
      %1472 = vmatpush1.bf16.xpose.msra.mxu0 0
      %1473 = vmatprep.subr.bf16.mxu0 0
      %1474 = vmatpush1.bf16.xpose.msra.mxu0 0
      %1475 = vmatprep.subr.bf16.mxu0 0
      %1476 = vmatpush1.bf16.xpose.msra.mxu0 0
      %1477 = vmatprep.subr.bf16.mxu0 0
      %1478 = vmatpush1.bf16.xpose.msra.mxu0 0
      %1479 = vmatprep.subr.bf16.mxu0 0
      %1480 = vmatpush1.bf16.xpose.msra.mxu0 0
      %1481 = vmatprep.subr.bf16.mxu0 0
      %1482 = vmatpush1.bf16.xpose.msra.mxu0 0
      %1483 = vmatprep.subr.bf16.mxu0 0
      %1484 = vmatpush1.bf16.xpose.msra.mxu0 0
      %1485 = vmatprep.subr.bf16.mxu0 0
      %1486 = vmatpush1.bf16.xpose.msra.mxu0 0
      %1487 = vmatprep.mubr.bf16.mxu0 0
      %1488 = vmatmul.mubr.bf16.gmra.mrb[0].mxu0 %v1450
      %v1489 = vpop.f32.mrb[0].mxu0
      %v1490 = vadd.f32 %v518, %v1489
      %v1491 = vpop.f32.mrb[0].mxu0
      %v1492 = vpop.f32.mrb[0].mxu0
      %v1493 = vpop.f32.mrb[0].mxu0
      %1494 = vdwg.mxu0
      %v1495 = vsel %vm520, %v1490, -inf
      %1496 = vmax.xlane.f32.xlu0 %v1495
      %v1497 = vpop.xlane.xlu0 %1496
      %v1498 = vsub.f32 %v1490, %v1497
      %v1499 = vmul.f32 %v1498, 1.442695
      %v1500 = vpow.pop %v1499
      %v1501 = vsel %vm520, %v1500, 0.0
      %1502 = vadd.xlane.f32.xlu0 %v1501
      %v1503 = vpop.xlane.xlu0 %1502
      %v1504 = vrcp.pop %v1503
      %v1505 = vmul.f32 %v1500, %v1504
      %v1506 = vpack.c.bf16 %v1505, %v1505
      %v1508 = vsel %vm520, %v1506, 0
      %v1511 = vsel %vm582, %v1448, 0
      %1513 = vmatprep.subr.bf16.mxu0 0
      %1514 = vmatpush1.bf16.msra.mxu0 %v1511
      %1515 = vmatprep.subr.bf16.mxu0 0
      %1516 = vmatpush1.bf16.msra.mxu0 0
      %1517 = vmatprep.subr.bf16.mxu0 0
      %1518 = vmatpush1.bf16.msra.mxu0 0
      %1519 = vmatprep.subr.bf16.mxu0 0
      %1520 = vmatpush1.bf16.msra.mxu0 0
      %1521 = vmatprep.subr.bf16.mxu0 0
      %1522 = vmatpush1.bf16.msra.mxu0 0
      %1523 = vmatprep.subr.bf16.mxu0 0
      %1524 = vmatpush1.bf16.msra.mxu0 0
      %1525 = vmatprep.subr.bf16.mxu0 0
      %1526 = vmatpush1.bf16.msra.mxu0 0
      %1527 = vmatprep.subr.bf16.mxu0 0
      %1528 = vmatpush1.bf16.msra.mxu0 0
      %1529 = vmatprep.subr.bf16.mxu0 0
      %1530 = vmatpush1.bf16.msra.mxu0 0
      %1531 = vmatprep.subr.bf16.mxu0 0
      %1532 = vmatpush1.bf16.msra.mxu0 0
      %1533 = vmatprep.subr.bf16.mxu0 0
      %1534 = vmatpush1.bf16.msra.mxu0 0
      %1535 = vmatprep.subr.bf16.mxu0 0
      %1536 = vmatpush1.bf16.msra.mxu0 0
      %1537 = vmatprep.subr.bf16.mxu0 0
      %1538 = vmatpush1.bf16.msra.mxu0 0
      %1539 = vmatprep.subr.bf16.mxu0 0
      %1540 = vmatpush1.bf16.msra.mxu0 0
      %1541 = vmatprep.subr.bf16.mxu0 0
      %1542 = vmatpush1.bf16.msra.mxu0 0
      %1543 = vmatprep.subr.bf16.mxu0 0
      %1544 = vmatpush1.bf16.msra.mxu0 0
      %1545 = vmatprep.mubr.bf16.mxu0 0
      %1546 = vmatmul.mubr.bf16.gmra.mrb[0].mxu0 %v1508
      %v1547 = vpop.f32.mrb[0].mxu0
      %v1548 = vadd.f32 0.0, %v1547
      %v1549 = vpop.f32.mrb[0].mxu0
      %v1550 = vpop.f32.mrb[0].mxu0
      %v1551 = vpop.f32.mrb[0].mxu0
      %1552 = vdwg.mxu0
      %v1553 = vpack.c.bf16 %v1548, %v1548
      %v1555 = vunpack.c.l.b16 %v1553
      %v1556 = vpack.c.b16 %v1555, %v1555
      %1557 = vrot.lane.b32.xlu0 %v1556, 24
      %v1558 = vpop.permute.xlu0 %1557
      %vm1560 = vcmask 257216
      %1561 = vst.msk [vmem:[%s314] sm:$0xf] %vm1560, %v1558
      %p1562 = scmp.lt.s32.totalorder %s19, 1
      %s1563 = scalar_select %p1562, %s19, 1
      %s1564 = smul.addr %s1563, 4
      %s1565 = scalar_lea.vmem %s8, %s1564
      // Predicated region
      $region53: #{bert_forward.11} parent=51 // pred_check
        %p1566 = pneg %p215
      $region54: #{bert_forward.11} parent=51 // pred_check_branch
        %1568 = sbr.rel (%p1566) target = $region56
      $region55: #{bert_forward.11} parent=51 // pred_region
        _
      $region56: #{bert_forward.11} parent=51 // pred_fallthru
        _
    $region52: #{bert_forward.11} parent=5 // pred_fallthru
      _
    %p1569 = scmp.le.s32.totalorder 2, %s14
    // Predicated region
    $region57: #{bert_forward.11} parent=5 // pred_check
      %p1570 = pneg %p1569
    $region58: #{bert_forward.11} parent=5 // pred_check_branch
      %1572 = sbr.rel (%p1570) target = $region60
    $region59: #{bert_forward.11} parent=5 // pred_region
      %s1573 = ssub.s32 %s14, 2
      // Predicated region
      $region61: #{bert_forward.11} parent=59 // pred_check
        %p1574 = pneg %p221
      $region62: #{bert_forward.11} parent=59 // pred_check_branch
        %1576 = sbr.rel (%p1574) target = $region64
      $region63: #{bert_forward.11} parent=59 // pred_region
        %p1577 = scmp.lt.s32.totalorder %s20, 1
        %s1578 = scalar_select %p1577, %s20, 1
        %s1579 = smul.addr %s1578, 4
        %s1580 = scalar_lea.vmem %s8, %s1579
      $region64: #{bert_forward.11} parent=59 // pred_fallthru
        _
    $region60: #{bert_forward.11} parent=5 // pred_fallthru
      _
  $region6: #{bert_forward.11} parent=0 // loop_footer
    %s18 = sadd.s32 1, %s14
  $region7: #{bert_forward.11} parent=0 // loop_footer_branch
    %13 = sbr.rel target = $region3
  $region8: #{bert_forward.11} parent=0 // loop_exit
    _

// kernel: bert_forward.19
$region0: #{bert_forward.19}
  #allocation0 [shape = 'u32[]', space=smem, size = 0x4, offset = 0x4, fixed_abs, tag = 'smem constant byte address 0x4 - core index']
  #allocation1 [shape = 'u32[144,128]{1,0:T(1,128)}', space=vmem, size = 0x12000, scoped, tag = 'internal scratch']
  %s0 = inlined_call_operand.vmem [shape: bf16[2,32], index: 0, kind: input, shape index: {}]
  %s1 = inlined_call_operand.vmem [shape: bf16[32,32], index: 1, kind: input, shape index: {}]
  %s2 = inlined_call_operand.vmem [shape: f32[1,32], index: 2, kind: input, shape index: {}]
  %s3 = inlined_call_operand.hbm [shape: f32[2,32], index: 3, kind: output, shape index: {}]
  %s4 = sld [smem:[#allocation0]]
  $region22: #{bert_forward.19} parent=0
    _
  %s6 = ssub.s32 1, %s4
  %s7 = scalar_select 0, %s6, %s4
  $region1: #{bert_forward.19} parent=0
    #allocation2 [shape = 'u8[1024]{0}', space=vmem, size = 0x400, scoped, tag = 'output window, operand 0, single buffered']
    #allocation3 [shape = 's32[1]{0}', space=sflag, size = 0x4, scoped, tag = 'scoped memory for bert_forward.19']
    %8 = vsyncpa [#allocation3], 0
    // Predicated region
    $region2: #{bert_forward.19} parent=1 // pred_check
      _
    $region3: #{bert_forward.19} parent=1 // pred_check_branch
      %10 = sbr.rel (0) target = $region5
    $region4: #{bert_forward.19} parent=1 // pred_region
      _
    $region5: #{bert_forward.19} parent=1 // pred_fallthru
      _
    // Predicated region
    $region6: #{bert_forward.19} parent=1 // pred_check
      _
    $region7: #{bert_forward.19} parent=1 // pred_check_branch
      %12 = sbr.rel (0) target = $region9
    $region8: #{bert_forward.19} parent=1 // pred_region
      _
    $region9: #{bert_forward.19} parent=1 // pred_fallthru
      _
    // Predicated region
    $region10: #{bert_forward.19} parent=1 // pred_check
      _
    $region11: #{bert_forward.19} parent=1 // pred_check_branch
      %14 = sbr.rel (0) target = $region13
    $region12: #{bert_forward.19} parent=1 // pred_region
      _
    $region13: #{bert_forward.19} parent=1 // pred_fallthru
      _
    %v16 = vld [vmem:[%s0] sm:$0x1]
    %v17 = vld [vmem:[%s1] sm:$0xf]
    %v18 = vld [vmem:[%s1 + $0x4] sm:$0xf]
    %v19 = vld [vmem:[%s1 + $0x8] sm:$0xf]
    %v20 = vld [vmem:[%s1 + $0xc] sm:$0xf]
    %v21 = vld [vmem:[%s2] sm:$0x1]
    %v23 = vlaneseq
    %v24 = vshrl.u32 %v23, 7
    %v25 = vsub.s32 0, %v24
    %v26 = vrot.slane %v21, %v25
    %v32 = vunpack.c.l.b16 %v17
    %v33 = vunpack.c.l.b16 %v18
    %v34 = vunpack.c.l.b16 %v19
    %v35 = vunpack.c.l.b16 %v20
    %v36 = vpack.c.b16 %v33, %v32
    %v37 = vpack.c.b16 %v35, %v34
    %vm40 = vcmask 261120
    %v42 = vsel %vm40, %v16, 0
    %44 = vmatprep.subr.bf16.mxu0 0
    %45 = vmatpush1.bf16.msra.mxu0 %v36
    %46 = vmatprep.subr.bf16.mxu0 0
    %47 = vmatpush1.bf16.msra.mxu0 %v37
    %48 = vmatprep.subr.bf16.mxu0 0
    %49 = vmatpush1.bf16.msra.mxu0 0
    %50 = vmatprep.subr.bf16.mxu0 0
    %51 = vmatpush1.bf16.msra.mxu0 0
    %52 = vmatprep.subr.bf16.mxu0 0
    %53 = vmatpush1.bf16.msra.mxu0 0
    %54 = vmatprep.subr.bf16.mxu0 0
    %55 = vmatpush1.bf16.msra.mxu0 0
    %56 = vmatprep.subr.bf16.mxu0 0
    %57 = vmatpush1.bf16.msra.mxu0 0
    %58 = vmatprep.subr.bf16.mxu0 0
    %59 = vmatpush1.bf16.msra.mxu0 0
    %60 = vmatprep.subr.bf16.mxu0 0
    %61 = vmatpush1.bf16.msra.mxu0 0
    %62 = vmatprep.subr.bf16.mxu0 0
    %63 = vmatpush1.bf16.msra.mxu0 0
    %64 = vmatprep.subr.bf16.mxu0 0
    %65 = vmatpush1.bf16.msra.mxu0 0
    %66 = vmatprep.subr.bf16.mxu0 0
    %67 = vmatpush1.bf16.msra.mxu0 0
    %68 = vmatprep.subr.bf16.mxu0 0
    %69 = vmatpush1.bf16.msra.mxu0 0
    %70 = vmatprep.subr.bf16.mxu0 0
    %71 = vmatpush1.bf16.msra.mxu0 0
    %72 = vmatprep.subr.bf16.mxu0 0
    %73 = vmatpush1.bf16.msra.mxu0 0
    %74 = vmatprep.subr.bf16.mxu0 0
    %75 = vmatpush1.bf16.msra.mxu0 0
    %76 = vmatprep.mubr.bf16.mxu0 0
    %77 = vmatmul.mubr.bf16.gmra.mrb[0].mxu0 %v42
    %v78 = vpop.f32.mrb[0].mxu0
    %v79 = vadd.f32 %v26, %v78
    %v80 = vpop.f32.mrb[0].mxu0
    %v81 = vpop.f32.mrb[0].mxu0
    %v82 = vpop.f32.mrb[0].mxu0
    %83 = vdwg.mxu0
    %v84 = vtanh.pop %v79
    %vm85 = vcmask 254976
    %86 = vst.msk [vmem:[#allocation2] sm:$0x3] %vm85, %v84
    // Predicated region
    $region14: #{bert_forward.19} parent=1 // pred_check
      _
    $region15: #{bert_forward.19} parent=1 // pred_check_branch
      %88 = sbr.rel (0) target = $region17
    $region16: #{bert_forward.19} parent=1 // pred_region
      %s90 = ssub.s32 32, 32
      %91 = vsyncadd [#allocation3], %s90
      %s93 = sshll.u32 [#allocation2], 4
      %s94 = int_to_ptr.vmem [resolvable:$true] %s93
      %96 = dma.vmem_to_hbm [thread:$0]  %s94, 32, %s3, [#allocation3]
    $region17: #{bert_forward.19} parent=1 // pred_fallthru
      _
    // Predicated region
    $region18: #{bert_forward.19} parent=1 // pred_check
      _
    $region19: #{bert_forward.19} parent=1 // pred_check_branch
      %98 = sbr.rel (0) target = $region21
    $region20: #{bert_forward.19} parent=1 // pred_region
      %99 = dma.done [#allocation3], 32
    $region21: #{bert_forward.19} parent=1 // pred_fallthru
      _
    %100 = vsyncpa [#allocation3], 1

// kernel: bert_forward.14
$region0: #{bert_forward.14}
  #allocation0 [shape = 'u32[]', space=smem, size = 0x4, offset = 0x4, fixed_abs, tag = 'smem constant byte address 0x4 - core index']
  #allocation1 [shape = 'u32[144,128]{1,0:T(1,128)}', space=vmem, size = 0x12000, scoped, tag = 'internal scratch']
  %s0 = inlined_call_operand.vmem [shape: bf16[16,64], index: 0, kind: input, shape index: {}]
  %s1 = inlined_call_operand.vmem [shape: bf16[64,32], index: 1, kind: input, shape index: {}]
  %s2 = inlined_call_operand.vmem [shape: f32[1,32], index: 2, kind: input, shape index: {}]
  %s3 = inlined_call_operand.vmem [shape: bf16[16,32], index: 3, kind: input, shape index: {}]
  %s4 = inlined_call_operand.vmem [shape: f32[1,32], index: 4, kind: input, shape index: {}]
  %s5 = inlined_call_operand.vmem [shape: f32[1,32], index: 5, kind: input, shape index: {}]
  %s6 = inlined_call_operand.vmem [shape: bf16[16,32], index: 6, kind: output, shape index: {}]
  %s7 = sld [smem:[#allocation0]]
  $region34: #{bert_forward.14} parent=0
    _
  %s9 = ssub.s32 1, %s7
  %s10 = scalar_select 0, %s9, %s7
  // Predicated region
  $region2: #{bert_forward.14} parent=0 // pred_check
    _
  $region3: #{bert_forward.14} parent=0 // pred_check_branch
    %12 = sbr.rel (0) target = $region5
  $region4: #{bert_forward.14} parent=0 // pred_region
    _
  $region5: #{bert_forward.14} parent=0 // pred_fallthru
    _
  // Predicated region
  $region6: #{bert_forward.14} parent=0 // pred_check
    _
  $region7: #{bert_forward.14} parent=0 // pred_check_branch
    %14 = sbr.rel (0) target = $region9
  $region8: #{bert_forward.14} parent=0 // pred_region
    _
  $region9: #{bert_forward.14} parent=0 // pred_fallthru
    _
  // Predicated region
  $region10: #{bert_forward.14} parent=0 // pred_check
    _
  $region11: #{bert_forward.14} parent=0 // pred_check_branch
    %16 = sbr.rel (0) target = $region13
  $region12: #{bert_forward.14} parent=0 // pred_region
    _
  $region13: #{bert_forward.14} parent=0 // pred_fallthru
    _
  // Predicated region
  $region14: #{bert_forward.14} parent=0 // pred_check
    _
  $region15: #{bert_forward.14} parent=0 // pred_check_branch
    %18 = sbr.rel (0) target = $region17
  $region16: #{bert_forward.14} parent=0 // pred_region
    _
  $region17: #{bert_forward.14} parent=0 // pred_fallthru
    _
  // Predicated region
  $region18: #{bert_forward.14} parent=0 // pred_check
    _
  $region19: #{bert_forward.14} parent=0 // pred_check_branch
    %20 = sbr.rel (0) target = $region21
  $region20: #{bert_forward.14} parent=0 // pred_region
    _
  $region21: #{bert_forward.14} parent=0 // pred_fallthru
    _
  // Predicated region
  $region22: #{bert_forward.14} parent=0 // pred_check
    _
  $region23: #{bert_forward.14} parent=0 // pred_check_branch
    %22 = sbr.rel (0) target = $region25
  $region24: #{bert_forward.14} parent=0 // pred_region
    _
  $region25: #{bert_forward.14} parent=0 // pred_fallthru
    _
  %v24 = vld [vmem:[%s0] sm:$0xf]
  %v25 = vld [vmem:[%s0 + $0x4] sm:$0xf]
  %v26 = vld [vmem:[%s1] sm:$0xf]
  %v27 = vld [vmem:[%s1 + $0x4] sm:$0xf]
  %v28 = vld [vmem:[%s1 + $0x8] sm:$0xf]
  %v29 = vld [vmem:[%s1 + $0xc] sm:$0xf]
  %v30 = vld [vmem:[%s1 + $0x10] sm:$0xf]
  %v31 = vld [vmem:[%s1 + $0x14] sm:$0xf]
  %v32 = vld [vmem:[%s1 + $0x18] sm:$0xf]
  %v33 = vld [vmem:[%s1 + $0x1c] sm:$0xf]
  %v34 = vld [vmem:[%s2] sm:$0x1]
  %v36 = vlaneseq
  %v37 = vshrl.u32 %v36, 7
  %v38 = vsub.s32 0, %v37
  %v39 = vrot.slane %v34, %v38
  %v43 = vunpack.c.l.b16 %v24
  %v44 = vunpack.c.l.b16 %v25
  %v45 = vpack.c.b16 %v44, %v43
  %v54 = vunpack.c.l.b16 %v26
  %v55 = vunpack.c.l.b16 %v27
  %v56 = vunpack.c.l.b16 %v28
  %v57 = vunpack.c.l.b16 %v29
  %v58 = vunpack.c.l.b16 %v30
  %v59 = vunpack.c.l.b16 %v31
  %v60 = vunpack.c.l.b16 %v32
  %v61 = vunpack.c.l.b16 %v33
  %v62 = vpack.c.b16 %v55, %v54
  %v63 = vpack.c.b16 %v57, %v56
  %v64 = vpack.c.b16 %v59, %v58
  %v65 = vpack.c.b16 %v61, %v60
  %vm70 = vcmask 523264
  %v72 = vsel %vm70, %v45, 0
  %74 = vmatprep.subr.bf16.mxu0 0
  %75 = vmatpush1.bf16.msra.mxu0 %v62
  %76 = vmatprep.subr.bf16.mxu0 0
  %77 = vmatpush1.bf16.msra.mxu0 %v63
  %78 = vmatprep.subr.bf16.mxu0 0
  %79 = vmatpush1.bf16.msra.mxu0 %v64
  %80 = vmatprep.subr.bf16.mxu0 0
  %81 = vmatpush1.bf16.msra.mxu0 %v65
  %82 = vmatprep.subr.bf16.mxu0 0
  %83 = vmatpush1.bf16.msra.mxu0 0
  %84 = vmatprep.subr.bf16.mxu0 0
  %85 = vmatpush1.bf16.msra.mxu0 0
  %86 = vmatprep.subr.bf16.mxu0 0
  %87 = vmatpush1.bf16.msra.mxu0 0
  %88 = vmatprep.subr.bf16.mxu0 0
  %89 = vmatpush1.bf16.msra.mxu0 0
  %90 = vmatprep.subr.bf16.mxu0 0
  %91 = vmatpush1.bf16.msra.mxu0 0
  %92 = vmatprep.subr.bf16.mxu0 0
  %93 = vmatpush1.bf16.msra.mxu0 0
  %94 = vmatprep.subr.bf16.mxu0 0
  %95 = vmatpush1.bf16.msra.mxu0 0
  %96 = vmatprep.subr.bf16.mxu0 0
  %97 = vmatpush1.bf16.msra.mxu0 0
  %98 = vmatprep.subr.bf16.mxu0 0
  %99 = vmatpush1.bf16.msra.mxu0 0
  %100 = vmatprep.subr.bf16.mxu0 0
  %101 = vmatpush1.bf16.msra.mxu0 0
  %102 = vmatprep.subr.bf16.mxu0 0
  %103 = vmatpush1.bf16.msra.mxu0 0
  %104 = vmatprep.subr.bf16.mxu0 0
  %105 = vmatpush1.bf16.msra.mxu0 0
  %106 = vmatprep.mubr.bf16.mxu0 0
  %107 = vmatmul.mubr.bf16.gmra.mrb[0].mxu0 %v72
  %v108 = vpop.f32.mrb[0].mxu0
  %v109 = vadd.f32 %v39, %v108
  %v110 = vpop.f32.mrb[0].mxu0
  %v111 = vpop.f32.mrb[0].mxu0
  %v112 = vadd.f32 %v39, %v111
  %v113 = vpop.f32.mrb[0].mxu0
  %114 = vdwg.mxu0
  %v115 = vld [vmem:[%s3] sm:$0xf]
  %v116 = vld [vmem:[%s3 + $0x4] sm:$0xf]
  %v117 = vunpack.c.l.bf16 %v115
  %v118 = vunpack.c.l.bf16 %v116
  %v119 = vadd.f32 %v109, %v117
  %v120 = vadd.f32 %v112, %v118
  %vm121 = vcmask 261120
  %v122 = vsel %vm121, %v119, 0.0
  %123 = vadd.xlane.f32.xlu0 %v122
  %v124 = vpop.xlane.xlu0 %123
  %v125 = vsel %vm121, %v120, 0.0
  %126 = vadd.xlane.f32.xlu0 %v125
  %v127 = vpop.xlane.xlu0 %126
  %v128 = vrcp.pop 32.0
  %v129 = vmul.f32 %v124, %v128
  %v130 = vmul.f32 %v127, %v128
  %v131 = vsub.f32 %v119, %v129
  %v132 = vsub.f32 %v120, %v130
  %v133 = vmul.f32 %v131, %v131
  %v134 = vmul.f32 %v132, %v132
  %v135 = vsel %vm121, %v133, 0.0
  %136 = vadd.xlane.f32.xlu0 %v135
  %v137 = vpop.xlane.xlu0 %136
  %v138 = vsel %vm121, %v134, 0.0
  %139 = vadd.xlane.f32.xlu0 %v138
  %v140 = vpop.xlane.xlu0 %139
  %v141 = vmul.f32 %v137, %v128
  %v142 = vmul.f32 %v140, %v128
  %v143 = vadd.f32 %v141, 1e-12
  %v144 = vadd.f32 %v142, 1e-12
  %v145 = vrsqrt.pop %v143
  %v146 = vrsqrt.pop %v144
  %v147 = vmul.f32 %v131, %v145
  %v148 = vmul.f32 %v132, %v146
  %v149 = vld [vmem:[%s4] sm:$0x1]
  %v151 = vlaneseq
  %v152 = vshrl.u32 %v151, 7
  %v153 = vsub.s32 0, %v152
  %v154 = vrot.slane %v149, %v153
  %v156 = vmul.f32 %v147, %v154
  %v157 = vmul.f32 %v148, %v154
  %v158 = vld [vmem:[%s5] sm:$0x1]
  %v160 = vlaneseq
  %v161 = vshrl.u32 %v160, 7
  %v162 = vsub.s32 0, %v161
  %v163 = vrot.slane %v158, %v162
  %v165 = vadd.f32 %v156, %v163
  %v166 = vadd.f32 %v157, %v163
  %v167 = vpack.c.bf16 %v166, %v165
  %v169 = vunpack.c.l.b16 %v167
  %v170 = vunpack.c.h.b16 %v167
  %v171 = vpack.c.b16 %v169, %v169
  %v172 = vpack.c.b16 %v170, %v170
  %vm175 = vcmask 257024
  %176 = vst.msk [vmem:[%s6] sm:$0xf] %vm175, %v171
  %177 = vst.msk [vmem:[%s6 + $0x4] sm:$0xf] %vm175, %v172
  // Predicated region
  $region26: #{bert_forward.14} parent=0 // pred_check
    _
  $region27: #{bert_forward.14} parent=0 // pred_check_branch
    %179 = sbr.rel (0) target = $region29
  $region28: #{bert_forward.14} parent=0 // pred_region
    _
  $region29: #{bert_forward.14} parent=0 // pred_fallthru
    _
  // Predicated region
  $region30: #{bert_forward.14} parent=0 // pred_check
    _
  $region31: #{bert_forward.14} parent=0 // pred_check_branch
    %181 = sbr.rel (0) target = $region33
  $region32: #{bert_forward.14} parent=0 // pred_region
    _
  $region33: #{bert_forward.14} parent=0 // pred_fallthru
    _

</llo_original>
